<compile_context>
chip_gen: v7x
topology: tpu7x:2x2x1
jax: 0.10.0
libtpu: 0.0.40
codegen_flags: <defaults>
</compile_context>

<pallas_src>
import functools
import math

import numpy as np
import jax
import jax.numpy as jnp
from jax import lax
from jax.experimental import pallas as pl
from jax.experimental.pallas import tpu as pltpu

EPS = 1e-15
LANE = 128


def _swish(x):
    return x * jax.nn.sigmoid(x)


def _dot(a, b):
    return jnp.dot(a, b, preferred_element_type=jnp.float32)


# --------------------------------------------------------------------------
# Fused conv-stack kernel: message + residual + update + residual per layer,
# followed by fused readout + SumPool.  Single invocation (grid=()).
# --------------------------------------------------------------------------
def _painn_stack_kernel(F, n_rbf,
                        s0_ref, g_ref, a_ref, ef_ref, nslab_ref, wslab_ref,
                        rw1_ref, rb1_ref, rw2_ref, rb2_ref, pool_ref,
                        feat_ref, e_ref):
    N = s0_ref.shape[0]
    F3 = 3 * F
    n_ef = ef_ref.shape[1]            # padded edge-feature width (multiple of 8)
    num_layers = nslab_ref.shape[0]
    uc = n_rbf + 1                    # column of unit_x inside edge_feat

    # ---- layer-independent tensors, loaded once ----
    G = g_ref[...]                    # (E, N) bf16 one-hot of nbrs[:, 1]  (gather)
    A = a_ref[...]                    # (N, E) bf16 one-hot of nbrs[:, 0]^T (scatter)
    ef = ef_ref[...]                  # (E, n_ef) f32: [rbf*env | env | ux uy uz | 0..]
    ux = ef[:, uc:uc + 1]
    uy = ef[:, uc + 1:uc + 2]
    uz = ef[:, uc + 2:uc + 3]

    # static row offsets inside the per-layer weight slabs (all multiples of 8
    # because F is a multiple of 8 and each sub-block is 8-row padded)
    o_bp1 = F                         # narrow: [w_phi1 | b_phi1 | w1_s | w1_v | b1]
    o_w1s = F + 8
    o_w1v = 2 * F + 8
    o_b1 = 3 * F + 8
    o_bp2 = F                         # wide: [w_phi2|b_phi2|w_dist_aug|u3|v3|w2|b2]
    o_wde = F + 8
    o_u3 = o_wde + n_ef
    o_v3 = o_u3 + F3
    o_w2 = o_v3 + F3
    o_b2 = o_w2 + F

    def layer_body(l, carry):
        s, v = carry                                           # (N,F) f32, (N,3F) f32

        # per-layer weights: two slab refs, static row slices
        w_phi1 = nslab_ref[l, 0:F, :]
        b_phi1 = nslab_ref[l, o_bp1:o_bp1 + 1, :]
        w1_s = nslab_ref[l, o_w1s:o_w1s + F, :]
        w1_v = nslab_ref[l, o_w1v:o_w1v + F, :]
        b1 = nslab_ref[l, o_b1:o_b1 + 1, :]

        w_phi2 = wslab_ref[l, 0:F, :]
        b_phi2 = wslab_ref[l, o_bp2:o_bp2 + 1, :]
        w_de = wslab_ref[l, o_wde:o_wde + n_ef, :]             # (n_ef, 3F)
        u3 = wslab_ref[l, o_u3:o_u3 + F3, :]                   # block-diag(U,U,U)
        v3 = wslab_ref[l, o_v3:o_v3 + F3, :]
        w2 = wslab_ref[l, o_w2:o_w2 + F, :]
        b2 = wslab_ref[l, o_b2:o_b2 + 1, :]

        # ------------------------- message block -------------------------
        h = _swish(_dot(s, w_phi1) + b_phi1)
        phi = _dot(h, w_phi2) + b_phi2                          # (N, 3F)
        phi_e = _dot(G, phi.astype(jnp.bfloat16))               # (E, 3F)  gather
        v_g = _dot(G, v.astype(jnp.bfloat16))                   # (E, 3F)  gather all 3 comps
        w_s = _dot(ef, w_de)                                    # (E, 3F) = env*(rbf@W + b)
        inv = phi_e * w_s
        sp0 = inv[:, :F]
        ds_e = inv[:, F:2 * F]
        sp2 = inv[:, 2 * F:]
        edge_msg = jnp.concatenate(
            [ds_e,
             sp2 * ux + sp0 * v_g[:, :F],
             sp2 * uy + sp0 * v_g[:, F:2 * F],
             sp2 * uz + sp0 * v_g[:, 2 * F:]], axis=-1)          # (E, 4F) lane-dense
        dsv = _dot(A, edge_msg.astype(jnp.bfloat16))             # (N, 4F)  scatter_add
        s = s + dsv[:, :F]
        v = v + dsv[:, F:]

        # ------------------------- update block --------------------------
        u_v = _dot(v, u3)                                        # one MXU call for 3 comps
        v_v = _dot(v, v3)
        vv0, vv1, vv2 = v_v[:, :F], v_v[:, F:2 * F], v_v[:, 2 * F:]
        uv0, uv1, uv2 = u_v[:, :F], u_v[:, F:2 * F], u_v[:, 2 * F:]
        # nff norm(): sqrt(sum_d (x_d**2 + EPS))
        v_norm = jnp.sqrt(vv0 * vv0 + vv1 * vv1 + vv2 * vv2 + 3.0 * EPS)
        # Dense(2F -> F) on concat([s, v_norm]) == s @ W1s + v_norm @ W1v + b1
        hu = _swish(_dot(s, w1_s) + _dot(v_norm, w1_v) + b1)
        split = _dot(hu, w2) + b2                                 # (N, 3F)
        a_vv = split[:, :F]
        a_sv = split[:, F:2 * F]
        a_ss = split[:, 2 * F:]
        inner = uv0 * vv0 + uv1 * vv1 + uv2 * vv2
        s = s + inner * a_sv + a_ss
        v = v + jnp.concatenate([uv0 * a_vv, uv1 * a_vv, uv2 * a_vv], axis=-1)
        return s, v

    s0 = s0_ref[...]
    v0 = jnp.zeros((N, F3), jnp.float32)
    s, v = lax.fori_loop(0, num_layers, layer_body, (s0, v0), unroll=True)

    feat_ref[...] = s
    # fused two-head readout (output lanes padded to 128) + per-molecule SumPool
    hr = _swish(_dot(s, rw1_ref[...]) + rb1_ref[...])
    atom_e = _dot(hr, rw2_ref[...]) + rb2_ref[...]               # (N, 128)
    e_ref[...] = _dot(pool_ref[...], atom_e)                     # (M, 128) lane-dense


def painn_conv_stack(s0, gather_mat, scatter_mat, edge_feat, nslab, wslab,
                     readout, pool_mat, n_rbf):
    N, F = s0.shape
    M = pool_mat.shape[0]

    # generation-aware VMEM limit (~75% of physical, capped, floor of 32 MiB)
    try:
        vmem_cap = pltpu.get_tpu_info().vmem_capacity_bytes
    except Exception:
        vmem_cap = 64 * 1024 * 1024
    vmem_limit = max(32 * 1024 * 1024, min(int(0.75 * vmem_cap), 100 * 1024 * 1024))

    kernel = functools.partial(_painn_stack_kernel, F, n_rbf)
    vspec = pl.BlockSpec(memory_space=pltpu.MemorySpace.VMEM)
    return pl.pallas_call(
        kernel,
        in_specs=[vspec] * 11,
        out_specs=(vspec, vspec),
        out_shape=(jax.ShapeDtypeStruct((N, F), jnp.float32),
                   jax.ShapeDtypeStruct((M, LANE), jnp.float32)),
        compiler_params=pltpu.CompilerParams(vmem_limit_bytes=vmem_limit),
    )(s0, gather_mat, scatter_mat, edge_feat, nslab, wslab,
      readout['w1'], readout['b1'], readout['w2'], readout['b2'], pool_mat)


# --------------------------------------------------------------------------
# Parameter init (deterministic, synthetic; same structure as the reference).
# --------------------------------------------------------------------------
def _dense(key, in_dim, out_dim, scale=0.2):
    kw, kb = jax.random.split(key)
    w = scale * jax.random.normal(kw, (in_dim, out_dim), jnp.float32)
    b = 0.05 * jax.random.normal(kb, (1, out_dim), jnp.float32)
    return w, b


def init_params(key, feat_dim, n_rbf, cutoff, num_conv, output_keys):
    F = feat_dim
    keys = list(jax.random.split(key, 2 + 8 * num_conv + 2 * len(output_keys)))
    nxt = iter(keys).__next__

    embed = 0.5 * jax.random.normal(nxt(), (100, F), jnp.float32)
    embed = embed.at[0].set(0.0)  # padding_idx=0

    coef = (jnp.arange(1, n_rbf + 1, dtype=jnp.float32) * math.pi / cutoff).reshape(1, n_rbf)

    conv = []
    for _ in range(num_conv):
        w_phi1, b_phi1 = _dense(nxt(), F, F)
        w_phi2, b_phi2 = _dense(nxt(), F, 3 * F)
        w_dist, b_dist = _dense(nxt(), n_rbf, 3 * F)
        u_mat = 0.2 * jax.random.normal(nxt(), (F, F), jnp.float32)   # no bias
        v_mat = 0.2 * jax.random.normal(nxt(), (F, F), jnp.float32)   # no bias
        w1_s, b1 = _dense(nxt(), F, F)
        w1_v, _ = _dense(nxt(), F, F)
        w2, b2 = _dense(nxt(), F, 3 * F)
        conv.append({
            'message': {'w_phi1': w_phi1, 'b_phi1': b_phi1,
                        'w_phi2': w_phi2, 'b_phi2': b_phi2,
                        'w_dist': w_dist, 'b_dist': b_dist, 'coef': coef},
            'update': {'u_mat': u_mat, 'v_mat': v_mat,
                       'w1_s': w1_s, 'w1_v': w1_v, 'b1': b1, 'w2': w2, 'b2': b2},
        })

    readout = {}
    for k in output_keys:
        w1, b1 = _dense(nxt(), F, F // 2)
        w2, b2 = _dense(nxt(), F // 2, 1)
        readout[k] = {'w1': w1, 'b1': b1, 'w2': w2, 'b2': b2}

    return {'embed': embed, 'conv': conv, 'readout': readout}


# --------------------------------------------------------------------------
# Full PainnAdiabat forward.
# --------------------------------------------------------------------------
def painn_adiabat_forward(params, nxyz, nbrs, atoms_per_mol, cutoff, output_keys):
    z = nxyz[:, 0].astype(jnp.int32)
    xyz = nxyz[:, 1:]
    N = z.shape[0]
    F = params['embed'].shape[1]           # assumed multiple of 8
    n_rbf = params['conv'][0]['message']['w_dist'].shape[0]

    # ---- edge geometry (layer independent, computed once, outside the kernel) ----
    r_ij = xyz[nbrs[:, 1]] - xyz[nbrs[:, 0]]
    d2 = jnp.sum(r_ij * r_ij, axis=-1, keepdims=True)
    keep = jnp.sqrt(d2) <= cutoff                      # get_rij edge filter (no EPS)
    dist = jnp.sqrt(d2 + 3.0 * EPS)                    # preprocess_r: sqrt(sum(r^2 + EPS))
    unit = r_ij / dist
    coef = params['conv'][0]['message']['coef']        # (1, n_rbf) = n*pi/cutoff
    rbf = jnp.sin(coef * dist) / dist                  # PainnRadialBasis
    env = jnp.where((dist < cutoff) & keep,
                    0.5 * (jnp.cos(jnp.pi * dist / cutoff) + 1.0), 0.0)  # CosineEnvelope
    # fold env + b_dist into one matmul and carry the unit vector in the same slab:
    #   edge_feat = [rbf*env | env | ux uy uz | 0..]  (8-aligned columns)
    n_ef = n_rbf + 4
    n_ef_pad = ((n_ef + 7) // 8) * 8
    edge_feat = jnp.concatenate([rbf * env, env, unit], axis=1)
    edge_feat = jnp.pad(edge_feat, ((0, 0), (0, n_ef_pad - n_ef)))

    # one-hot matrices for in-kernel gather / scatter_add (bf16: 0/1 exact)
    # TODO(synk): for production N/E replace with scalar-prefetch indexed gather and
    # segment-sum scatter (one-hot is O(E*N) VMEM and won't fit v7x at real sizes).
    gather_mat = jax.nn.one_hot(nbrs[:, 1], N, dtype=jnp.bfloat16)      # (E, N)
    scatter_mat = jax.nn.one_hot(nbrs[:, 0], N, dtype=jnp.bfloat16).T   # (N, E)

    # EmbeddingBlock: s from lookup, v = 0 (built in-kernel)
    s0 = params['embed'][z]

    # ---- pack all per-layer weights into two contiguous slabs (2 DMAs total) ----
    eye3 = jnp.eye(3, dtype=jnp.float32)

    def pad_rows(x, rows):
        if x.shape[0] >= rows:
            return x
        return jnp.concatenate(
            [x, jnp.zeros((rows - x.shape[0], x.shape[1]), x.dtype)], axis=0)

    narrow, wide = [], []
    for c in params['conv']:
        m, u = c['message'], c['update']
        narrow.append(jnp.concatenate([
            m['w_phi1'], pad_rows(m['b_phi1'], 8),
            u['w1_s'], u['w1_v'], pad_rows(u['b1'], 8)], axis=0))        # (3F+16, F)
        w_dist_aug = pad_rows(jnp.concatenate([m['w_dist'], m['b_dist']], axis=0),
                              n_ef_pad)                                   # (n_ef_pad, 3F)
        wide.append(jnp.concatenate([
            m['w_phi2'], pad_rows(m['b_phi2'], 8), w_dist_aug,
            jnp.kron(eye3, u['u_mat']), jnp.kron(eye3, u['v_mat']),
            u['w2'], pad_rows(u['b2'], 8)], axis=0))                      # (8F+16+n_ef_pad, 3F)
    nslab = jnp.stack(narrow)
    wslab = jnp.stack(wide)

    # ---- fuse both readout heads; pad output columns to 128 lanes ----
    H = F // 2
    n_out = len(output_keys)
    ro_w1 = jnp.concatenate([params['readout'][k]['w1'] for k in output_keys], axis=1)
    ro_b1 = jnp.concatenate([params['readout'][k]['b1'] for k in output_keys], axis=1)
    ro_w2 = jnp.zeros((n_out * H, LANE), jnp.float32)
    ro_b2 = jnp.zeros((1, LANE), jnp.float32)
    for i, k in enumerate(output_keys):
        ro_w2 = ro_w2.at[i * H:(i + 1) * H, i].set(params['readout'][k]['w2'][:, 0])
        ro_b2 = ro_b2.at[0, i].set(params['readout'][k]['b2'][0, 0])
    readout = {'w1': ro_w1, 'b1': ro_b1, 'w2': ro_w2, 'b2': ro_b2}

    # per-molecule SumPool as a small one-hot matmul (fused into the kernel)
    mol_idx = np.repeat(np.arange(len(atoms_per_mol)), atoms_per_mol)
    pool_mat = jax.nn.one_hot(jnp.asarray(mol_idx), len(atoms_per_mol),
                              dtype=jnp.float32).T                        # (M, N)

    feat, e_pad = painn_conv_stack(s0, gather_mat, scatter_mat, edge_feat,
                                   nslab, wslab, readout, pool_mat, n_rbf)

    results = {k: e_pad[:, i:i + 1] for i, k in enumerate(output_keys)}
    results['features'] = feat

    # AdiabaticReadout: E_k = E_0 + |E_k| (abs_fn='abs'); keys ordered by suffix int
    ordered = sorted(output_keys, key=lambda x: int(x.split('_')[-1]))
    base = ordered[0]
    for key in ordered[1:]:
        results[key] = results[base] + jnp.abs(results[key])

    # TODO(synk): grad_keys (forces / NACVs) require autodiff through pallas_call
    # (custom VJP); omitted — PainnAdiabat internally sets grad_keys=[].
    return results


# --------------------------------------------------------------------------
if __name__ == "__main__":
    feat_dim = 32
    n_rbf = 8
    cutoff = 5.0
    num_conv = 2
    output_keys = ["energy_0", "energy_1"]
    atoms_per_mol = [8, 8]
    N = sum(atoms_per_mol)

    # directed neighbor list: all intra-molecule pairs (i != j)
    nbr_rows = []
    start = 0
    for na in atoms_per_mol:
        idx = np.arange(start, start + na)
        for i in idx:
            for j in idx:
                if i != j:
                    nbr_rows.append((i, j))
        start += na
    nbrs = jnp.asarray(np.array(nbr_rows, dtype=np.int32))               # (E, 2)

    key = jax.random.PRNGKey(0)
    kz, kx, kp = jax.random.split(key, 3)
    z = jax.random.randint(kz, (N,), 1, 10).astype(jnp.float32)
    xyz = jax.random.uniform(kx, (N, 3), jnp.float32, 0.0, 2.0)          # all pairs < cutoff
    nxyz = jnp.concatenate([z[:, None], xyz], axis=1)                    # (N, 4)

    params = init_params(kp, feat_dim, n_rbf, cutoff, num_conv, output_keys)

    results = painn_adiabat_forward(params, nxyz, nbrs, atoms_per_mol, cutoff, output_keys)
    jax.block_until_ready(results)

    assert results["energy_0"].shape == (len(atoms_per_mol), 1)
    assert results["energy_1"].shape == (len(atoms_per_mol), 1)
    assert results["features"].shape == (N, feat_dim)
    print("KERNEL_OK")
</pallas_src>

<mosaic_0001>
module attributes {stable_mosaic.version = 11 : i64} {
  func.func @_painn_stack_kernel(%arg0: memref<16x32xf32, #tpu.memory_space<vmem>>, %arg1: memref<112x16xbf16, #tpu.memory_space<vmem>>, %arg2: memref<16x112xbf16, #tpu.memory_space<vmem>>, %arg3: memref<112x16xf32, #tpu.memory_space<vmem>>, %arg4: memref<2x112x32xf32, #tpu.memory_space<vmem>>, %arg5: memref<2x288x96xf32, #tpu.memory_space<vmem>>, %arg6: memref<32x32xf32, #tpu.memory_space<vmem>>, %arg7: memref<1x32xf32, #tpu.memory_space<vmem>>, %arg8: memref<32x128xf32, #tpu.memory_space<vmem>>, %arg9: memref<1x128xf32, #tpu.memory_space<vmem>>, %arg10: memref<2x16xf32, #tpu.memory_space<vmem>>, %arg11: memref<16x32xf32, #tpu.memory_space<vmem>>, %arg12: memref<2x128xf32, #tpu.memory_space<vmem>>) attributes {dimension_semantics = [], scalar_prefetch = 0 : i64, scratch_operands = 0 : i64, tpu.core_type = #tpu.core_type<tc>} {
    %c0 = arith.constant 0 : index
    %c0_0 = arith.constant 0 : index
    %0 = vector.load %arg1[%c0, %c0_0] : memref<112x16xbf16, #tpu.memory_space<vmem>>, vector<112x16xbf16>
    %c0_1 = arith.constant 0 : index
    %c0_2 = arith.constant 0 : index
    %1 = vector.load %arg2[%c0_1, %c0_2] : memref<16x112xbf16, #tpu.memory_space<vmem>>, vector<16x112xbf16>
    %c0_3 = arith.constant 0 : index
    %c0_4 = arith.constant 0 : index
    %2 = vector.load %arg3[%c0_3, %c0_4] : memref<112x16xf32, #tpu.memory_space<vmem>>, vector<112x16xf32>
    %3 = vector.extract_strided_slice %2 {offsets = [0, 9], sizes = [112, 1], strides = [1, 1]} : vector<112x16xf32> to vector<112x1xf32>
    %4 = vector.extract_strided_slice %2 {offsets = [0, 10], sizes = [112, 1], strides = [1, 1]} : vector<112x16xf32> to vector<112x1xf32>
    %5 = vector.extract_strided_slice %2 {offsets = [0, 11], sizes = [112, 1], strides = [1, 1]} : vector<112x16xf32> to vector<112x1xf32>
    %c0_5 = arith.constant 0 : index
    %c0_6 = arith.constant 0 : index
    %6 = vector.load %arg0[%c0_5, %c0_6] : memref<16x32xf32, #tpu.memory_space<vmem>>, vector<16x32xf32>
    %cst = arith.constant 0.000000e+00 : f32
    %7 = vector.broadcast %cst : f32 to vector<16x96xf32>
    %c0_i32 = arith.constant 0 : i32
    %8 = arith.index_cast %c0_i32 : i32 to index
    %c0_7 = arith.constant 0 : index
    %c0_8 = arith.constant 0 : index
    %9 = vector.load %arg4[%8, %c0_7, %c0_8] : memref<2x112x32xf32, #tpu.memory_space<vmem>>, vector<1x32x32xf32>
    %10 = vector.shape_cast %9 : vector<1x32x32xf32> to vector<32x32xf32>
    %11 = arith.index_cast %c0_i32 : i32 to index
    %c32 = arith.constant 32 : index
    %c0_9 = arith.constant 0 : index
    %12 = vector.load %arg4[%11, %c32, %c0_9] : memref<2x112x32xf32, #tpu.memory_space<vmem>>, vector<1x1x32xf32>
    %13 = vector.shape_cast %12 : vector<1x1x32xf32> to vector<1x32xf32>
    %14 = arith.index_cast %c0_i32 : i32 to index
    %c40 = arith.constant 40 : index
    %c0_10 = arith.constant 0 : index
    %15 = vector.load %arg4[%14, %c40, %c0_10] : memref<2x112x32xf32, #tpu.memory_space<vmem>>, vector<1x32x32xf32>
    %16 = vector.shape_cast %15 : vector<1x32x32xf32> to vector<32x32xf32>
    %17 = arith.index_cast %c0_i32 : i32 to index
    %c72 = arith.constant 72 : index
    %c0_11 = arith.constant 0 : index
    %18 = vector.load %arg4[%17, %c72, %c0_11] : memref<2x112x32xf32, #tpu.memory_space<vmem>>, vector<1x32x32xf32>
    %19 = vector.shape_cast %18 : vector<1x32x32xf32> to vector<32x32xf32>
    %20 = arith.index_cast %c0_i32 : i32 to index
    %c104 = arith.constant 104 : index
    %c0_12 = arith.constant 0 : index
    %21 = vector.load %arg4[%20, %c104, %c0_12] : memref<2x112x32xf32, #tpu.memory_space<vmem>>, vector<1x1x32xf32>
    %22 = vector.shape_cast %21 : vector<1x1x32xf32> to vector<1x32xf32>
    %23 = arith.index_cast %c0_i32 : i32 to index
    %c0_13 = arith.constant 0 : index
    %c0_14 = arith.constant 0 : index
    %24 = vector.load %arg5[%23, %c0_13, %c0_14] : memref<2x288x96xf32, #tpu.memory_space<vmem>>, vector<1x32x96xf32>
    %25 = vector.shape_cast %24 : vector<1x32x96xf32> to vector<32x96xf32>
    %26 = arith.index_cast %c0_i32 : i32 to index
    %c32_15 = arith.constant 32 : index
    %c0_16 = arith.constant 0 : index
    %27 = vector.load %arg5[%26, %c32_15, %c0_16] : memref<2x288x96xf32, #tpu.memory_space<vmem>>, vector<1x1x96xf32>
    %28 = vector.shape_cast %27 : vector<1x1x96xf32> to vector<1x96xf32>
    %29 = arith.index_cast %c0_i32 : i32 to index
    %c40_17 = arith.constant 40 : index
    %c0_18 = arith.constant 0 : index
    %30 = vector.load %arg5[%29, %c40_17, %c0_18] : memref<2x288x96xf32, #tpu.memory_space<vmem>>, vector<1x16x96xf32>
    %31 = vector.shape_cast %30 : vector<1x16x96xf32> to vector<16x96xf32>
    %32 = arith.index_cast %c0_i32 : i32 to index
    %c56 = arith.constant 56 : index
    %c0_19 = arith.constant 0 : index
    %33 = vector.load %arg5[%32, %c56, %c0_19] : memref<2x288x96xf32, #tpu.memory_space<vmem>>, vector<1x96x96xf32>
    %34 = vector.shape_cast %33 : vector<1x96x96xf32> to vector<96x96xf32>
    %35 = arith.index_cast %c0_i32 : i32 to index
    %c152 = arith.constant 152 : index
    %c0_20 = arith.constant 0 : index
    %36 = vector.load %arg5[%35, %c152, %c0_20] : memref<2x288x96xf32, #tpu.memory_space<vmem>>, vector<1x96x96xf32>
    %37 = vector.shape_cast %36 : vector<1x96x96xf32> to vector<96x96xf32>
    %38 = arith.index_cast %c0_i32 : i32 to index
    %c248 = arith.constant 248 : index
    %c0_21 = arith.constant 0 : index
    %39 = vector.load %arg5[%38, %c248, %c0_21] : memref<2x288x96xf32, #tpu.memory_space<vmem>>, vector<1x32x96xf32>
    %40 = vector.shape_cast %39 : vector<1x32x96xf32> to vector<32x96xf32>
    %41 = arith.index_cast %c0_i32 : i32 to index
    %c280 = arith.constant 280 : index
    %c0_22 = arith.constant 0 : index
    %42 = vector.load %arg5[%41, %c280, %c0_22] : memref<2x288x96xf32, #tpu.memory_space<vmem>>, vector<1x1x96xf32>
    %43 = vector.shape_cast %42 : vector<1x1x96xf32> to vector<1x96xf32>
    %cst_23 = arith.constant dense<0.000000e+00> : vector<16x32xf32>
    %44 = tpu.matmul %6, %10, %cst_23 {dimension_numbers = #tpu.dot_dimension_numbers<[1], [0], [0], [1], [0, 0, 1, 1], [], []>} : vector<16x32xf32>, vector<32x32xf32>, vector<16x32xf32> -> vector<16x32xf32>
    %45 = vector.broadcast %13 : vector<1x32xf32> to vector<16x32xf32>
    %46 = arith.addf %44, %45 : vector<16x32xf32>
    %47 = arith.negf %46 : vector<16x32xf32>
    %48 = math.exp %47 : vector<16x32xf32>
    %cst_24 = arith.constant 1.000000e+00 : f32
    %49 = vector.broadcast %cst_24 : f32 to vector<16x32xf32>
    %50 = arith.addf %49, %48 : vector<16x32xf32>
    %51 = arith.divf %49, %50 : vector<16x32xf32>
    %52 = arith.mulf %46, %51 : vector<16x32xf32>
    %cst_25 = arith.constant dense<0.000000e+00> : vector<16x96xf32>
    %53 = tpu.matmul %52, %25, %cst_25 {dimension_numbers = #tpu.dot_dimension_numbers<[1], [0], [0], [1], [0, 0, 1, 1], [], []>} : vector<16x32xf32>, vector<32x96xf32>, vector<16x96xf32> -> vector<16x96xf32>
    %54 = vector.broadcast %28 : vector<1x96xf32> to vector<16x96xf32>
    %55 = arith.addf %53, %54 : vector<16x96xf32>
    %56 = arith.truncf %55 : vector<16x96xf32> to vector<16x96xbf16>
    %cst_26 = arith.constant dense<0.000000e+00> : vector<112x96xf32>
    %57 = tpu.matmul %0, %56, %cst_26 {dimension_numbers = #tpu.dot_dimension_numbers<[1], [0], [0], [1], [0, 0, 1, 1], [], []>} : vector<112x16xbf16>, vector<16x96xbf16>, vector<112x96xf32> -> vector<112x96xf32>
    %58 = arith.truncf %7 : vector<16x96xf32> to vector<16x96xbf16>
    %cst_27 = arith.constant dense<0.000000e+00> : vector<112x96xf32>
    %59 = tpu.matmul %0, %58, %cst_27 {dimension_numbers = #tpu.dot_dimension_numbers<[1], [0], [0], [1], [0, 0, 1, 1], [], []>} : vector<112x16xbf16>, vector<16x96xbf16>, vector<112x96xf32> -> vector<112x96xf32>
    %cst_28 = arith.constant dense<0.000000e+00> : vector<112x96xf32>
    %60 = tpu.matmul %2, %31, %cst_28 {dimension_numbers = #tpu.dot_dimension_numbers<[1], [0], [0], [1], [0, 0, 1, 1], [], []>} : vector<112x16xf32>, vector<16x96xf32>, vector<112x96xf32> -> vector<112x96xf32>
    %61 = arith.mulf %57, %60 : vector<112x96xf32>
    %62 = vector.extract_strided_slice %61 {offsets = [0, 0], sizes = [112, 32], strides = [1, 1]} : vector<112x96xf32> to vector<112x32xf32>
    %63 = vector.extract_strided_slice %61 {offsets = [0, 32], sizes = [112, 32], strides = [1, 1]} : vector<112x96xf32> to vector<112x32xf32>
    %64 = vector.extract_strided_slice %61 {offsets = [0, 64], sizes = [112, 32], strides = [1, 1]} : vector<112x96xf32> to vector<112x32xf32>
    %65 = vector.broadcast %3 : vector<112x1xf32> to vector<112x32xf32>
    %66 = arith.mulf %64, %65 : vector<112x32xf32>
    %67 = vector.extract_strided_slice %59 {offsets = [0, 0], sizes = [112, 32], strides = [1, 1]} : vector<112x96xf32> to vector<112x32xf32>
    %68 = arith.mulf %62, %67 : vector<112x32xf32>
    %69 = arith.addf %66, %68 : vector<112x32xf32>
    %70 = vector.broadcast %4 : vector<112x1xf32> to vector<112x32xf32>
    %71 = arith.mulf %64, %70 : vector<112x32xf32>
    %72 = vector.extract_strided_slice %59 {offsets = [0, 32], sizes = [112, 32], strides = [1, 1]} : vector<112x96xf32> to vector<112x32xf32>
    %73 = arith.mulf %62, %72 : vector<112x32xf32>
    %74 = arith.addf %71, %73 : vector<112x32xf32>
    %75 = vector.broadcast %5 : vector<112x1xf32> to vector<112x32xf32>
    %76 = arith.mulf %64, %75 : vector<112x32xf32>
    %77 = vector.extract_strided_slice %59 {offsets = [0, 64], sizes = [112, 32], strides = [1, 1]} : vector<112x96xf32> to vector<112x32xf32>
    %78 = arith.mulf %62, %77 : vector<112x32xf32>
    %79 = arith.addf %76, %78 : vector<112x32xf32>
    %80 = tpu.concatenate %63, %69, %74, %79 in 1 : vector<112x32xf32>, vector<112x32xf32>, vector<112x32xf32>, vector<112x32xf32> -> vector<112x128xf32>
    %81 = arith.truncf %80 : vector<112x128xf32> to vector<112x128xbf16>
    %cst_29 = arith.constant dense<0.000000e+00> : vector<16x128xf32>
    %82 = tpu.matmul %1, %81, %cst_29 {dimension_numbers = #tpu.dot_dimension_numbers<[1], [0], [0], [1], [0, 0, 1, 1], [], []>} : vector<16x112xbf16>, vector<112x128xbf16>, vector<16x128xf32> -> vector<16x128xf32>
    %83 = vector.extract_strided_slice %82 {offsets = [0, 0], sizes = [16, 32], strides = [1, 1]} : vector<16x128xf32> to vector<16x32xf32>
    %84 = arith.addf %6, %83 : vector<16x32xf32>
    %85 = vector.extract_strided_slice %82 {offsets = [0, 32], sizes = [16, 96], strides = [1, 1]} : vector<16x128xf32> to vector<16x96xf32>
    %86 = arith.addf %7, %85 : vector<16x96xf32>
    %cst_30 = arith.constant dense<0.000000e+00> : vector<16x96xf32>
    %87 = tpu.matmul %86, %34, %cst_30 {dimension_numbers = #tpu.dot_dimension_numbers<[1], [0], [0], [1], [0, 0, 1, 1], [], []>} : vector<16x96xf32>, vector<96x96xf32>, vector<16x96xf32> -> vector<16x96xf32>
    %cst_31 = arith.constant dense<0.000000e+00> : vector<16x96xf32>
    %88 = tpu.matmul %86, %37, %cst_31 {dimension_numbers = #tpu.dot_dimension_numbers<[1], [0], [0], [1], [0, 0, 1, 1], [], []>} : vector<16x96xf32>, vector<96x96xf32>, vector<16x96xf32> -> vector<16x96xf32>
    %89 = vector.extract_strided_slice %88 {offsets = [0, 0], sizes = [16, 32], strides = [1, 1]} : vector<16x96xf32> to vector<16x32xf32>
    %90 = vector.extract_strided_slice %88 {offsets = [0, 32], sizes = [16, 32], strides = [1, 1]} : vector<16x96xf32> to vector<16x32xf32>
    %91 = vector.extract_strided_slice %88 {offsets = [0, 64], sizes = [16, 32], strides = [1, 1]} : vector<16x96xf32> to vector<16x32xf32>
    %92 = vector.extract_strided_slice %87 {offsets = [0, 0], sizes = [16, 32], strides = [1, 1]} : vector<16x96xf32> to vector<16x32xf32>
    %93 = vector.extract_strided_slice %87 {offsets = [0, 32], sizes = [16, 32], strides = [1, 1]} : vector<16x96xf32> to vector<16x32xf32>
    %94 = vector.extract_strided_slice %87 {offsets = [0, 64], sizes = [16, 32], strides = [1, 1]} : vector<16x96xf32> to vector<16x32xf32>
    %95 = arith.mulf %89, %89 : vector<16x32xf32>
    %96 = arith.mulf %90, %90 : vector<16x32xf32>
    %97 = arith.addf %95, %96 : vector<16x32xf32>
    %98 = arith.mulf %91, %91 : vector<16x32xf32>
    %99 = arith.addf %97, %98 : vector<16x32xf32>
    %cst_32 = arith.constant 3.000000e-15 : f32
    %100 = vector.broadcast %cst_32 : f32 to vector<16x32xf32>
    %101 = arith.addf %99, %100 : vector<16x32xf32>
    %102 = math.sqrt %101 : vector<16x32xf32>
    %cst_33 = arith.constant dense<0.000000e+00> : vector<16x32xf32>
    %103 = tpu.matmul %84, %16, %cst_33 {dimension_numbers = #tpu.dot_dimension_numbers<[1], [0], [0], [1], [0, 0, 1, 1], [], []>} : vector<16x32xf32>, vector<32x32xf32>, vector<16x32xf32> -> vector<16x32xf32>
    %cst_34 = arith.constant dense<0.000000e+00> : vector<16x32xf32>
    %104 = tpu.matmul %102, %19, %cst_34 {dimension_numbers = #tpu.dot_dimension_numbers<[1], [0], [0], [1], [0, 0, 1, 1], [], []>} : vector<16x32xf32>, vector<32x32xf32>, vector<16x32xf32> -> vector<16x32xf32>
    %105 = arith.addf %103, %104 : vector<16x32xf32>
    %106 = vector.broadcast %22 : vector<1x32xf32> to vector<16x32xf32>
    %107 = arith.addf %105, %106 : vector<16x32xf32>
    %108 = arith.negf %107 : vector<16x32xf32>
    %109 = math.exp %108 : vector<16x32xf32>
    %cst_35 = arith.constant 1.000000e+00 : f32
    %110 = vector.broadcast %cst_35 : f32 to vector<16x32xf32>
    %111 = arith.addf %110, %109 : vector<16x32xf32>
    %112 = arith.divf %110, %111 : vector<16x32xf32>
    %113 = arith.mulf %107, %112 : vector<16x32xf32>
    %cst_36 = arith.constant dense<0.000000e+00> : vector<16x96xf32>
    %114 = tpu.matmul %113, %40, %cst_36 {dimension_numbers = #tpu.dot_dimension_numbers<[1], [0], [0], [1], [0, 0, 1, 1], [], []>} : vector<16x32xf32>, vector<32x96xf32>, vector<16x96xf32> -> vector<16x96xf32>
    %115 = vector.broadcast %43 : vector<1x96xf32> to vector<16x96xf32>
    %116 = arith.addf %114, %115 : vector<16x96xf32>
    %117 = vector.extract_strided_slice %116 {offsets = [0, 0], sizes = [16, 32], strides = [1, 1]} : vector<16x96xf32> to vector<16x32xf32>
    %118 = vector.extract_strided_slice %116 {offsets = [0, 32], sizes = [16, 32], strides = [1, 1]} : vector<16x96xf32> to vector<16x32xf32>
    %119 = vector.extract_strided_slice %116 {offsets = [0, 64], sizes = [16, 32], strides = [1, 1]} : vector<16x96xf32> to vector<16x32xf32>
    %120 = arith.mulf %92, %89 : vector<16x32xf32>
    %121 = arith.mulf %93, %90 : vector<16x32xf32>
    %122 = arith.addf %120, %121 : vector<16x32xf32>
    %123 = arith.mulf %94, %91 : vector<16x32xf32>
    %124 = arith.addf %122, %123 : vector<16x32xf32>
    %125 = arith.mulf %124, %118 : vector<16x32xf32>
    %126 = arith.addf %84, %125 : vector<16x32xf32>
    %127 = arith.addf %126, %119 : vector<16x32xf32>
    %128 = arith.mulf %92, %117 : vector<16x32xf32>
    %129 = arith.mulf %93, %117 : vector<16x32xf32>
    %130 = arith.mulf %94, %117 : vector<16x32xf32>
    %131 = tpu.concatenate %128, %129, %130 in 1 : vector<16x32xf32>, vector<16x32xf32>, vector<16x32xf32> -> vector<16x96xf32>
    %132 = arith.addf %86, %131 : vector<16x96xf32>
    %c1_i32 = arith.constant 1 : i32
    %133 = arith.index_cast %c1_i32 : i32 to index
    %c0_37 = arith.constant 0 : index
    %c0_38 = arith.constant 0 : index
    %134 = vector.load %arg4[%133, %c0_37, %c0_38] : memref<2x112x32xf32, #tpu.memory_space<vmem>>, vector<1x32x32xf32>
    %135 = vector.shape_cast %134 : vector<1x32x32xf32> to vector<32x32xf32>
    %136 = arith.index_cast %c1_i32 : i32 to index
    %c32_39 = arith.constant 32 : index
    %c0_40 = arith.constant 0 : index
    %137 = vector.load %arg4[%136, %c32_39, %c0_40] : memref<2x112x32xf32, #tpu.memory_space<vmem>>, vector<1x1x32xf32>
    %138 = vector.shape_cast %137 : vector<1x1x32xf32> to vector<1x32xf32>
    %139 = arith.index_cast %c1_i32 : i32 to index
    %c40_41 = arith.constant 40 : index
    %c0_42 = arith.constant 0 : index
    %140 = vector.load %arg4[%139, %c40_41, %c0_42] : memref<2x112x32xf32, #tpu.memory_space<vmem>>, vector<1x32x32xf32>
    %141 = vector.shape_cast %140 : vector<1x32x32xf32> to vector<32x32xf32>
    %142 = arith.index_cast %c1_i32 : i32 to index
    %c72_43 = arith.constant 72 : index
    %c0_44 = arith.constant 0 : index
    %143 = vector.load %arg4[%142, %c72_43, %c0_44] : memref<2x112x32xf32, #tpu.memory_space<vmem>>, vector<1x32x32xf32>
    %144 = vector.shape_cast %143 : vector<1x32x32xf32> to vector<32x32xf32>
    %145 = arith.index_cast %c1_i32 : i32 to index
    %c104_45 = arith.constant 104 : index
    %c0_46 = arith.constant 0 : index
    %146 = vector.load %arg4[%145, %c104_45, %c0_46] : memref<2x112x32xf32, #tpu.memory_space<vmem>>, vector<1x1x32xf32>
    %147 = vector.shape_cast %146 : vector<1x1x32xf32> to vector<1x32xf32>
    %148 = arith.index_cast %c1_i32 : i32 to index
    %c0_47 = arith.constant 0 : index
    %c0_48 = arith.constant 0 : index
    %149 = vector.load %arg5[%148, %c0_47, %c0_48] : memref<2x288x96xf32, #tpu.memory_space<vmem>>, vector<1x32x96xf32>
    %150 = vector.shape_cast %149 : vector<1x32x96xf32> to vector<32x96xf32>
    %151 = arith.index_cast %c1_i32 : i32 to index
    %c32_49 = arith.constant 32 : index
    %c0_50 = arith.constant 0 : index
    %152 = vector.load %arg5[%151, %c32_49, %c0_50] : memref<2x288x96xf32, #tpu.memory_space<vmem>>, vector<1x1x96xf32>
    %153 = vector.shape_cast %152 : vector<1x1x96xf32> to vector<1x96xf32>
    %154 = arith.index_cast %c1_i32 : i32 to index
    %c40_51 = arith.constant 40 : index
    %c0_52 = arith.constant 0 : index
    %155 = vector.load %arg5[%154, %c40_51, %c0_52] : memref<2x288x96xf32, #tpu.memory_space<vmem>>, vector<1x16x96xf32>
    %156 = vector.shape_cast %155 : vector<1x16x96xf32> to vector<16x96xf32>
    %157 = arith.index_cast %c1_i32 : i32 to index
    %c56_53 = arith.constant 56 : index
    %c0_54 = arith.constant 0 : index
    %158 = vector.load %arg5[%157, %c56_53, %c0_54] : memref<2x288x96xf32, #tpu.memory_space<vmem>>, vector<1x96x96xf32>
    %159 = vector.shape_cast %158 : vector<1x96x96xf32> to vector<96x96xf32>
    %160 = arith.index_cast %c1_i32 : i32 to index
    %c152_55 = arith.constant 152 : index
    %c0_56 = arith.constant 0 : index
    %161 = vector.load %arg5[%160, %c152_55, %c0_56] : memref<2x288x96xf32, #tpu.memory_space<vmem>>, vector<1x96x96xf32>
    %162 = vector.shape_cast %161 : vector<1x96x96xf32> to vector<96x96xf32>
    %163 = arith.index_cast %c1_i32 : i32 to index
    %c248_57 = arith.constant 248 : index
    %c0_58 = arith.constant 0 : index
    %164 = vector.load %arg5[%163, %c248_57, %c0_58] : memref<2x288x96xf32, #tpu.memory_space<vmem>>, vector<1x32x96xf32>
    %165 = vector.shape_cast %164 : vector<1x32x96xf32> to vector<32x96xf32>
    %166 = arith.index_cast %c1_i32 : i32 to index
    %c280_59 = arith.constant 280 : index
    %c0_60 = arith.constant 0 : index
    %167 = vector.load %arg5[%166, %c280_59, %c0_60] : memref<2x288x96xf32, #tpu.memory_space<vmem>>, vector<1x1x96xf32>
    %168 = vector.shape_cast %167 : vector<1x1x96xf32> to vector<1x96xf32>
    %cst_61 = arith.constant dense<0.000000e+00> : vector<16x32xf32>
    %169 = tpu.matmul %127, %135, %cst_61 {dimension_numbers = #tpu.dot_dimension_numbers<[1], [0], [0], [1], [0, 0, 1, 1], [], []>} : vector<16x32xf32>, vector<32x32xf32>, vector<16x32xf32> -> vector<16x32xf32>
    %170 = vector.broadcast %138 : vector<1x32xf32> to vector<16x32xf32>
    %171 = arith.addf %169, %170 : vector<16x32xf32>
    %172 = arith.negf %171 : vector<16x32xf32>
    %173 = math.exp %172 : vector<16x32xf32>
    %cst_62 = arith.constant 1.000000e+00 : f32
    %174 = vector.broadcast %cst_62 : f32 to vector<16x32xf32>
    %175 = arith.addf %174, %173 : vector<16x32xf32>
    %176 = arith.divf %174, %175 : vector<16x32xf32>
    %177 = arith.mulf %171, %176 : vector<16x32xf32>
    %cst_63 = arith.constant dense<0.000000e+00> : vector<16x96xf32>
    %178 = tpu.matmul %177, %150, %cst_63 {dimension_numbers = #tpu.dot_dimension_numbers<[1], [0], [0], [1], [0, 0, 1, 1], [], []>} : vector<16x32xf32>, vector<32x96xf32>, vector<16x96xf32> -> vector<16x96xf32>
    %179 = vector.broadcast %153 : vector<1x96xf32> to vector<16x96xf32>
    %180 = arith.addf %178, %179 : vector<16x96xf32>
    %181 = arith.truncf %180 : vector<16x96xf32> to vector<16x96xbf16>
    %cst_64 = arith.constant dense<0.000000e+00> : vector<112x96xf32>
    %182 = tpu.matmul %0, %181, %cst_64 {dimension_numbers = #tpu.dot_dimension_numbers<[1], [0], [0], [1], [0, 0, 1, 1], [], []>} : vector<112x16xbf16>, vector<16x96xbf16>, vector<112x96xf32> -> vector<112x96xf32>
    %183 = arith.truncf %132 : vector<16x96xf32> to vector<16x96xbf16>
    %cst_65 = arith.constant dense<0.000000e+00> : vector<112x96xf32>
    %184 = tpu.matmul %0, %183, %cst_65 {dimension_numbers = #tpu.dot_dimension_numbers<[1], [0], [0], [1], [0, 0, 1, 1], [], []>} : vector<112x16xbf16>, vector<16x96xbf16>, vector<112x96xf32> -> vector<112x96xf32>
    %cst_66 = arith.constant dense<0.000000e+00> : vector<112x96xf32>
    %185 = tpu.matmul %2, %156, %cst_66 {dimension_numbers = #tpu.dot_dimension_numbers<[1], [0], [0], [1], [0, 0, 1, 1], [], []>} : vector<112x16xf32>, vector<16x96xf32>, vector<112x96xf32> -> vector<112x96xf32>
    %186 = arith.mulf %182, %185 : vector<112x96xf32>
    %187 = vector.extract_strided_slice %186 {offsets = [0, 0], sizes = [112, 32], strides = [1, 1]} : vector<112x96xf32> to vector<112x32xf32>
    %188 = vector.extract_strided_slice %186 {offsets = [0, 32], sizes = [112, 32], strides = [1, 1]} : vector<112x96xf32> to vector<112x32xf32>
    %189 = vector.extract_strided_slice %186 {offsets = [0, 64], sizes = [112, 32], strides = [1, 1]} : vector<112x96xf32> to vector<112x32xf32>
    %190 = vector.broadcast %3 : vector<112x1xf32> to vector<112x32xf32>
    %191 = arith.mulf %189, %190 : vector<112x32xf32>
    %192 = vector.extract_strided_slice %184 {offsets = [0, 0], sizes = [112, 32], strides = [1, 1]} : vector<112x96xf32> to vector<112x32xf32>
    %193 = arith.mulf %187, %192 : vector<112x32xf32>
    %194 = arith.addf %191, %193 : vector<112x32xf32>
    %195 = vector.broadcast %4 : vector<112x1xf32> to vector<112x32xf32>
    %196 = arith.mulf %189, %195 : vector<112x32xf32>
    %197 = vector.extract_strided_slice %184 {offsets = [0, 32], sizes = [112, 32], strides = [1, 1]} : vector<112x96xf32> to vector<112x32xf32>
    %198 = arith.mulf %187, %197 : vector<112x32xf32>
    %199 = arith.addf %196, %198 : vector<112x32xf32>
    %200 = vector.broadcast %5 : vector<112x1xf32> to vector<112x32xf32>
    %201 = arith.mulf %189, %200 : vector<112x32xf32>
    %202 = vector.extract_strided_slice %184 {offsets = [0, 64], sizes = [112, 32], strides = [1, 1]} : vector<112x96xf32> to vector<112x32xf32>
    %203 = arith.mulf %187, %202 : vector<112x32xf32>
    %204 = arith.addf %201, %203 : vector<112x32xf32>
    %205 = tpu.concatenate %188, %194, %199, %204 in 1 : vector<112x32xf32>, vector<112x32xf32>, vector<112x32xf32>, vector<112x32xf32> -> vector<112x128xf32>
    %206 = arith.truncf %205 : vector<112x128xf32> to vector<112x128xbf16>
    %cst_67 = arith.constant dense<0.000000e+00> : vector<16x128xf32>
    %207 = tpu.matmul %1, %206, %cst_67 {dimension_numbers = #tpu.dot_dimension_numbers<[1], [0], [0], [1], [0, 0, 1, 1], [], []>} : vector<16x112xbf16>, vector<112x128xbf16>, vector<16x128xf32> -> vector<16x128xf32>
    %208 = vector.extract_strided_slice %207 {offsets = [0, 0], sizes = [16, 32], strides = [1, 1]} : vector<16x128xf32> to vector<16x32xf32>
    %209 = arith.addf %127, %208 : vector<16x32xf32>
    %210 = vector.extract_strided_slice %207 {offsets = [0, 32], sizes = [16, 96], strides = [1, 1]} : vector<16x128xf32> to vector<16x96xf32>
    %211 = arith.addf %132, %210 : vector<16x96xf32>
    %cst_68 = arith.constant dense<0.000000e+00> : vector<16x96xf32>
    %212 = tpu.matmul %211, %159, %cst_68 {dimension_numbers = #tpu.dot_dimension_numbers<[1], [0], [0], [1], [0, 0, 1, 1], [], []>} : vector<16x96xf32>, vector<96x96xf32>, vector<16x96xf32> -> vector<16x96xf32>
    %cst_69 = arith.constant dense<0.000000e+00> : vector<16x96xf32>
    %213 = tpu.matmul %211, %162, %cst_69 {dimension_numbers = #tpu.dot_dimension_numbers<[1], [0], [0], [1], [0, 0, 1, 1], [], []>} : vector<16x96xf32>, vector<96x96xf32>, vector<16x96xf32> -> vector<16x96xf32>
    %214 = vector.extract_strided_slice %213 {offsets = [0, 0], sizes = [16, 32], strides = [1, 1]} : vector<16x96xf32> to vector<16x32xf32>
    %215 = vector.extract_strided_slice %213 {offsets = [0, 32], sizes = [16, 32], strides = [1, 1]} : vector<16x96xf32> to vector<16x32xf32>
    %216 = vector.extract_strided_slice %213 {offsets = [0, 64], sizes = [16, 32], strides = [1, 1]} : vector<16x96xf32> to vector<16x32xf32>
    %217 = vector.extract_strided_slice %212 {offsets = [0, 0], sizes = [16, 32], strides = [1, 1]} : vector<16x96xf32> to vector<16x32xf32>
    %218 = vector.extract_strided_slice %212 {offsets = [0, 32], sizes = [16, 32], strides = [1, 1]} : vector<16x96xf32> to vector<16x32xf32>
    %219 = vector.extract_strided_slice %212 {offsets = [0, 64], sizes = [16, 32], strides = [1, 1]} : vector<16x96xf32> to vector<16x32xf32>
    %220 = arith.mulf %214, %214 : vector<16x32xf32>
    %221 = arith.mulf %215, %215 : vector<16x32xf32>
    %222 = arith.addf %220, %221 : vector<16x32xf32>
    %223 = arith.mulf %216, %216 : vector<16x32xf32>
    %224 = arith.addf %222, %223 : vector<16x32xf32>
    %cst_70 = arith.constant 3.000000e-15 : f32
    %225 = vector.broadcast %cst_70 : f32 to vector<16x32xf32>
    %226 = arith.addf %224, %225 : vector<16x32xf32>
    %227 = math.sqrt %226 : vector<16x32xf32>
    %cst_71 = arith.constant dense<0.000000e+00> : vector<16x32xf32>
    %228 = tpu.matmul %209, %141, %cst_71 {dimension_numbers = #tpu.dot_dimension_numbers<[1], [0], [0], [1], [0, 0, 1, 1], [], []>} : vector<16x32xf32>, vector<32x32xf32>, vector<16x32xf32> -> vector<16x32xf32>
    %cst_72 = arith.constant dense<0.000000e+00> : vector<16x32xf32>
    %229 = tpu.matmul %227, %144, %cst_72 {dimension_numbers = #tpu.dot_dimension_numbers<[1], [0], [0], [1], [0, 0, 1, 1], [], []>} : vector<16x32xf32>, vector<32x32xf32>, vector<16x32xf32> -> vector<16x32xf32>
    %230 = arith.addf %228, %229 : vector<16x32xf32>
    %231 = vector.broadcast %147 : vector<1x32xf32> to vector<16x32xf32>
    %232 = arith.addf %230, %231 : vector<16x32xf32>
    %233 = arith.negf %232 : vector<16x32xf32>
    %234 = math.exp %233 : vector<16x32xf32>
    %cst_73 = arith.constant 1.000000e+00 : f32
    %235 = vector.broadcast %cst_73 : f32 to vector<16x32xf32>
    %236 = arith.addf %235, %234 : vector<16x32xf32>
    %237 = arith.divf %235, %236 : vector<16x32xf32>
    %238 = arith.mulf %232, %237 : vector<16x32xf32>
    %cst_74 = arith.constant dense<0.000000e+00> : vector<16x96xf32>
    %239 = tpu.matmul %238, %165, %cst_74 {dimension_numbers = #tpu.dot_dimension_numbers<[1], [0], [0], [1], [0, 0, 1, 1], [], []>} : vector<16x32xf32>, vector<32x96xf32>, vector<16x96xf32> -> vector<16x96xf32>
    %240 = vector.broadcast %168 : vector<1x96xf32> to vector<16x96xf32>
    %241 = arith.addf %239, %240 : vector<16x96xf32>
    %242 = vector.extract_strided_slice %241 {offsets = [0, 0], sizes = [16, 32], strides = [1, 1]} : vector<16x96xf32> to vector<16x32xf32>
    %243 = vector.extract_strided_slice %241 {offsets = [0, 32], sizes = [16, 32], strides = [1, 1]} : vector<16x96xf32> to vector<16x32xf32>
    %244 = vector.extract_strided_slice %241 {offsets = [0, 64], sizes = [16, 32], strides = [1, 1]} : vector<16x96xf32> to vector<16x32xf32>
    %245 = arith.mulf %217, %214 : vector<16x32xf32>
    %246 = arith.mulf %218, %215 : vector<16x32xf32>
    %247 = arith.addf %245, %246 : vector<16x32xf32>
    %248 = arith.mulf %219, %216 : vector<16x32xf32>
    %249 = arith.addf %247, %248 : vector<16x32xf32>
    %250 = arith.mulf %249, %243 : vector<16x32xf32>
    %251 = arith.addf %209, %250 : vector<16x32xf32>
    %252 = arith.addf %251, %244 : vector<16x32xf32>
    %253 = arith.mulf %217, %242 : vector<16x32xf32>
    %254 = arith.mulf %218, %242 : vector<16x32xf32>
    %255 = arith.mulf %219, %242 : vector<16x32xf32>
    %256 = tpu.concatenate %253, %254, %255 in 1 : vector<16x32xf32>, vector<16x32xf32>, vector<16x32xf32> -> vector<16x96xf32>
    %257 = arith.addf %211, %256 : vector<16x96xf32>
    %c2_i32 = arith.constant 2 : i32
    %c0_75 = arith.constant 0 : index
    %c0_76 = arith.constant 0 : index
    %258 = vector.load %arg11[%c0_75, %c0_76] : memref<16x32xf32, #tpu.memory_space<vmem>>, vector<16x32xf32>
    tpu.vector_store %arg11[%c0_75, %c0_76], %252 {strides = array<i32>} : memref<16x32xf32, #tpu.memory_space<vmem>>, vector<16x32xf32>,
    %c0_77 = arith.constant 0 : index
    %c0_78 = arith.constant 0 : index
    %259 = vector.load %arg6[%c0_77, %c0_78] : memref<32x32xf32, #tpu.memory_space<vmem>>, vector<32x32xf32>
    %cst_79 = arith.constant dense<0.000000e+00> : vector<16x32xf32>
    %260 = tpu.matmul %252, %259, %cst_79 {dimension_numbers = #tpu.dot_dimension_numbers<[1], [0], [0], [1], [0, 0, 1, 1], [], []>} : vector<16x32xf32>, vector<32x32xf32>, vector<16x32xf32> -> vector<16x32xf32>
    %c0_80 = arith.constant 0 : index
    %c0_81 = arith.constant 0 : index
    %261 = vector.load %arg7[%c0_80, %c0_81] : memref<1x32xf32, #tpu.memory_space<vmem>>, vector<1x32xf32>
    %262 = vector.broadcast %261 : vector<1x32xf32> to vector<16x32xf32>
    %263 = arith.addf %260, %262 : vector<16x32xf32>
    %264 = arith.negf %263 : vector<16x32xf32>
    %265 = math.exp %264 : vector<16x32xf32>
    %cst_82 = arith.constant 1.000000e+00 : f32
    %266 = vector.broadcast %cst_82 : f32 to vector<16x32xf32>
    %267 = arith.addf %266, %265 : vector<16x32xf32>
    %268 = arith.divf %266, %267 : vector<16x32xf32>
    %269 = arith.mulf %263, %268 : vector<16x32xf32>
    %c0_83 = arith.constant 0 : index
    %c0_84 = arith.constant 0 : index
    %270 = vector.load %arg8[%c0_83, %c0_84] : memref<32x128xf32, #tpu.memory_space<vmem>>, vector<32x128xf32>
    %cst_85 = arith.constant dense<0.000000e+00> : vector<16x128xf32>
    %271 = tpu.matmul %269, %270, %cst_85 {dimension_numbers = #tpu.dot_dimension_numbers<[1], [0], [0], [1], [0, 0, 1, 1], [], []>} : vector<16x32xf32>, vector<32x128xf32>, vector<16x128xf32> -> vector<16x128xf32>
    %c0_86 = arith.constant 0 : index
    %c0_87 = arith.constant 0 : index
    %272 = vector.load %arg9[%c0_86, %c0_87] : memref<1x128xf32, #tpu.memory_space<vmem>>, vector<1x128xf32>
    %273 = vector.broadcast %272 : vector<1x128xf32> to vector<16x128xf32>
    %274 = arith.addf %271, %273 : vector<16x128xf32>
    %c0_88 = arith.constant 0 : index
    %c0_89 = arith.constant 0 : index
    %275 = vector.load %arg10[%c0_88, %c0_89] : memref<2x16xf32, #tpu.memory_space<vmem>>, vector<2x16xf32>
    %cst_90 = arith.constant dense<0.000000e+00> : vector<2x128xf32>
    %276 = tpu.matmul %275, %274, %cst_90 {dimension_numbers = #tpu.dot_dimension_numbers<[1], [0], [0], [1], [0, 0, 1, 1], [], []>} : vector<2x16xf32>, vector<16x128xf32>, vector<2x128xf32> -> vector<2x128xf32>
    %c0_91 = arith.constant 0 : index
    %c0_92 = arith.constant 0 : index
    %277 = vector.load %arg12[%c0_91, %c0_92] : memref<2x128xf32, #tpu.memory_space<vmem>>, vector<2x128xf32>
    tpu.vector_store %arg12[%c0_91, %c0_92], %276 {strides = array<i32>} : memref<2x128xf32, #tpu.memory_space<vmem>>, vector<2x128xf32>,
    return
  }
}

</mosaic_0001>

<llo_original>
// kernel: tpu_custom_call.1
$region0: #{tpu_custom_call.1}
  #allocation0 [shape = 'u32[]', space=smem, size = 0x4, offset = 0x4, fixed_abs, tag = 'smem constant byte address 0x4 - core index']
  #allocation1 [shape = 'u32[144,128]{1,0:T(1,128)}', space=vmem, size = 0x12000, scoped, tag = 'internal scratch']
  %s0 = inlined_call_operand.vmem [shape: f32[16,32], index: 0, kind: input, shape index: {}]
  %s1 = inlined_call_operand.vmem [shape: bf16[112,16], index: 1, kind: input, shape index: {}]
  %s2 = inlined_call_operand.vmem [shape: bf16[16,112], index: 2, kind: input, shape index: {}]
  %s3 = inlined_call_operand.vmem [shape: f32[112,16], index: 3, kind: input, shape index: {}]
  %s4 = inlined_call_operand.vmem [shape: f32[2,112,32], index: 4, kind: input, shape index: {}]
  %s5 = inlined_call_operand.hbm [shape: f32[2,288,96], index: 5, kind: input, shape index: {}]
  %s6 = inlined_call_operand.vmem [shape: f32[32,32], index: 6, kind: input, shape index: {}]
  %s7 = inlined_call_operand.vmem [shape: f32[1,32], index: 7, kind: input, shape index: {}]
  %s8 = inlined_call_operand.vmem [shape: f32[32,128], index: 8, kind: input, shape index: {}]
  %s9 = inlined_call_operand.vmem [shape: f32[1,128], index: 9, kind: input, shape index: {}]
  %s10 = inlined_call_operand.vmem [shape: f32[2,16], index: 10, kind: input, shape index: {}]
  %s11 = inlined_call_operand.hbm [shape: f32[16,32], index: 11, kind: output, shape index: {0}]
  %s12 = inlined_call_operand.hbm [shape: f32[2,128], index: 12, kind: output, shape index: {1}]
  %13 = xla_tuple %s11, %s12
  %s14 = sld [smem:[#allocation0]]
  $region66: #{tpu_custom_call.1} parent=0
    _
  %s16 = ssub.s32 1, %s14
  %s17 = scalar_select 0, %s16, %s14
  $region1: #{tpu_custom_call.1} parent=0
    #allocation2 [shape = 'u8[294912]{0}', space=vmem, size = 0x48000, scoped, tag = 'input window, operand 5, single buffered']
    #allocation3 [shape = 's32[1]{0}', space=sflag, size = 0x4, scoped, tag = 'scoped memory for tpu_custom_call.1']
    #allocation4 [shape = 's32[1]{0}', space=sflag, size = 0x4, scoped, tag = 'scoped memory for tpu_custom_call.1']
    #allocation5 [shape = 'u8[8192]{0}', space=vmem, size = 0x2000, scoped, tag = 'output window, operand 0, single buffered']
    #allocation6 [shape = 'u8[1024]{0}', space=vmem, size = 0x400, scoped, tag = 'output window, operand 1, single buffered']
    #allocation7 [shape = 's32[1]{0}', space=sflag, size = 0x4, scoped, tag = 'scoped memory for tpu_custom_call.1']
    %18 = vsyncpa [#allocation3], 0
    %19 = vsyncpa [#allocation4], 0
    %20 = vsyncpa [#allocation7], 0
    // Predicated region
    $region2: #{tpu_custom_call.1} parent=1 // pred_check
      _
    $region3: #{tpu_custom_call.1} parent=1 // pred_check_branch
      %22 = sbr.rel (0) target = $region5
    $region4: #{tpu_custom_call.1} parent=1 // pred_region
      _
    $region5: #{tpu_custom_call.1} parent=1 // pred_fallthru
      _
    // Predicated region
    $region6: #{tpu_custom_call.1} parent=1 // pred_check
      _
    $region7: #{tpu_custom_call.1} parent=1 // pred_check_branch
      %24 = sbr.rel (0) target = $region9
    $region8: #{tpu_custom_call.1} parent=1 // pred_region
      _
    $region9: #{tpu_custom_call.1} parent=1 // pred_fallthru
      _
    // Predicated region
    $region10: #{tpu_custom_call.1} parent=1 // pred_check
      _
    $region11: #{tpu_custom_call.1} parent=1 // pred_check_branch
      %26 = sbr.rel (0) target = $region13
    $region12: #{tpu_custom_call.1} parent=1 // pred_region
      _
    $region13: #{tpu_custom_call.1} parent=1 // pred_fallthru
      _
    // Predicated region
    $region14: #{tpu_custom_call.1} parent=1 // pred_check
      _
    $region15: #{tpu_custom_call.1} parent=1 // pred_check_branch
      %28 = sbr.rel (0) target = $region17
    $region16: #{tpu_custom_call.1} parent=1 // pred_region
      _
    $region17: #{tpu_custom_call.1} parent=1 // pred_fallthru
      _
    // Predicated region
    $region18: #{tpu_custom_call.1} parent=1 // pred_check
      _
    $region19: #{tpu_custom_call.1} parent=1 // pred_check_branch
      %30 = sbr.rel (0) target = $region21
    $region20: #{tpu_custom_call.1} parent=1 // pred_region
      _
    $region21: #{tpu_custom_call.1} parent=1 // pred_fallthru
      _
    // Predicated region
    $region22: #{tpu_custom_call.1} parent=1 // pred_check
      _
    $region23: #{tpu_custom_call.1} parent=1 // pred_check_branch
      %32 = sbr.rel (0) target = $region25
    $region24: #{tpu_custom_call.1} parent=1 // pred_region
      %s34 = ssub.s32 9216, 9216
      %35 = vsyncadd [#allocation3], %s34
      %s36 = sshll.u32 [#allocation2], 4
      %s37 = int_to_ptr.vmem [resolvable:$true] %s36
      %42 = dma.hbm_to_vmem [thread:$0]  %s5, 9216, %s37, [#allocation3], 128, 128, 8
    $region25: #{tpu_custom_call.1} parent=1 // pred_fallthru
      _
    // Predicated region
    $region26: #{tpu_custom_call.1} parent=1 // pred_check
      _
    $region27: #{tpu_custom_call.1} parent=1 // pred_check_branch
      %44 = sbr.rel (0) target = $region29
    $region28: #{tpu_custom_call.1} parent=1 // pred_region
      _
    $region29: #{tpu_custom_call.1} parent=1 // pred_fallthru
      _
    // Predicated region
    $region30: #{tpu_custom_call.1} parent=1 // pred_check
      _
    $region31: #{tpu_custom_call.1} parent=1 // pred_check_branch
      %46 = sbr.rel (0) target = $region33
    $region32: #{tpu_custom_call.1} parent=1 // pred_region
      _
    $region33: #{tpu_custom_call.1} parent=1 // pred_fallthru
      _
    // Predicated region
    $region34: #{tpu_custom_call.1} parent=1 // pred_check
      _
    $region35: #{tpu_custom_call.1} parent=1 // pred_check_branch
      %48 = sbr.rel (0) target = $region37
    $region36: #{tpu_custom_call.1} parent=1 // pred_region
      _
    $region37: #{tpu_custom_call.1} parent=1 // pred_fallthru
      _
    // Predicated region
    $region38: #{tpu_custom_call.1} parent=1 // pred_check
      _
    $region39: #{tpu_custom_call.1} parent=1 // pred_check_branch
      %50 = sbr.rel (0) target = $region41
    $region40: #{tpu_custom_call.1} parent=1 // pred_region
      _
    $region41: #{tpu_custom_call.1} parent=1 // pred_fallthru
      _
    // Predicated region
    $region42: #{tpu_custom_call.1} parent=1 // pred_check
      _
    $region43: #{tpu_custom_call.1} parent=1 // pred_check_branch
      %52 = sbr.rel (0) target = $region45
    $region44: #{tpu_custom_call.1} parent=1 // pred_region
      _
    $region45: #{tpu_custom_call.1} parent=1 // pred_fallthru
      _
    // Predicated region
    $region46: #{tpu_custom_call.1} parent=1 // pred_check
      _
    $region47: #{tpu_custom_call.1} parent=1 // pred_check_branch
      %54 = sbr.rel (0) target = $region49
    $region48: #{tpu_custom_call.1} parent=1 // pred_region
      %55 = dma.done [#allocation3], 9216
    $region49: #{tpu_custom_call.1} parent=1 // pred_fallthru
      _
    %v57 = vld [vmem:[%s1] sm:$0xf]
    %v58 = vld [vmem:[%s1 + $0x4] sm:$0xf]
    %v59 = vld [vmem:[%s1 + $0x8] sm:$0xf]
    %v60 = vld [vmem:[%s1 + $0xc] sm:$0xf]
    %v61 = vld [vmem:[%s1 + $0x10] sm:$0xf]
    %v62 = vld [vmem:[%s1 + $0x14] sm:$0xf]
    %v63 = vld [vmem:[%s1 + $0x18] sm:$0xf]
    %v64 = vld [vmem:[%s1 + $0x1c] sm:$0xf]
    %v65 = vld [vmem:[%s1 + $0x20] sm:$0xf]
    %v66 = vld [vmem:[%s1 + $0x24] sm:$0xf]
    %v67 = vld [vmem:[%s1 + $0x28] sm:$0xf]
    %v68 = vld [vmem:[%s1 + $0x2c] sm:$0xf]
    %v69 = vld [vmem:[%s1 + $0x30] sm:$0xf]
    %v70 = vld [vmem:[%s1 + $0x34] sm:$0xf]
    %v71 = vld [vmem:[%s2] sm:$0xf]
    %v72 = vld [vmem:[%s2 + $0x4] sm:$0xf]
    %v73 = vld [vmem:[%s3] sm:$0xff]
    %v74 = vld [vmem:[%s3 + $0x8] sm:$0xff]
    %v75 = vld [vmem:[%s3 + $0x10] sm:$0xff]
    %v76 = vld [vmem:[%s3 + $0x18] sm:$0xff]
    %v77 = vld [vmem:[%s3 + $0x20] sm:$0xff]
    %v78 = vld [vmem:[%s3 + $0x28] sm:$0xff]
    %v79 = vld [vmem:[%s3 + $0x30] sm:$0xff]
    %v80 = vld [vmem:[%s3 + $0x38] sm:$0xff]
    %v81 = vld [vmem:[%s3 + $0x40] sm:$0xff]
    %v82 = vld [vmem:[%s3 + $0x48] sm:$0xff]
    %v83 = vld [vmem:[%s3 + $0x50] sm:$0xff]
    %v84 = vld [vmem:[%s3 + $0x58] sm:$0xff]
    %v85 = vld [vmem:[%s3 + $0x60] sm:$0xff]
    %v86 = vld [vmem:[%s3 + $0x68] sm:$0xff]
    %v87 = vld [vmem:[%s0] sm:$0xff]
    %v88 = vld [vmem:[%s0 + $0x8] sm:$0xff]
    %v89 = vld [vmem:[%s4] sm:$0xff]
    %v90 = vld [vmem:[%s4 + $0x8] sm:$0xff]
    %v91 = vld [vmem:[%s4 + $0x10] sm:$0xff]
    %v92 = vld [vmem:[%s4 + $0x18] sm:$0xff]
    %v93 = vld [vmem:[%s4 + $0x20] sm:$0x1]
    %v94 = vld [vmem:[%s4 + $0x28] sm:$0xff]
    %v95 = vld [vmem:[%s4 + $0x30] sm:$0xff]
    %v96 = vld [vmem:[%s4 + $0x38] sm:$0xff]
    %v97 = vld [vmem:[%s4 + $0x40] sm:$0xff]
    %v98 = vld [vmem:[%s4 + $0x48] sm:$0xff]
    %v99 = vld [vmem:[%s4 + $0x50] sm:$0xff]
    %v100 = vld [vmem:[%s4 + $0x58] sm:$0xff]
    %v101 = vld [vmem:[%s4 + $0x60] sm:$0xff]
    %v102 = vld [vmem:[%s4 + $0x68] sm:$0x1]
    %v103 = vld [vmem:[#allocation2] sm:$0xff]
    %v104 = vld [vmem:[#allocation2 + $0x8] sm:$0xff]
    %v105 = vld [vmem:[#allocation2 + $0x10] sm:$0xff]
    %v106 = vld [vmem:[#allocation2 + $0x18] sm:$0xff]
    %v107 = vld [vmem:[#allocation2 + $0x20] sm:$0x1]
    %v108 = vld [vmem:[#allocation2 + $0x28] sm:$0xff]
    %v109 = vld [vmem:[#allocation2 + $0x30] sm:$0xff]
    %v110 = vld [vmem:[#allocation2 + $0x38] sm:$0xff]
    %v111 = vld [vmem:[#allocation2 + $0x40] sm:$0xff]
    %v112 = vld [vmem:[#allocation2 + $0x48] sm:$0xff]
    %v113 = vld [vmem:[#allocation2 + $0x50] sm:$0xff]
    %v114 = vld [vmem:[#allocation2 + $0x58] sm:$0xff]
    %v115 = vld [vmem:[#allocation2 + $0x60] sm:$0xff]
    %v116 = vld [vmem:[#allocation2 + $0x68] sm:$0xff]
    %v117 = vld [vmem:[#allocation2 + $0x70] sm:$0xff]
    %v118 = vld [vmem:[#allocation2 + $0x78] sm:$0xff]
    %v119 = vld [vmem:[#allocation2 + $0x80] sm:$0xff]
    %v120 = vld [vmem:[#allocation2 + $0x88] sm:$0xff]
    %v121 = vld [vmem:[#allocation2 + $0x90] sm:$0xff]
    %v122 = vld [vmem:[#allocation2 + $0x98] sm:$0xff]
    %v123 = vld [vmem:[#allocation2 + $0xa0] sm:$0xff]
    %v124 = vld [vmem:[#allocation2 + $0xa8] sm:$0xff]
    %v125 = vld [vmem:[#allocation2 + $0xb0] sm:$0xff]
    %v126 = vld [vmem:[#allocation2 + $0xb8] sm:$0xff]
    %v127 = vld [vmem:[#allocation2 + $0xc0] sm:$0xff]
    %v128 = vld [vmem:[#allocation2 + $0xc8] sm:$0xff]
    %v129 = vld [vmem:[#allocation2 + $0xd0] sm:$0xff]
    %v130 = vld [vmem:[#allocation2 + $0xd8] sm:$0xff]
    %v131 = vld [vmem:[#allocation2 + $0xe0] sm:$0xff]
    %v132 = vld [vmem:[#allocation2 + $0xe8] sm:$0xff]
    %v133 = vld [vmem:[#allocation2 + $0xf0] sm:$0xff]
    %v134 = vld [vmem:[#allocation2 + $0xf8] sm:$0xff]
    %v135 = vld [vmem:[#allocation2 + $0x100] sm:$0xff]
    %v136 = vld [vmem:[#allocation2 + $0x108] sm:$0xff]
    %v137 = vld [vmem:[#allocation2 + $0x110] sm:$0xff]
    %v138 = vld [vmem:[#allocation2 + $0x118] sm:$0x1]
    %v139 = vlaneseq
    %v140 = vshrl.u32 %v139, 7
    %v141 = vsub.s32 0, %v140
    %v142 = vrot.slane %v93, %v141
    %vm143 = vcmask 261120
    %v145 = vsel %vm143, %v87, 0
    %v148 = vsel %vm143, %v88, 0
    %150 = vmatprep.subr.mxu0 0.0
    %151 = vmatpush1.msra.mxu0 %v89
    %152 = vmatprep.subr.mxu0 0.0
    %153 = vmatpush1.msra.mxu0 %v90
    %154 = vmatprep.subr.mxu0 0.0
    %155 = vmatpush1.msra.mxu0 %v91
    %156 = vmatprep.subr.mxu0 0.0
    %157 = vmatpush1.msra.mxu0 %v92
    %158 = vmatprep.subr.mxu0 0.0
    %159 = vmatpush1.msra.mxu0 0.0
    %160 = vmatprep.subr.mxu0 0.0
    %161 = vmatpush1.msra.mxu0 0.0
    %162 = vmatprep.subr.mxu0 0.0
    %163 = vmatpush1.msra.mxu0 0.0
    %164 = vmatprep.subr.mxu0 0.0
    %165 = vmatpush1.msra.mxu0 0.0
    %166 = vmatprep.subr.mxu0 0.0
    %167 = vmatpush1.msra.mxu0 0.0
    %168 = vmatprep.subr.mxu0 0.0
    %169 = vmatpush1.msra.mxu0 0.0
    %170 = vmatprep.subr.mxu0 0.0
    %171 = vmatpush1.msra.mxu0 0.0
    %172 = vmatprep.subr.mxu0 0.0
    %173 = vmatpush1.msra.mxu0 0.0
    %174 = vmatprep.subr.mxu0 0.0
    %175 = vmatpush1.msra.mxu0 0.0
    %176 = vmatprep.subr.mxu0 0.0
    %177 = vmatpush1.msra.mxu0 0.0
    %178 = vmatprep.subr.mxu0 0.0
    %179 = vmatpush1.msra.mxu0 0.0
    %180 = vmatprep.subr.mxu0 0.0
    %181 = vmatpush1.msra.mxu0 0.0
    %182 = vmatprep.subr.mxu0 0.0
    %183 = vmatpush1.msra.mxu0 0.0
    %184 = vmatprep.subr.mxu0 0.0
    %185 = vmatpush1.msra.mxu0 0.0
    %186 = vmatprep.subr.mxu0 0.0
    %187 = vmatpush1.msra.mxu0 0.0
    %188 = vmatprep.subr.mxu0 0.0
    %189 = vmatpush1.msra.mxu0 0.0
    %190 = vmatprep.subr.mxu0 0.0
    %191 = vmatpush1.msra.mxu0 0.0
    %192 = vmatprep.subr.mxu0 0.0
    %193 = vmatpush1.msra.mxu0 0.0
    %194 = vmatprep.subr.mxu0 0.0
    %195 = vmatpush1.msra.mxu0 0.0
    %196 = vmatprep.subr.mxu0 0.0
    %197 = vmatpush1.msra.mxu0 0.0
    %198 = vmatprep.subr.mxu0 0.0
    %199 = vmatpush1.msra.mxu0 0.0
    %200 = vmatprep.subr.mxu0 0.0
    %201 = vmatpush1.msra.mxu0 0.0
    %202 = vmatprep.subr.mxu0 0.0
    %203 = vmatpush1.msra.mxu0 0.0
    %204 = vmatprep.subr.mxu0 0.0
    %205 = vmatpush1.msra.mxu0 0.0
    %206 = vmatprep.subr.mxu0 0.0
    %207 = vmatpush1.msra.mxu0 0.0
    %208 = vmatprep.subr.mxu0 0.0
    %209 = vmatpush1.msra.mxu0 0.0
    %210 = vmatprep.subr.mxu0 0.0
    %211 = vmatpush1.msra.mxu0 0.0
    %212 = vmatprep.subr.mxu0 0.0
    %213 = vmatpush1.msra.mxu0 0.0
    %214 = vmatprep.mubr.f32.mxu0 0.0
    %215 = vmatmul.mubr.f32.gmra.mrb[0].mxu0 %v145
    %v216 = vpop.f32.mrb[0].mxu0
    %v217 = vadd.f32 %v142, %v216
    %v218 = vpop.f32.mrb[0].mxu0
    %219 = vmatprep.mubr.f32.mxu0 0.0
    %220 = vmatmul.mubr.f32.gmra.mrb[0].mxu0 %v148
    %v221 = vpop.f32.mrb[0].mxu0
    %v222 = vadd.f32 %v142, %v221
    %v223 = vpop.f32.mrb[0].mxu0
    %224 = vdwg.mxu0
    %v225 = vxor.u32 %v217, 2147483648
    %v226 = vxor.u32 %v222, 2147483648
    %v227 = vmul.f32 %v225, 1.442695
    %v228 = vpow.pop %v227
    %v229 = vmul.f32 %v226, 1.442695
    %v230 = vpow.pop %v229
    %v231 = vadd.f32 %v228, 1.0
    %v232 = vadd.f32 %v230, 1.0
    %v233 = vrcp.pop %v231
    %v234 = vmul.f32 1.0, %v233
    %v235 = vrcp.pop %v232
    %v236 = vmul.f32 1.0, %v235
    %v237 = vmul.f32 %v217, %v234
    %v238 = vmul.f32 %v222, %v236
    %v239 = vlaneseq
    %v240 = vshrl.u32 %v239, 7
    %v241 = vsub.s32 0, %v240
    %v242 = vrot.slane %v107, %v241
    %v244 = vsel %vm143, %v237, 0
    %v247 = vsel %vm143, %v238, 0
    %249 = vmatprep.subr.mxu0 0.0
    %250 = vmatpush1.msra.mxu0 %v103
    %251 = vmatprep.subr.mxu0 0.0
    %252 = vmatpush1.msra.mxu0 %v104
    %253 = vmatprep.subr.mxu0 0.0
    %254 = vmatpush1.msra.mxu0 %v105
    %255 = vmatprep.subr.mxu0 0.0
    %256 = vmatpush1.msra.mxu0 %v106
    %257 = vmatprep.subr.mxu0 0.0
    %258 = vmatpush1.msra.mxu0 0.0
    %259 = vmatprep.subr.mxu0 0.0
    %260 = vmatpush1.msra.mxu0 0.0
    %261 = vmatprep.subr.mxu0 0.0
    %262 = vmatpush1.msra.mxu0 0.0
    %263 = vmatprep.subr.mxu0 0.0
    %264 = vmatpush1.msra.mxu0 0.0
    %265 = vmatprep.subr.mxu0 0.0
    %266 = vmatpush1.msra.mxu0 0.0
    %267 = vmatprep.subr.mxu0 0.0
    %268 = vmatpush1.msra.mxu0 0.0
    %269 = vmatprep.subr.mxu0 0.0
    %270 = vmatpush1.msra.mxu0 0.0
    %271 = vmatprep.subr.mxu0 0.0
    %272 = vmatpush1.msra.mxu0 0.0
    %273 = vmatprep.subr.mxu0 0.0
    %274 = vmatpush1.msra.mxu0 0.0
    %275 = vmatprep.subr.mxu0 0.0
    %276 = vmatpush1.msra.mxu0 0.0
    %277 = vmatprep.subr.mxu0 0.0
    %278 = vmatpush1.msra.mxu0 0.0
    %279 = vmatprep.subr.mxu0 0.0
    %280 = vmatpush1.msra.mxu0 0.0
    %281 = vmatprep.subr.mxu0 0.0
    %282 = vmatpush1.msra.mxu0 0.0
    %283 = vmatprep.subr.mxu0 0.0
    %284 = vmatpush1.msra.mxu0 0.0
    %285 = vmatprep.subr.mxu0 0.0
    %286 = vmatpush1.msra.mxu0 0.0
    %287 = vmatprep.subr.mxu0 0.0
    %288 = vmatpush1.msra.mxu0 0.0
    %289 = vmatprep.subr.mxu0 0.0
    %290 = vmatpush1.msra.mxu0 0.0
    %291 = vmatprep.subr.mxu0 0.0
    %292 = vmatpush1.msra.mxu0 0.0
    %293 = vmatprep.subr.mxu0 0.0
    %294 = vmatpush1.msra.mxu0 0.0
    %295 = vmatprep.subr.mxu0 0.0
    %296 = vmatpush1.msra.mxu0 0.0
    %297 = vmatprep.subr.mxu0 0.0
    %298 = vmatpush1.msra.mxu0 0.0
    %299 = vmatprep.subr.mxu0 0.0
    %300 = vmatpush1.msra.mxu0 0.0
    %301 = vmatprep.subr.mxu0 0.0
    %302 = vmatpush1.msra.mxu0 0.0
    %303 = vmatprep.subr.mxu0 0.0
    %304 = vmatpush1.msra.mxu0 0.0
    %305 = vmatprep.subr.mxu0 0.0
    %306 = vmatpush1.msra.mxu0 0.0
    %307 = vmatprep.subr.mxu0 0.0
    %308 = vmatpush1.msra.mxu0 0.0
    %309 = vmatprep.subr.mxu0 0.0
    %310 = vmatpush1.msra.mxu0 0.0
    %311 = vmatprep.subr.mxu0 0.0
    %312 = vmatpush1.msra.mxu0 0.0
    %313 = vmatprep.mubr.f32.mxu0 0.0
    %314 = vmatmul.mubr.f32.gmra.mrb[0].mxu0 %v244
    %v315 = vpop.f32.mrb[0].mxu0
    %v316 = vadd.f32 %v242, %v315
    %v317 = vpop.f32.mrb[0].mxu0
    %318 = vmatprep.mubr.f32.mxu0 0.0
    %319 = vmatmul.mubr.f32.gmra.mrb[0].mxu0 %v247
    %v320 = vpop.f32.mrb[0].mxu0
    %v321 = vadd.f32 %v242, %v320
    %v322 = vpop.f32.mrb[0].mxu0
    %323 = vdwg.mxu0
    %v324 = vpack.c.bf16 %v321, %v316
    %v339 = vunpack.c.l.b16 %v57
    %v340 = vunpack.c.l.b16 %v58
    %v341 = vunpack.c.l.b16 %v59
    %v342 = vunpack.c.l.b16 %v60
    %v343 = vunpack.c.l.b16 %v61
    %v344 = vunpack.c.l.b16 %v62
    %v345 = vunpack.c.l.b16 %v63
    %v346 = vunpack.c.l.b16 %v64
    %v347 = vunpack.c.l.b16 %v65
    %v348 = vunpack.c.l.b16 %v66
    %v349 = vunpack.c.l.b16 %v67
    %v350 = vunpack.c.l.b16 %v68
    %v351 = vunpack.c.l.b16 %v69
    %v352 = vunpack.c.l.b16 %v70
    %v353 = vpack.c.b16 %v340, %v339
    %v354 = vpack.c.b16 %v342, %v341
    %v355 = vpack.c.b16 %v344, %v343
    %v356 = vpack.c.b16 %v346, %v345
    %v357 = vpack.c.b16 %v348, %v347
    %v358 = vpack.c.b16 %v350, %v349
    %v359 = vpack.c.b16 %v352, %v351
    %vm360 = vcmask 130048
    %v362 = vsel %vm360, %v353, 0
    %v365 = vsel %vm360, %v354, 0
    %v368 = vsel %vm360, %v355, 0
    %v371 = vsel %vm360, %v356, 0
    %v374 = vsel %vm360, %v357, 0
    %v377 = vsel %vm360, %v358, 0
    %v380 = vsel %vm360, %v359, 0
    %382 = vmatprep.subr.bf16.mxu0 0
    %383 = vmatpush1.bf16.msra.mxu0 %v324
    %384 = vmatprep.subr.bf16.mxu0 0
    %385 = vmatpush1.bf16.msra.mxu0 0
    %386 = vmatprep.subr.bf16.mxu0 0
    %387 = vmatpush1.bf16.msra.mxu0 0
    %388 = vmatprep.subr.bf16.mxu0 0
    %389 = vmatpush1.bf16.msra.mxu0 0
    %390 = vmatprep.subr.bf16.mxu0 0
    %391 = vmatpush1.bf16.msra.mxu0 0
    %392 = vmatprep.subr.bf16.mxu0 0
    %393 = vmatpush1.bf16.msra.mxu0 0
    %394 = vmatprep.subr.bf16.mxu0 0
    %395 = vmatpush1.bf16.msra.mxu0 0
    %396 = vmatprep.subr.bf16.mxu0 0
    %397 = vmatpush1.bf16.msra.mxu0 0
    %398 = vmatprep.subr.bf16.mxu0 0
    %399 = vmatpush1.bf16.msra.mxu0 0
    %400 = vmatprep.subr.bf16.mxu0 0
    %401 = vmatpush1.bf16.msra.mxu0 0
    %402 = vmatprep.subr.bf16.mxu0 0
    %403 = vmatpush1.bf16.msra.mxu0 0
    %404 = vmatprep.subr.bf16.mxu0 0
    %405 = vmatpush1.bf16.msra.mxu0 0
    %406 = vmatprep.subr.bf16.mxu0 0
    %407 = vmatpush1.bf16.msra.mxu0 0
    %408 = vmatprep.subr.bf16.mxu0 0
    %409 = vmatpush1.bf16.msra.mxu0 0
    %410 = vmatprep.subr.bf16.mxu0 0
    %411 = vmatpush1.bf16.msra.mxu0 0
    %412 = vmatprep.subr.bf16.mxu0 0
    %413 = vmatpush1.bf16.msra.mxu0 0
    %414 = vmatprep.mubr.bf16.mxu0 0
    %415 = vmatmul.mubr.bf16.gmra.mrb[0].mxu0 %v362
    %v416 = vpop.f32.mrb[0].mxu0
    %v417 = vadd.f32 0.0, %v416
    %v418 = vpop.f32.mrb[0].mxu0
    %v419 = vpop.f32.mrb[0].mxu0
    %v420 = vadd.f32 0.0, %v419
    %v421 = vpop.f32.mrb[0].mxu0
    %422 = vmatprep.mubr.bf16.mxu0 0
    %423 = vmatmul.mubr.bf16.gmra.mrb[0].mxu0 %v365
    %v424 = vpop.f32.mrb[0].mxu0
    %v425 = vadd.f32 0.0, %v424
    %v426 = vpop.f32.mrb[0].mxu0
    %v427 = vpop.f32.mrb[0].mxu0
    %v428 = vadd.f32 0.0, %v427
    %v429 = vpop.f32.mrb[0].mxu0
    %430 = vmatprep.mubr.bf16.mxu0 0
    %431 = vmatmul.mubr.bf16.gmra.mrb[0].mxu0 %v368
    %v432 = vpop.f32.mrb[0].mxu0
    %v433 = vadd.f32 0.0, %v432
    %v434 = vpop.f32.mrb[0].mxu0
    %v435 = vpop.f32.mrb[0].mxu0
    %v436 = vadd.f32 0.0, %v435
    %v437 = vpop.f32.mrb[0].mxu0
    %438 = vmatprep.mubr.bf16.mxu0 0
    %439 = vmatmul.mubr.bf16.gmra.mrb[0].mxu0 %v371
    %v440 = vpop.f32.mrb[0].mxu0
    %v441 = vadd.f32 0.0, %v440
    %v442 = vpop.f32.mrb[0].mxu0
    %v443 = vpop.f32.mrb[0].mxu0
    %v444 = vadd.f32 0.0, %v443
    %v445 = vpop.f32.mrb[0].mxu0
    %446 = vmatprep.mubr.bf16.mxu0 0
    %447 = vmatmul.mubr.bf16.gmra.mrb[0].mxu0 %v374
    %v448 = vpop.f32.mrb[0].mxu0
    %v449 = vadd.f32 0.0, %v448
    %v450 = vpop.f32.mrb[0].mxu0
    %v451 = vpop.f32.mrb[0].mxu0
    %v452 = vadd.f32 0.0, %v451
    %v453 = vpop.f32.mrb[0].mxu0
    %454 = vmatprep.mubr.bf16.mxu0 0
    %455 = vmatmul.mubr.bf16.gmra.mrb[0].mxu0 %v377
    %v456 = vpop.f32.mrb[0].mxu0
    %v457 = vadd.f32 0.0, %v456
    %v458 = vpop.f32.mrb[0].mxu0
    %v459 = vpop.f32.mrb[0].mxu0
    %v460 = vadd.f32 0.0, %v459
    %v461 = vpop.f32.mrb[0].mxu0
    %462 = vmatprep.mubr.bf16.mxu0 0
    %463 = vmatmul.mubr.bf16.gmra.mrb[0].mxu0 %v380
    %v464 = vpop.f32.mrb[0].mxu0
    %v465 = vadd.f32 0.0, %v464
    %v466 = vpop.f32.mrb[0].mxu0
    %v467 = vpop.f32.mrb[0].mxu0
    %v468 = vadd.f32 0.0, %v467
    %v469 = vpop.f32.mrb[0].mxu0
    %470 = vdwg.mxu0
    %471 = vmatprep.subr.bf16.mxu0 0
    %472 = vmatpush1.bf16.msra.mxu0 0
    %473 = vmatprep.subr.bf16.mxu0 0
    %474 = vmatpush1.bf16.msra.mxu0 0
    %475 = vmatprep.subr.bf16.mxu0 0
    %476 = vmatpush1.bf16.msra.mxu0 0
    %477 = vmatprep.subr.bf16.mxu0 0
    %478 = vmatpush1.bf16.msra.mxu0 0
    %479 = vmatprep.subr.bf16.mxu0 0
    %480 = vmatpush1.bf16.msra.mxu0 0
    %481 = vmatprep.subr.bf16.mxu0 0
    %482 = vmatpush1.bf16.msra.mxu0 0
    %483 = vmatprep.subr.bf16.mxu0 0
    %484 = vmatpush1.bf16.msra.mxu0 0
    %485 = vmatprep.subr.bf16.mxu0 0
    %486 = vmatpush1.bf16.msra.mxu0 0
    %487 = vmatprep.subr.bf16.mxu0 0
    %488 = vmatpush1.bf16.msra.mxu0 0
    %489 = vmatprep.subr.bf16.mxu0 0
    %490 = vmatpush1.bf16.msra.mxu0 0
    %491 = vmatprep.subr.bf16.mxu0 0
    %492 = vmatpush1.bf16.msra.mxu0 0
    %493 = vmatprep.subr.bf16.mxu0 0
    %494 = vmatpush1.bf16.msra.mxu0 0
    %495 = vmatprep.subr.bf16.mxu0 0
    %496 = vmatpush1.bf16.msra.mxu0 0
    %497 = vmatprep.subr.bf16.mxu0 0
    %498 = vmatpush1.bf16.msra.mxu0 0
    %499 = vmatprep.subr.bf16.mxu0 0
    %500 = vmatpush1.bf16.msra.mxu0 0
    %501 = vmatprep.subr.bf16.mxu0 0
    %502 = vmatpush1.bf16.msra.mxu0 0
    %503 = vmatprep.mubr.bf16.mxu0 0
    %504 = vmatmul.mubr.bf16.gmra.mrb[0].mxu0 %v362
    %v505 = vpop.f32.mrb[0].mxu0
    %v506 = vadd.f32 0.0, %v505
    %v507 = vpop.f32.mrb[0].mxu0
    %v508 = vpop.f32.mrb[0].mxu0
    %v509 = vadd.f32 0.0, %v508
    %v510 = vpop.f32.mrb[0].mxu0
    %511 = vmatprep.mubr.bf16.mxu0 0
    %512 = vmatmul.mubr.bf16.gmra.mrb[0].mxu0 %v365
    %v513 = vpop.f32.mrb[0].mxu0
    %v514 = vadd.f32 0.0, %v513
    %v515 = vpop.f32.mrb[0].mxu0
    %v516 = vpop.f32.mrb[0].mxu0
    %v517 = vadd.f32 0.0, %v516
    %v518 = vpop.f32.mrb[0].mxu0
    %519 = vmatprep.mubr.bf16.mxu0 0
    %520 = vmatmul.mubr.bf16.gmra.mrb[0].mxu0 %v368
    %v521 = vpop.f32.mrb[0].mxu0
    %v522 = vadd.f32 0.0, %v521
    %v523 = vpop.f32.mrb[0].mxu0
    %v524 = vpop.f32.mrb[0].mxu0
    %v525 = vadd.f32 0.0, %v524
    %v526 = vpop.f32.mrb[0].mxu0
    %527 = vmatprep.mubr.bf16.mxu0 0
    %528 = vmatmul.mubr.bf16.gmra.mrb[0].mxu0 %v371
    %v529 = vpop.f32.mrb[0].mxu0
    %v530 = vadd.f32 0.0, %v529
    %v531 = vpop.f32.mrb[0].mxu0
    %v532 = vpop.f32.mrb[0].mxu0
    %v533 = vadd.f32 0.0, %v532
    %v534 = vpop.f32.mrb[0].mxu0
    %535 = vmatprep.mubr.bf16.mxu0 0
    %536 = vmatmul.mubr.bf16.gmra.mrb[0].mxu0 %v374
    %v537 = vpop.f32.mrb[0].mxu0
    %v538 = vadd.f32 0.0, %v537
    %v539 = vpop.f32.mrb[0].mxu0
    %v540 = vpop.f32.mrb[0].mxu0
    %v541 = vadd.f32 0.0, %v540
    %v542 = vpop.f32.mrb[0].mxu0
    %543 = vmatprep.mubr.bf16.mxu0 0
    %544 = vmatmul.mubr.bf16.gmra.mrb[0].mxu0 %v377
    %v545 = vpop.f32.mrb[0].mxu0
    %v546 = vadd.f32 0.0, %v545
    %v547 = vpop.f32.mrb[0].mxu0
    %v548 = vpop.f32.mrb[0].mxu0
    %v549 = vadd.f32 0.0, %v548
    %v550 = vpop.f32.mrb[0].mxu0
    %551 = vmatprep.mubr.bf16.mxu0 0
    %552 = vmatmul.mubr.bf16.gmra.mrb[0].mxu0 %v380
    %v553 = vpop.f32.mrb[0].mxu0
    %v554 = vadd.f32 0.0, %v553
    %v555 = vpop.f32.mrb[0].mxu0
    %v556 = vpop.f32.mrb[0].mxu0
    %v557 = vadd.f32 0.0, %v556
    %v558 = vpop.f32.mrb[0].mxu0
    %559 = vdwg.mxu0
    %v561 = vsel %vm360, %v73, 0
    %v564 = vsel %vm360, %v74, 0
    %v567 = vsel %vm360, %v75, 0
    %v570 = vsel %vm360, %v76, 0
    %v573 = vsel %vm360, %v77, 0
    %v576 = vsel %vm360, %v78, 0
    %v579 = vsel %vm360, %v79, 0
    %v582 = vsel %vm360, %v80, 0
    %v585 = vsel %vm360, %v81, 0
    %v588 = vsel %vm360, %v82, 0
    %v591 = vsel %vm360, %v83, 0
    %v594 = vsel %vm360, %v84, 0
    %v597 = vsel %vm360, %v85, 0
    %v600 = vsel %vm360, %v86, 0
    %602 = vmatprep.subr.mxu0 0.0
    %603 = vmatpush1.msra.mxu0 %v108
    %604 = vmatprep.subr.mxu0 0.0
    %605 = vmatpush1.msra.mxu0 %v109
    %606 = vmatprep.subr.mxu0 0.0
    %607 = vmatpush1.msra.mxu0 0.0
    %608 = vmatprep.subr.mxu0 0.0
    %609 = vmatpush1.msra.mxu0 0.0
    %610 = vmatprep.subr.mxu0 0.0
    %611 = vmatpush1.msra.mxu0 0.0
    %612 = vmatprep.subr.mxu0 0.0
    %613 = vmatpush1.msra.mxu0 0.0
    %614 = vmatprep.subr.mxu0 0.0
    %615 = vmatpush1.msra.mxu0 0.0
    %616 = vmatprep.subr.mxu0 0.0
    %617 = vmatpush1.msra.mxu0 0.0
    %618 = vmatprep.subr.mxu0 0.0
    %619 = vmatpush1.msra.mxu0 0.0
    %620 = vmatprep.subr.mxu0 0.0
    %621 = vmatpush1.msra.mxu0 0.0
    %622 = vmatprep.subr.mxu0 0.0
    %623 = vmatpush1.msra.mxu0 0.0
    %624 = vmatprep.subr.mxu0 0.0
    %625 = vmatpush1.msra.mxu0 0.0
    %626 = vmatprep.subr.mxu0 0.0
    %627 = vmatpush1.msra.mxu0 0.0
    %628 = vmatprep.subr.mxu0 0.0
    %629 = vmatpush1.msra.mxu0 0.0
    %630 = vmatprep.subr.mxu0 0.0
    %631 = vmatpush1.msra.mxu0 0.0
    %632 = vmatprep.subr.mxu0 0.0
    %633 = vmatpush1.msra.mxu0 0.0
    %634 = vmatprep.subr.mxu0 0.0
    %635 = vmatpush1.msra.mxu0 0.0
    %636 = vmatprep.subr.mxu0 0.0
    %637 = vmatpush1.msra.mxu0 0.0
    %638 = vmatprep.subr.mxu0 0.0
    %639 = vmatpush1.msra.mxu0 0.0
    %640 = vmatprep.subr.mxu0 0.0
    %641 = vmatpush1.msra.mxu0 0.0
    %642 = vmatprep.subr.mxu0 0.0
    %643 = vmatpush1.msra.mxu0 0.0
    %644 = vmatprep.subr.mxu0 0.0
    %645 = vmatpush1.msra.mxu0 0.0
    %646 = vmatprep.subr.mxu0 0.0
    %647 = vmatpush1.msra.mxu0 0.0
    %648 = vmatprep.subr.mxu0 0.0
    %649 = vmatpush1.msra.mxu0 0.0
    %650 = vmatprep.subr.mxu0 0.0
    %651 = vmatpush1.msra.mxu0 0.0
    %652 = vmatprep.subr.mxu0 0.0
    %653 = vmatpush1.msra.mxu0 0.0
    %654 = vmatprep.subr.mxu0 0.0
    %655 = vmatpush1.msra.mxu0 0.0
    %656 = vmatprep.subr.mxu0 0.0
    %657 = vmatpush1.msra.mxu0 0.0
    %658 = vmatprep.subr.mxu0 0.0
    %659 = vmatpush1.msra.mxu0 0.0
    %660 = vmatprep.subr.mxu0 0.0
    %661 = vmatpush1.msra.mxu0 0.0
    %662 = vmatprep.subr.mxu0 0.0
    %663 = vmatpush1.msra.mxu0 0.0
    %664 = vmatprep.subr.mxu0 0.0
    %665 = vmatpush1.msra.mxu0 0.0
    %666 = vmatprep.mubr.f32.mxu0 0.0
    %667 = vmatmul.mubr.f32.gmra.mrb[0].mxu0 %v561
    %v668 = vpop.f32.mrb[0].mxu0
    %v669 = vadd.f32 0.0, %v668
    %v670 = vpop.f32.mrb[0].mxu0
    %671 = vmatprep.mubr.f32.mxu0 0.0
    %672 = vmatmul.mubr.f32.gmra.mrb[0].mxu0 %v564
    %v673 = vpop.f32.mrb[0].mxu0
    %v674 = vadd.f32 0.0, %v673
    %v675 = vpop.f32.mrb[0].mxu0
    %676 = vmatprep.mubr.f32.mxu0 0.0
    %677 = vmatmul.mubr.f32.gmra.mrb[0].mxu0 %v567
    %v678 = vpop.f32.mrb[0].mxu0
    %v679 = vadd.f32 0.0, %v678
    %v680 = vpop.f32.mrb[0].mxu0
    %681 = vmatprep.mubr.f32.mxu0 0.0
    %682 = vmatmul.mubr.f32.gmra.mrb[0].mxu0 %v570
    %v683 = vpop.f32.mrb[0].mxu0
    %v684 = vadd.f32 0.0, %v683
    %v685 = vpop.f32.mrb[0].mxu0
    %686 = vmatprep.mubr.f32.mxu0 0.0
    %687 = vmatmul.mubr.f32.gmra.mrb[0].mxu0 %v573
    %v688 = vpop.f32.mrb[0].mxu0
    %v689 = vadd.f32 0.0, %v688
    %v690 = vpop.f32.mrb[0].mxu0
    %691 = vmatprep.mubr.f32.mxu0 0.0
    %692 = vmatmul.mubr.f32.gmra.mrb[0].mxu0 %v576
    %v693 = vpop.f32.mrb[0].mxu0
    %v694 = vadd.f32 0.0, %v693
    %v695 = vpop.f32.mrb[0].mxu0
    %696 = vmatprep.mubr.f32.mxu0 0.0
    %697 = vmatmul.mubr.f32.gmra.mrb[0].mxu0 %v579
    %v698 = vpop.f32.mrb[0].mxu0
    %v699 = vadd.f32 0.0, %v698
    %v700 = vpop.f32.mrb[0].mxu0
    %701 = vmatprep.mubr.f32.mxu0 0.0
    %702 = vmatmul.mubr.f32.gmra.mrb[0].mxu0 %v582
    %v703 = vpop.f32.mrb[0].mxu0
    %v704 = vadd.f32 0.0, %v703
    %v705 = vpop.f32.mrb[0].mxu0
    %706 = vmatprep.mubr.f32.mxu0 0.0
    %707 = vmatmul.mubr.f32.gmra.mrb[0].mxu0 %v585
    %v708 = vpop.f32.mrb[0].mxu0
    %v709 = vadd.f32 0.0, %v708
    %v710 = vpop.f32.mrb[0].mxu0
    %711 = vmatprep.mubr.f32.mxu0 0.0
    %712 = vmatmul.mubr.f32.gmra.mrb[0].mxu0 %v588
    %v713 = vpop.f32.mrb[0].mxu0
    %v714 = vadd.f32 0.0, %v713
    %v715 = vpop.f32.mrb[0].mxu0
    %716 = vmatprep.mubr.f32.mxu0 0.0
    %717 = vmatmul.mubr.f32.gmra.mrb[0].mxu0 %v591
    %v718 = vpop.f32.mrb[0].mxu0
    %v719 = vadd.f32 0.0, %v718
    %v720 = vpop.f32.mrb[0].mxu0
    %721 = vmatprep.mubr.f32.mxu0 0.0
    %722 = vmatmul.mubr.f32.gmra.mrb[0].mxu0 %v594
    %v723 = vpop.f32.mrb[0].mxu0
    %v724 = vadd.f32 0.0, %v723
    %v725 = vpop.f32.mrb[0].mxu0
    %726 = vmatprep.mubr.f32.mxu0 0.0
    %727 = vmatmul.mubr.f32.gmra.mrb[0].mxu0 %v597
    %v728 = vpop.f32.mrb[0].mxu0
    %v729 = vadd.f32 0.0, %v728
    %v730 = vpop.f32.mrb[0].mxu0
    %731 = vmatprep.mubr.f32.mxu0 0.0
    %732 = vmatmul.mubr.f32.gmra.mrb[0].mxu0 %v600
    %v733 = vpop.f32.mrb[0].mxu0
    %v734 = vadd.f32 0.0, %v733
    %v735 = vpop.f32.mrb[0].mxu0
    %736 = vdwg.mxu0
    %v737 = vmul.f32 %v417, %v669
    %v738 = vmul.f32 %v420, %v674
    %v739 = vmul.f32 %v425, %v679
    %v740 = vmul.f32 %v428, %v684
    %v741 = vmul.f32 %v433, %v689
    %v742 = vmul.f32 %v436, %v694
    %v743 = vmul.f32 %v441, %v699
    %v744 = vmul.f32 %v444, %v704
    %v745 = vmul.f32 %v449, %v709
    %v746 = vmul.f32 %v452, %v714
    %v747 = vmul.f32 %v457, %v719
    %v748 = vmul.f32 %v460, %v724
    %v749 = vmul.f32 %v465, %v729
    %v750 = vmul.f32 %v468, %v734
    %751 = vset.pattern.permute.xlu0 9
    %752 = vperm.xlu0 %751, %v73
    %v753 = vpop.permute.xlu0 %752
    %755 = vset.pattern.permute.xlu0 9
    %756 = vperm.xlu0 %755, %v74
    %v757 = vpop.permute.xlu0 %756
    %759 = vset.pattern.permute.xlu0 9
    %760 = vperm.xlu0 %759, %v75
    %v761 = vpop.permute.xlu0 %760
    %763 = vset.pattern.permute.xlu0 9
    %764 = vperm.xlu0 %763, %v76
    %v765 = vpop.permute.xlu0 %764
    %767 = vset.pattern.permute.xlu0 9
    %768 = vperm.xlu0 %767, %v77
    %v769 = vpop.permute.xlu0 %768
    %771 = vset.pattern.permute.xlu0 9
    %772 = vperm.xlu0 %771, %v78
    %v773 = vpop.permute.xlu0 %772
    %775 = vset.pattern.permute.xlu0 9
    %776 = vperm.xlu0 %775, %v79
    %v777 = vpop.permute.xlu0 %776
    %779 = vset.pattern.permute.xlu0 9
    %780 = vperm.xlu0 %779, %v80
    %v781 = vpop.permute.xlu0 %780
    %783 = vset.pattern.permute.xlu0 9
    %784 = vperm.xlu0 %783, %v81
    %v785 = vpop.permute.xlu0 %784
    %787 = vset.pattern.permute.xlu0 9
    %788 = vperm.xlu0 %787, %v82
    %v789 = vpop.permute.xlu0 %788
    %791 = vset.pattern.permute.xlu0 9
    %792 = vperm.xlu0 %791, %v83
    %v793 = vpop.permute.xlu0 %792
    %795 = vset.pattern.permute.xlu0 9
    %796 = vperm.xlu0 %795, %v84
    %v797 = vpop.permute.xlu0 %796
    %799 = vset.pattern.permute.xlu0 9
    %800 = vperm.xlu0 %799, %v85
    %v801 = vpop.permute.xlu0 %800
    %803 = vset.pattern.permute.xlu0 9
    %804 = vperm.xlu0 %803, %v86
    %v805 = vpop.permute.xlu0 %804
    %v807 = vmul.f32 %v737, %v753
    %v808 = vmul.f32 %v738, %v757
    %v809 = vmul.f32 %v739, %v761
    %v810 = vmul.f32 %v740, %v765
    %v811 = vmul.f32 %v741, %v769
    %v812 = vmul.f32 %v742, %v773
    %v813 = vmul.f32 %v743, %v777
    %v814 = vmul.f32 %v744, %v781
    %v815 = vmul.f32 %v745, %v785
    %v816 = vmul.f32 %v746, %v789
    %v817 = vmul.f32 %v747, %v793
    %v818 = vmul.f32 %v748, %v797
    %v819 = vmul.f32 %v749, %v801
    %v820 = vmul.f32 %v750, %v805
    %v821 = vmul.f32 %v737, %v506
    %v822 = vmul.f32 %v738, %v509
    %v823 = vmul.f32 %v739, %v514
    %v824 = vmul.f32 %v740, %v517
    %v825 = vmul.f32 %v741, %v522
    %v826 = vmul.f32 %v742, %v525
    %v827 = vmul.f32 %v743, %v530
    %v828 = vmul.f32 %v744, %v533
    %v829 = vmul.f32 %v745, %v538
    %v830 = vmul.f32 %v746, %v541
    %v831 = vmul.f32 %v747, %v546
    %v832 = vmul.f32 %v748, %v549
    %v833 = vmul.f32 %v749, %v554
    %v834 = vmul.f32 %v750, %v557
    %849 = vrot.lane.b32.xlu0 %v821, 64
    %v850 = vpop.permute.xlu0 %849
    %851 = vrot.lane.b32.xlu0 %v822, 64
    %v852 = vpop.permute.xlu0 %851
    %853 = vrot.lane.b32.xlu0 %v823, 64
    %v854 = vpop.permute.xlu0 %853
    %855 = vrot.lane.b32.xlu0 %v824, 64
    %v856 = vpop.permute.xlu0 %855
    %857 = vrot.lane.b32.xlu0 %v825, 64
    %v858 = vpop.permute.xlu0 %857
    %859 = vrot.lane.b32.xlu0 %v826, 64
    %v860 = vpop.permute.xlu0 %859
    %861 = vrot.lane.b32.xlu0 %v827, 64
    %v862 = vpop.permute.xlu0 %861
    %863 = vrot.lane.b32.xlu0 %v828, 64
    %v864 = vpop.permute.xlu0 %863
    %865 = vrot.lane.b32.xlu0 %v829, 64
    %v866 = vpop.permute.xlu0 %865
    %867 = vrot.lane.b32.xlu0 %v830, 64
    %v868 = vpop.permute.xlu0 %867
    %869 = vrot.lane.b32.xlu0 %v831, 64
    %v870 = vpop.permute.xlu0 %869
    %871 = vrot.lane.b32.xlu0 %v832, 64
    %v872 = vpop.permute.xlu0 %871
    %873 = vrot.lane.b32.xlu0 %v833, 64
    %v874 = vpop.permute.xlu0 %873
    %875 = vrot.lane.b32.xlu0 %v834, 64
    %v876 = vpop.permute.xlu0 %875
    %v891 = vadd.f32 %v807, %v850
    %v892 = vadd.f32 %v808, %v852
    %v893 = vadd.f32 %v809, %v854
    %v894 = vadd.f32 %v810, %v856
    %v895 = vadd.f32 %v811, %v858
    %v896 = vadd.f32 %v812, %v860
    %v897 = vadd.f32 %v813, %v862
    %v898 = vadd.f32 %v814, %v864
    %v899 = vadd.f32 %v815, %v866
    %v900 = vadd.f32 %v816, %v868
    %v901 = vadd.f32 %v817, %v870
    %v902 = vadd.f32 %v818, %v872
    %v903 = vadd.f32 %v819, %v874
    %v904 = vadd.f32 %v820, %v876
    %905 = vset.pattern.permute.xlu0 10
    %906 = vperm.xlu0 %905, %v73
    %v907 = vpop.permute.xlu0 %906
    %909 = vset.pattern.permute.xlu0 10
    %910 = vperm.xlu0 %909, %v74
    %v911 = vpop.permute.xlu0 %910
    %913 = vset.pattern.permute.xlu0 10
    %914 = vperm.xlu0 %913, %v75
    %v915 = vpop.permute.xlu0 %914
    %917 = vset.pattern.permute.xlu0 10
    %918 = vperm.xlu0 %917, %v76
    %v919 = vpop.permute.xlu0 %918
    %921 = vset.pattern.permute.xlu0 10
    %922 = vperm.xlu0 %921, %v77
    %v923 = vpop.permute.xlu0 %922
    %925 = vset.pattern.permute.xlu0 10
    %926 = vperm.xlu0 %925, %v78
    %v927 = vpop.permute.xlu0 %926
    %929 = vset.pattern.permute.xlu0 10
    %930 = vperm.xlu0 %929, %v79
    %v931 = vpop.permute.xlu0 %930
    %933 = vset.pattern.permute.xlu0 10
    %934 = vperm.xlu0 %933, %v80
    %v935 = vpop.permute.xlu0 %934
    %937 = vset.pattern.permute.xlu0 10
    %938 = vperm.xlu0 %937, %v81
    %v939 = vpop.permute.xlu0 %938
    %941 = vset.pattern.permute.xlu0 10
    %942 = vperm.xlu0 %941, %v82
    %v943 = vpop.permute.xlu0 %942
    %945 = vset.pattern.permute.xlu0 10
    %946 = vperm.xlu0 %945, %v83
    %v947 = vpop.permute.xlu0 %946
    %949 = vset.pattern.permute.xlu0 10
    %950 = vperm.xlu0 %949, %v84
    %v951 = vpop.permute.xlu0 %950
    %953 = vset.pattern.permute.xlu0 10
    %954 = vperm.xlu0 %953, %v85
    %v955 = vpop.permute.xlu0 %954
    %957 = vset.pattern.permute.xlu0 10
    %958 = vperm.xlu0 %957, %v86
    %v959 = vpop.permute.xlu0 %958
    %v961 = vmul.f32 %v737, %v907
    %v962 = vmul.f32 %v738, %v911
    %v963 = vmul.f32 %v739, %v915
    %v964 = vmul.f32 %v740, %v919
    %v965 = vmul.f32 %v741, %v923
    %v966 = vmul.f32 %v742, %v927
    %v967 = vmul.f32 %v743, %v931
    %v968 = vmul.f32 %v744, %v935
    %v969 = vmul.f32 %v745, %v939
    %v970 = vmul.f32 %v746, %v943
    %v971 = vmul.f32 %v747, %v947
    %v972 = vmul.f32 %v748, %v951
    %v973 = vmul.f32 %v749, %v955
    %v974 = vmul.f32 %v750, %v959
    %989 = vrot.lane.b32.xlu0 %v506, 96
    %v990 = vpop.permute.xlu0 %989
    %991 = vrot.lane.b32.xlu0 %v509, 96
    %v992 = vpop.permute.xlu0 %991
    %993 = vrot.lane.b32.xlu0 %v514, 96
    %v994 = vpop.permute.xlu0 %993
    %995 = vrot.lane.b32.xlu0 %v517, 96
    %v996 = vpop.permute.xlu0 %995
    %997 = vrot.lane.b32.xlu0 %v522, 96
    %v998 = vpop.permute.xlu0 %997
    %999 = vrot.lane.b32.xlu0 %v525, 96
    %v1000 = vpop.permute.xlu0 %999
    %1001 = vrot.lane.b32.xlu0 %v530, 96
    %v1002 = vpop.permute.xlu0 %1001
    %1003 = vrot.lane.b32.xlu0 %v533, 96
    %v1004 = vpop.permute.xlu0 %1003
    %1005 = vrot.lane.b32.xlu0 %v538, 96
    %v1006 = vpop.permute.xlu0 %1005
    %1007 = vrot.lane.b32.xlu0 %v541, 96
    %v1008 = vpop.permute.xlu0 %1007
    %1009 = vrot.lane.b32.xlu0 %v546, 96
    %v1010 = vpop.permute.xlu0 %1009
    %1011 = vrot.lane.b32.xlu0 %v549, 96
    %v1012 = vpop.permute.xlu0 %1011
    %1013 = vrot.lane.b32.xlu0 %v554, 96
    %v1014 = vpop.permute.xlu0 %1013
    %1015 = vrot.lane.b32.xlu0 %v557, 96
    %v1016 = vpop.permute.xlu0 %1015
    %v1031 = vmul.f32 %v737, %v990
    %v1032 = vmul.f32 %v738, %v992
    %v1033 = vmul.f32 %v739, %v994
    %v1034 = vmul.f32 %v740, %v996
    %v1035 = vmul.f32 %v741, %v998
    %v1036 = vmul.f32 %v742, %v1000
    %v1037 = vmul.f32 %v743, %v1002
    %v1038 = vmul.f32 %v744, %v1004
    %v1039 = vmul.f32 %v745, %v1006
    %v1040 = vmul.f32 %v746, %v1008
    %v1041 = vmul.f32 %v747, %v1010
    %v1042 = vmul.f32 %v748, %v1012
    %v1043 = vmul.f32 %v749, %v1014
    %v1044 = vmul.f32 %v750, %v1016
    %1059 = vrot.lane.b32.xlu0 %v1031, 64
    %v1060 = vpop.permute.xlu0 %1059
    %1061 = vrot.lane.b32.xlu0 %v1032, 64
    %v1062 = vpop.permute.xlu0 %1061
    %1063 = vrot.lane.b32.xlu0 %v1033, 64
    %v1064 = vpop.permute.xlu0 %1063
    %1065 = vrot.lane.b32.xlu0 %v1034, 64
    %v1066 = vpop.permute.xlu0 %1065
    %1067 = vrot.lane.b32.xlu0 %v1035, 64
    %v1068 = vpop.permute.xlu0 %1067
    %1069 = vrot.lane.b32.xlu0 %v1036, 64
    %v1070 = vpop.permute.xlu0 %1069
    %1071 = vrot.lane.b32.xlu0 %v1037, 64
    %v1072 = vpop.permute.xlu0 %1071
    %1073 = vrot.lane.b32.xlu0 %v1038, 64
    %v1074 = vpop.permute.xlu0 %1073
    %1075 = vrot.lane.b32.xlu0 %v1039, 64
    %v1076 = vpop.permute.xlu0 %1075
    %1077 = vrot.lane.b32.xlu0 %v1040, 64
    %v1078 = vpop.permute.xlu0 %1077
    %1079 = vrot.lane.b32.xlu0 %v1041, 64
    %v1080 = vpop.permute.xlu0 %1079
    %1081 = vrot.lane.b32.xlu0 %v1042, 64
    %v1082 = vpop.permute.xlu0 %1081
    %1083 = vrot.lane.b32.xlu0 %v1043, 64
    %v1084 = vpop.permute.xlu0 %1083
    %1085 = vrot.lane.b32.xlu0 %v1044, 64
    %v1086 = vpop.permute.xlu0 %1085
    %v1101 = vadd.f32 %v961, %v1060
    %v1102 = vadd.f32 %v962, %v1062
    %v1103 = vadd.f32 %v963, %v1064
    %v1104 = vadd.f32 %v964, %v1066
    %v1105 = vadd.f32 %v965, %v1068
    %v1106 = vadd.f32 %v966, %v1070
    %v1107 = vadd.f32 %v967, %v1072
    %v1108 = vadd.f32 %v968, %v1074
    %v1109 = vadd.f32 %v969, %v1076
    %v1110 = vadd.f32 %v970, %v1078
    %v1111 = vadd.f32 %v971, %v1080
    %v1112 = vadd.f32 %v972, %v1082
    %v1113 = vadd.f32 %v973, %v1084
    %v1114 = vadd.f32 %v974, %v1086
    %1115 = vset.pattern.permute.xlu0 11
    %1116 = vperm.xlu0 %1115, %v73
    %v1117 = vpop.permute.xlu0 %1116
    %1119 = vset.pattern.permute.xlu0 11
    %1120 = vperm.xlu0 %1119, %v74
    %v1121 = vpop.permute.xlu0 %1120
    %1123 = vset.pattern.permute.xlu0 11
    %1124 = vperm.xlu0 %1123, %v75
    %v1125 = vpop.permute.xlu0 %1124
    %1127 = vset.pattern.permute.xlu0 11
    %1128 = vperm.xlu0 %1127, %v76
    %v1129 = vpop.permute.xlu0 %1128
    %1131 = vset.pattern.permute.xlu0 11
    %1132 = vperm.xlu0 %1131, %v77
    %v1133 = vpop.permute.xlu0 %1132
    %1135 = vset.pattern.permute.xlu0 11
    %1136 = vperm.xlu0 %1135, %v78
    %v1137 = vpop.permute.xlu0 %1136
    %1139 = vset.pattern.permute.xlu0 11
    %1140 = vperm.xlu0 %1139, %v79
    %v1141 = vpop.permute.xlu0 %1140
    %1143 = vset.pattern.permute.xlu0 11
    %1144 = vperm.xlu0 %1143, %v80
    %v1145 = vpop.permute.xlu0 %1144
    %1147 = vset.pattern.permute.xlu0 11
    %1148 = vperm.xlu0 %1147, %v81
    %v1149 = vpop.permute.xlu0 %1148
    %1151 = vset.pattern.permute.xlu0 11
    %1152 = vperm.xlu0 %1151, %v82
    %v1153 = vpop.permute.xlu0 %1152
    %1155 = vset.pattern.permute.xlu0 11
    %1156 = vperm.xlu0 %1155, %v83
    %v1157 = vpop.permute.xlu0 %1156
    %1159 = vset.pattern.permute.xlu0 11
    %1160 = vperm.xlu0 %1159, %v84
    %v1161 = vpop.permute.xlu0 %1160
    %1163 = vset.pattern.permute.xlu0 11
    %1164 = vperm.xlu0 %1163, %v85
    %v1165 = vpop.permute.xlu0 %1164
    %1167 = vset.pattern.permute.xlu0 11
    %1168 = vperm.xlu0 %1167, %v86
    %v1169 = vpop.permute.xlu0 %1168
    %v1171 = vmul.f32 %v737, %v1117
    %v1172 = vmul.f32 %v738, %v1121
    %v1173 = vmul.f32 %v739, %v1125
    %v1174 = vmul.f32 %v740, %v1129
    %v1175 = vmul.f32 %v741, %v1133
    %v1176 = vmul.f32 %v742, %v1137
    %v1177 = vmul.f32 %v743, %v1141
    %v1178 = vmul.f32 %v744, %v1145
    %v1179 = vmul.f32 %v745, %v1149
    %v1180 = vmul.f32 %v746, %v1153
    %v1181 = vmul.f32 %v747, %v1157
    %v1182 = vmul.f32 %v748, %v1161
    %v1183 = vmul.f32 %v749, %v1165
    %v1184 = vmul.f32 %v750, %v1169
    %1185 = vrot.lane.b32.xlu0 %v506, 64
    %v1186 = vpop.permute.xlu0 %1185
    %1187 = vrot.lane.b32.xlu0 %v509, 64
    %v1188 = vpop.permute.xlu0 %1187
    %1189 = vrot.lane.b32.xlu0 %v514, 64
    %v1190 = vpop.permute.xlu0 %1189
    %1191 = vrot.lane.b32.xlu0 %v517, 64
    %v1192 = vpop.permute.xlu0 %1191
    %1193 = vrot.lane.b32.xlu0 %v522, 64
    %v1194 = vpop.permute.xlu0 %1193
    %1195 = vrot.lane.b32.xlu0 %v525, 64
    %v1196 = vpop.permute.xlu0 %1195
    %1197 = vrot.lane.b32.xlu0 %v530, 64
    %v1198 = vpop.permute.xlu0 %1197
    %1199 = vrot.lane.b32.xlu0 %v533, 64
    %v1200 = vpop.permute.xlu0 %1199
    %1201 = vrot.lane.b32.xlu0 %v538, 64
    %v1202 = vpop.permute.xlu0 %1201
    %1203 = vrot.lane.b32.xlu0 %v541, 64
    %v1204 = vpop.permute.xlu0 %1203
    %1205 = vrot.lane.b32.xlu0 %v546, 64
    %v1206 = vpop.permute.xlu0 %1205
    %1207 = vrot.lane.b32.xlu0 %v549, 64
    %v1208 = vpop.permute.xlu0 %1207
    %1209 = vrot.lane.b32.xlu0 %v554, 64
    %v1210 = vpop.permute.xlu0 %1209
    %1211 = vrot.lane.b32.xlu0 %v557, 64
    %v1212 = vpop.permute.xlu0 %1211
    %v1227 = vmul.f32 %v737, %v1186
    %v1228 = vmul.f32 %v738, %v1188
    %v1229 = vmul.f32 %v739, %v1190
    %v1230 = vmul.f32 %v740, %v1192
    %v1231 = vmul.f32 %v741, %v1194
    %v1232 = vmul.f32 %v742, %v1196
    %v1233 = vmul.f32 %v743, %v1198
    %v1234 = vmul.f32 %v744, %v1200
    %v1235 = vmul.f32 %v745, %v1202
    %v1236 = vmul.f32 %v746, %v1204
    %v1237 = vmul.f32 %v747, %v1206
    %v1238 = vmul.f32 %v748, %v1208
    %v1239 = vmul.f32 %v749, %v1210
    %v1240 = vmul.f32 %v750, %v1212
    %1255 = vrot.lane.b32.xlu0 %v1227, 64
    %v1256 = vpop.permute.xlu0 %1255
    %1257 = vrot.lane.b32.xlu0 %v1228, 64
    %v1258 = vpop.permute.xlu0 %1257
    %1259 = vrot.lane.b32.xlu0 %v1229, 64
    %v1260 = vpop.permute.xlu0 %1259
    %1261 = vrot.lane.b32.xlu0 %v1230, 64
    %v1262 = vpop.permute.xlu0 %1261
    %1263 = vrot.lane.b32.xlu0 %v1231, 64
    %v1264 = vpop.permute.xlu0 %1263
    %1265 = vrot.lane.b32.xlu0 %v1232, 64
    %v1266 = vpop.permute.xlu0 %1265
    %1267 = vrot.lane.b32.xlu0 %v1233, 64
    %v1268 = vpop.permute.xlu0 %1267
    %1269 = vrot.lane.b32.xlu0 %v1234, 64
    %v1270 = vpop.permute.xlu0 %1269
    %1271 = vrot.lane.b32.xlu0 %v1235, 64
    %v1272 = vpop.permute.xlu0 %1271
    %1273 = vrot.lane.b32.xlu0 %v1236, 64
    %v1274 = vpop.permute.xlu0 %1273
    %1275 = vrot.lane.b32.xlu0 %v1237, 64
    %v1276 = vpop.permute.xlu0 %1275
    %1277 = vrot.lane.b32.xlu0 %v1238, 64
    %v1278 = vpop.permute.xlu0 %1277
    %1279 = vrot.lane.b32.xlu0 %v1239, 64
    %v1280 = vpop.permute.xlu0 %1279
    %1281 = vrot.lane.b32.xlu0 %v1240, 64
    %v1282 = vpop.permute.xlu0 %1281
    %v1297 = vadd.f32 %v1171, %v1256
    %v1298 = vadd.f32 %v1172, %v1258
    %v1299 = vadd.f32 %v1173, %v1260
    %v1300 = vadd.f32 %v1174, %v1262
    %v1301 = vadd.f32 %v1175, %v1264
    %v1302 = vadd.f32 %v1176, %v1266
    %v1303 = vadd.f32 %v1177, %v1268
    %v1304 = vadd.f32 %v1178, %v1270
    %v1305 = vadd.f32 %v1179, %v1272
    %v1306 = vadd.f32 %v1180, %v1274
    %v1307 = vadd.f32 %v1181, %v1276
    %v1308 = vadd.f32 %v1182, %v1278
    %v1309 = vadd.f32 %v1183, %v1280
    %v1310 = vadd.f32 %v1184, %v1282
    %1325 = vrot.lane.b32.xlu0 %v737, 96
    %v1326 = vpop.permute.xlu0 %1325
    %1327 = vrot.lane.b32.xlu0 %v738, 96
    %v1328 = vpop.permute.xlu0 %1327
    %1329 = vrot.lane.b32.xlu0 %v739, 96
    %v1330 = vpop.permute.xlu0 %1329
    %1331 = vrot.lane.b32.xlu0 %v740, 96
    %v1332 = vpop.permute.xlu0 %1331
    %1333 = vrot.lane.b32.xlu0 %v741, 96
    %v1334 = vpop.permute.xlu0 %1333
    %1335 = vrot.lane.b32.xlu0 %v742, 96
    %v1336 = vpop.permute.xlu0 %1335
    %1337 = vrot.lane.b32.xlu0 %v743, 96
    %v1338 = vpop.permute.xlu0 %1337
    %1339 = vrot.lane.b32.xlu0 %v744, 96
    %v1340 = vpop.permute.xlu0 %1339
    %1341 = vrot.lane.b32.xlu0 %v745, 96
    %v1342 = vpop.permute.xlu0 %1341
    %1343 = vrot.lane.b32.xlu0 %v746, 96
    %v1344 = vpop.permute.xlu0 %1343
    %1345 = vrot.lane.b32.xlu0 %v747, 96
    %v1346 = vpop.permute.xlu0 %1345
    %1347 = vrot.lane.b32.xlu0 %v748, 96
    %v1348 = vpop.permute.xlu0 %1347
    %1349 = vrot.lane.b32.xlu0 %v749, 96
    %v1350 = vpop.permute.xlu0 %1349
    %1351 = vrot.lane.b32.xlu0 %v750, 96
    %v1352 = vpop.permute.xlu0 %1351
    %1381 = vrot.lane.b32.xlu0 %v891, 96
    %v1382 = vpop.permute.xlu0 %1381
    %1383 = vrot.lane.b32.xlu0 %v892, 96
    %v1384 = vpop.permute.xlu0 %1383
    %1385 = vrot.lane.b32.xlu0 %v893, 96
    %v1386 = vpop.permute.xlu0 %1385
    %1387 = vrot.lane.b32.xlu0 %v894, 96
    %v1388 = vpop.permute.xlu0 %1387
    %1389 = vrot.lane.b32.xlu0 %v895, 96
    %v1390 = vpop.permute.xlu0 %1389
    %1391 = vrot.lane.b32.xlu0 %v896, 96
    %v1392 = vpop.permute.xlu0 %1391
    %1393 = vrot.lane.b32.xlu0 %v897, 96
    %v1394 = vpop.permute.xlu0 %1393
    %1395 = vrot.lane.b32.xlu0 %v898, 96
    %v1396 = vpop.permute.xlu0 %1395
    %1397 = vrot.lane.b32.xlu0 %v899, 96
    %v1398 = vpop.permute.xlu0 %1397
    %1399 = vrot.lane.b32.xlu0 %v900, 96
    %v1400 = vpop.permute.xlu0 %1399
    %1401 = vrot.lane.b32.xlu0 %v901, 96
    %v1402 = vpop.permute.xlu0 %1401
    %1403 = vrot.lane.b32.xlu0 %v902, 96
    %v1404 = vpop.permute.xlu0 %1403
    %1405 = vrot.lane.b32.xlu0 %v903, 96
    %v1406 = vpop.permute.xlu0 %1405
    %1407 = vrot.lane.b32.xlu0 %v904, 96
    %v1408 = vpop.permute.xlu0 %1407
    %1437 = vrot.lane.b32.xlu0 %v1297, 32
    %v1438 = vpop.permute.xlu0 %1437
    %1439 = vrot.lane.b32.xlu0 %v1298, 32
    %v1440 = vpop.permute.xlu0 %1439
    %1441 = vrot.lane.b32.xlu0 %v1299, 32
    %v1442 = vpop.permute.xlu0 %1441
    %1443 = vrot.lane.b32.xlu0 %v1300, 32
    %v1444 = vpop.permute.xlu0 %1443
    %1445 = vrot.lane.b32.xlu0 %v1301, 32
    %v1446 = vpop.permute.xlu0 %1445
    %1447 = vrot.lane.b32.xlu0 %v1302, 32
    %v1448 = vpop.permute.xlu0 %1447
    %1449 = vrot.lane.b32.xlu0 %v1303, 32
    %v1450 = vpop.permute.xlu0 %1449
    %1451 = vrot.lane.b32.xlu0 %v1304, 32
    %v1452 = vpop.permute.xlu0 %1451
    %1453 = vrot.lane.b32.xlu0 %v1305, 32
    %v1454 = vpop.permute.xlu0 %1453
    %1455 = vrot.lane.b32.xlu0 %v1306, 32
    %v1456 = vpop.permute.xlu0 %1455
    %1457 = vrot.lane.b32.xlu0 %v1307, 32
    %v1458 = vpop.permute.xlu0 %1457
    %1459 = vrot.lane.b32.xlu0 %v1308, 32
    %v1460 = vpop.permute.xlu0 %1459
    %1461 = vrot.lane.b32.xlu0 %v1309, 32
    %v1462 = vpop.permute.xlu0 %1461
    %1463 = vrot.lane.b32.xlu0 %v1310, 32
    %v1464 = vpop.permute.xlu0 %1463
    %v1479 = vsel %vm143, %v1326, %v1382
    %v1480 = vsel %vm143, %v1328, %v1384
    %v1481 = vsel %vm143, %v1330, %v1386
    %v1482 = vsel %vm143, %v1332, %v1388
    %v1483 = vsel %vm143, %v1334, %v1390
    %v1484 = vsel %vm143, %v1336, %v1392
    %v1485 = vsel %vm143, %v1338, %v1394
    %v1486 = vsel %vm143, %v1340, %v1396
    %v1487 = vsel %vm143, %v1342, %v1398
    %v1488 = vsel %vm143, %v1344, %v1400
    %v1489 = vsel %vm143, %v1346, %v1402
    %v1490 = vsel %vm143, %v1348, %v1404
    %v1491 = vsel %vm143, %v1350, %v1406
    %v1492 = vsel %vm143, %v1352, %v1408
    %vm1493 = vcmask 523264
    %v1494 = vsel %vm1493, %v1479, %v1101
    %v1495 = vsel %vm1493, %v1480, %v1102
    %v1496 = vsel %vm1493, %v1481, %v1103
    %v1497 = vsel %vm1493, %v1482, %v1104
    %v1498 = vsel %vm1493, %v1483, %v1105
    %v1499 = vsel %vm1493, %v1484, %v1106
    %v1500 = vsel %vm1493, %v1485, %v1107
    %v1501 = vsel %vm1493, %v1486, %v1108
    %v1502 = vsel %vm1493, %v1487, %v1109
    %v1503 = vsel %vm1493, %v1488, %v1110
    %v1504 = vsel %vm1493, %v1489, %v1111
    %v1505 = vsel %vm1493, %v1490, %v1112
    %v1506 = vsel %vm1493, %v1491, %v1113
    %v1507 = vsel %vm1493, %v1492, %v1114
    %vm1508 = vcmask 785408
    %v1509 = vsel %vm1508, %v1494, %v1438
    %v1510 = vsel %vm1508, %v1495, %v1440
    %v1511 = vsel %vm1508, %v1496, %v1442
    %v1512 = vsel %vm1508, %v1497, %v1444
    %v1513 = vsel %vm1508, %v1498, %v1446
    %v1514 = vsel %vm1508, %v1499, %v1448
    %v1515 = vsel %vm1508, %v1500, %v1450
    %v1516 = vsel %vm1508, %v1501, %v1452
    %v1517 = vsel %vm1508, %v1502, %v1454
    %v1518 = vsel %vm1508, %v1503, %v1456
    %v1519 = vsel %vm1508, %v1504, %v1458
    %v1520 = vsel %vm1508, %v1505, %v1460
    %v1521 = vsel %vm1508, %v1506, %v1462
    %v1522 = vsel %vm1508, %v1507, %v1464
    %v1523 = vpack.c.bf16 %v1510, %v1509
    %v1524 = vpack.c.bf16 %v1512, %v1511
    %v1525 = vpack.c.bf16 %v1514, %v1513
    %v1526 = vpack.c.bf16 %v1516, %v1515
    %v1527 = vpack.c.bf16 %v1518, %v1517
    %v1528 = vpack.c.bf16 %v1520, %v1519
    %v1529 = vpack.c.bf16 %v1522, %v1521
    %v1532 = vunpack.c.l.b16 %v71
    %v1533 = vunpack.c.l.b16 %v72
    %v1534 = vpack.c.b16 %v1533, %v1532
    %vm1535 = vcmask 916480
    %v1537 = vsel %vm1535, %v1534, 0
    %1539 = vmatprep.subr.bf16.mxu0 0
    %1540 = vmatpush1.bf16.msra.mxu0 %v1523
    %1541 = vmatprep.subr.bf16.mxu0 0
    %1542 = vmatpush1.bf16.msra.mxu0 %v1524
    %1543 = vmatprep.subr.bf16.mxu0 0
    %1544 = vmatpush1.bf16.msra.mxu0 %v1525
    %1545 = vmatprep.subr.bf16.mxu0 0
    %1546 = vmatpush1.bf16.msra.mxu0 %v1526
    %1547 = vmatprep.subr.bf16.mxu0 0
    %1548 = vmatpush1.bf16.msra.mxu0 %v1527
    %1549 = vmatprep.subr.bf16.mxu0 0
    %1550 = vmatpush1.bf16.msra.mxu0 %v1528
    %1551 = vmatprep.subr.bf16.mxu0 0
    %1552 = vmatpush1.bf16.msra.mxu0 %v1529
    %1553 = vmatprep.subr.bf16.mxu0 0
    %1554 = vmatpush1.bf16.msra.mxu0 0
    %1555 = vmatprep.subr.bf16.mxu0 0
    %1556 = vmatpush1.bf16.msra.mxu0 0
    %1557 = vmatprep.subr.bf16.mxu0 0
    %1558 = vmatpush1.bf16.msra.mxu0 0
    %1559 = vmatprep.subr.bf16.mxu0 0
    %1560 = vmatpush1.bf16.msra.mxu0 0
    %1561 = vmatprep.subr.bf16.mxu0 0
    %1562 = vmatpush1.bf16.msra.mxu0 0
    %1563 = vmatprep.subr.bf16.mxu0 0
    %1564 = vmatpush1.bf16.msra.mxu0 0
    %1565 = vmatprep.subr.bf16.mxu0 0
    %1566 = vmatpush1.bf16.msra.mxu0 0
    %1567 = vmatprep.subr.bf16.mxu0 0
    %1568 = vmatpush1.bf16.msra.mxu0 0
    %1569 = vmatprep.subr.bf16.mxu0 0
    %1570 = vmatpush1.bf16.msra.mxu0 0
    %1571 = vmatprep.mubr.bf16.mxu0 0
    %1572 = vmatmul.mubr.bf16.gmra.mrb[0].mxu0 %v1537
    %v1573 = vpop.f32.mrb[0].mxu0
    %v1574 = vadd.f32 0.0, %v1573
    %v1575 = vpop.f32.mrb[0].mxu0
    %v1576 = vpop.f32.mrb[0].mxu0
    %v1577 = vadd.f32 0.0, %v1576
    %v1578 = vpop.f32.mrb[0].mxu0
    %1579 = vdwg.mxu0
    %v1580 = vadd.f32 %v87, %v1574
    %v1581 = vadd.f32 %v88, %v1577
    %v1582 = vadd.f32 %v1574, 0.0
    %v1583 = vadd.f32 %v1577, 0.0
    %1586 = vrot.lane.b32.xlu0 %v1582, 96
    %v1587 = vpop.permute.xlu0 %1586
    %1588 = vrot.lane.b32.xlu0 %v1583, 96
    %v1589 = vpop.permute.xlu0 %1588
    %v1590 = vsel %vm1508, %v1587, 0
    %v1592 = vsel %vm1508, %v1589, 0
    %1594 = vmatprep.subr.mxu0 0.0
    %1595 = vmatpush1.msra.mxu0 %v110
    %1596 = vmatprep.subr.mxu0 0.0
    %1597 = vmatpush1.msra.mxu0 %v111
    %1598 = vmatprep.subr.mxu0 0.0
    %1599 = vmatpush1.msra.mxu0 %v112
    %1600 = vmatprep.subr.mxu0 0.0
    %1601 = vmatpush1.msra.mxu0 %v113
    %1602 = vmatprep.subr.mxu0 0.0
    %1603 = vmatpush1.msra.mxu0 %v114
    %1604 = vmatprep.subr.mxu0 0.0
    %1605 = vmatpush1.msra.mxu0 %v115
    %1606 = vmatprep.subr.mxu0 0.0
    %1607 = vmatpush1.msra.mxu0 %v116
    %1608 = vmatprep.subr.mxu0 0.0
    %1609 = vmatpush1.msra.mxu0 %v117
    %1610 = vmatprep.subr.mxu0 0.0
    %1611 = vmatpush1.msra.mxu0 %v118
    %1612 = vmatprep.subr.mxu0 0.0
    %1613 = vmatpush1.msra.mxu0 %v119
    %1614 = vmatprep.subr.mxu0 0.0
    %1615 = vmatpush1.msra.mxu0 %v120
    %1616 = vmatprep.subr.mxu0 0.0
    %1617 = vmatpush1.msra.mxu0 %v121
    %1618 = vmatprep.subr.mxu0 0.0
    %1619 = vmatpush1.msra.mxu0 0.0
    %1620 = vmatprep.subr.mxu0 0.0
    %1621 = vmatpush1.msra.mxu0 0.0
    %1622 = vmatprep.subr.mxu0 0.0
    %1623 = vmatpush1.msra.mxu0 0.0
    %1624 = vmatprep.subr.mxu0 0.0
    %1625 = vmatpush1.msra.mxu0 0.0
    %1626 = vmatprep.subr.mxu0 0.0
    %1627 = vmatpush1.msra.mxu0 0.0
    %1628 = vmatprep.subr.mxu0 0.0
    %1629 = vmatpush1.msra.mxu0 0.0
    %1630 = vmatprep.subr.mxu0 0.0
    %1631 = vmatpush1.msra.mxu0 0.0
    %1632 = vmatprep.subr.mxu0 0.0
    %1633 = vmatpush1.msra.mxu0 0.0
    %1634 = vmatprep.subr.mxu0 0.0
    %1635 = vmatpush1.msra.mxu0 0.0
    %1636 = vmatprep.subr.mxu0 0.0
    %1637 = vmatpush1.msra.mxu0 0.0
    %1638 = vmatprep.subr.mxu0 0.0
    %1639 = vmatpush1.msra.mxu0 0.0
    %1640 = vmatprep.subr.mxu0 0.0
    %1641 = vmatpush1.msra.mxu0 0.0
    %1642 = vmatprep.subr.mxu0 0.0
    %1643 = vmatpush1.msra.mxu0 0.0
    %1644 = vmatprep.subr.mxu0 0.0
    %1645 = vmatpush1.msra.mxu0 0.0
    %1646 = vmatprep.subr.mxu0 0.0
    %1647 = vmatpush1.msra.mxu0 0.0
    %1648 = vmatprep.subr.mxu0 0.0
    %1649 = vmatpush1.msra.mxu0 0.0
    %1650 = vmatprep.subr.mxu0 0.0
    %1651 = vmatpush1.msra.mxu0 0.0
    %1652 = vmatprep.subr.mxu0 0.0
    %1653 = vmatpush1.msra.mxu0 0.0
    %1654 = vmatprep.subr.mxu0 0.0
    %1655 = vmatpush1.msra.mxu0 0.0
    %1656 = vmatprep.subr.mxu0 0.0
    %1657 = vmatpush1.msra.mxu0 0.0
    %1658 = vmatprep.mubr.f32.mxu0 0.0
    %1659 = vmatmul.mubr.f32.gmra.mrb[0].mxu0 %v1590
    %v1660 = vpop.f32.mrb[0].mxu0
    %v1661 = vadd.f32 0.0, %v1660
    %v1662 = vpop.f32.mrb[0].mxu0
    %1663 = vmatprep.mubr.f32.mxu0 0.0
    %1664 = vmatmul.mubr.f32.gmra.mrb[0].mxu0 %v1592
    %v1665 = vpop.f32.mrb[0].mxu0
    %v1666 = vadd.f32 0.0, %v1665
    %v1667 = vpop.f32.mrb[0].mxu0
    %1668 = vdwg.mxu0
    %1669 = vmatprep.subr.mxu0 0.0
    %1670 = vmatpush1.msra.mxu0 %v122
    %1671 = vmatprep.subr.mxu0 0.0
    %1672 = vmatpush1.msra.mxu0 %v123
    %1673 = vmatprep.subr.mxu0 0.0
    %1674 = vmatpush1.msra.mxu0 %v124
    %1675 = vmatprep.subr.mxu0 0.0
    %1676 = vmatpush1.msra.mxu0 %v125
    %1677 = vmatprep.subr.mxu0 0.0
    %1678 = vmatpush1.msra.mxu0 %v126
    %1679 = vmatprep.subr.mxu0 0.0
    %1680 = vmatpush1.msra.mxu0 %v127
    %1681 = vmatprep.subr.mxu0 0.0
    %1682 = vmatpush1.msra.mxu0 %v128
    %1683 = vmatprep.subr.mxu0 0.0
    %1684 = vmatpush1.msra.mxu0 %v129
    %1685 = vmatprep.subr.mxu0 0.0
    %1686 = vmatpush1.msra.mxu0 %v130
    %1687 = vmatprep.subr.mxu0 0.0
    %1688 = vmatpush1.msra.mxu0 %v131
    %1689 = vmatprep.subr.mxu0 0.0
    %1690 = vmatpush1.msra.mxu0 %v132
    %1691 = vmatprep.subr.mxu0 0.0
    %1692 = vmatpush1.msra.mxu0 %v133
    %1693 = vmatprep.subr.mxu0 0.0
    %1694 = vmatpush1.msra.mxu0 0.0
    %1695 = vmatprep.subr.mxu0 0.0
    %1696 = vmatpush1.msra.mxu0 0.0
    %1697 = vmatprep.subr.mxu0 0.0
    %1698 = vmatpush1.msra.mxu0 0.0
    %1699 = vmatprep.subr.mxu0 0.0
    %1700 = vmatpush1.msra.mxu0 0.0
    %1701 = vmatprep.subr.mxu0 0.0
    %1702 = vmatpush1.msra.mxu0 0.0
    %1703 = vmatprep.subr.mxu0 0.0
    %1704 = vmatpush1.msra.mxu0 0.0
    %1705 = vmatprep.subr.mxu0 0.0
    %1706 = vmatpush1.msra.mxu0 0.0
    %1707 = vmatprep.subr.mxu0 0.0
    %1708 = vmatpush1.msra.mxu0 0.0
    %1709 = vmatprep.subr.mxu0 0.0
    %1710 = vmatpush1.msra.mxu0 0.0
    %1711 = vmatprep.subr.mxu0 0.0
    %1712 = vmatpush1.msra.mxu0 0.0
    %1713 = vmatprep.subr.mxu0 0.0
    %1714 = vmatpush1.msra.mxu0 0.0
    %1715 = vmatprep.subr.mxu0 0.0
    %1716 = vmatpush1.msra.mxu0 0.0
    %1717 = vmatprep.subr.mxu0 0.0
    %1718 = vmatpush1.msra.mxu0 0.0
    %1719 = vmatprep.subr.mxu0 0.0
    %1720 = vmatpush1.msra.mxu0 0.0
    %1721 = vmatprep.subr.mxu0 0.0
    %1722 = vmatpush1.msra.mxu0 0.0
    %1723 = vmatprep.subr.mxu0 0.0
    %1724 = vmatpush1.msra.mxu0 0.0
    %1725 = vmatprep.subr.mxu0 0.0
    %1726 = vmatpush1.msra.mxu0 0.0
    %1727 = vmatprep.subr.mxu0 0.0
    %1728 = vmatpush1.msra.mxu0 0.0
    %1729 = vmatprep.subr.mxu0 0.0
    %1730 = vmatpush1.msra.mxu0 0.0
    %1731 = vmatprep.subr.mxu0 0.0
    %1732 = vmatpush1.msra.mxu0 0.0
    %1733 = vmatprep.mubr.f32.mxu0 0.0
    %1734 = vmatmul.mubr.f32.gmra.mrb[0].mxu0 %v1590
    %v1735 = vpop.f32.mrb[0].mxu0
    %v1736 = vadd.f32 0.0, %v1735
    %v1737 = vpop.f32.mrb[0].mxu0
    %1738 = vmatprep.mubr.f32.mxu0 0.0
    %1739 = vmatmul.mubr.f32.gmra.mrb[0].mxu0 %v1592
    %v1740 = vpop.f32.mrb[0].mxu0
    %v1741 = vadd.f32 0.0, %v1740
    %v1742 = vpop.f32.mrb[0].mxu0
    %1743 = vdwg.mxu0
    %v1744 = vmul.f32 %v1736, %v1736
    %v1745 = vmul.f32 %v1741, %v1741
    %1748 = vrot.lane.b32.xlu0 %v1744, 96
    %v1749 = vpop.permute.xlu0 %1748
    %1750 = vrot.lane.b32.xlu0 %v1745, 96
    %v1751 = vpop.permute.xlu0 %1750
    %v1754 = vadd.f32 %v1744, %v1749
    %v1755 = vadd.f32 %v1745, %v1751
    %1756 = vrot.lane.b32.xlu0 %v1744, 64
    %v1757 = vpop.permute.xlu0 %1756
    %1758 = vrot.lane.b32.xlu0 %v1745, 64
    %v1759 = vpop.permute.xlu0 %1758
    %v1762 = vadd.f32 %v1754, %v1757
    %v1763 = vadd.f32 %v1755, %v1759
    %v1764 = vadd.f32 %v1762, 3e-15
    %v1765 = vadd.f32 %v1763, 3e-15
    %v1766 = vrsqrt.pop %v1764
    %v1767 = vmul.f32 %v1764, %v1766
    %vm1768 = vcmp.eq.f32.partialorder %v1764, inf
    %v1769 = vsel %vm1768, %v1764, %v1767
    %vm1770 = vcmp.eq.f32.partialorder %v1764, 0.0
    %v1771 = vand.u32 %v1764, 2147483648
    %v1772 = vsel %vm1770, %v1771, %v1769
    %v1773 = vrsqrt.pop %v1765
    %v1774 = vmul.f32 %v1765, %v1773
    %vm1775 = vcmp.eq.f32.partialorder %v1765, inf
    %v1776 = vsel %vm1775, %v1765, %v1774
    %vm1777 = vcmp.eq.f32.partialorder %v1765, 0.0
    %v1778 = vand.u32 %v1765, 2147483648
    %v1779 = vsel %vm1777, %v1778, %v1776
    %v1781 = vsel %vm143, %v1772, 0
    %v1784 = vsel %vm143, %v1779, 0
    %1786 = vmatprep.subr.mxu0 0.0
    %1787 = vmatpush1.msra.mxu0 %v98
    %1788 = vmatprep.subr.mxu0 0.0
    %1789 = vmatpush1.msra.mxu0 %v99
    %1790 = vmatprep.subr.mxu0 0.0
    %1791 = vmatpush1.msra.mxu0 %v100
    %1792 = vmatprep.subr.mxu0 0.0
    %1793 = vmatpush1.msra.mxu0 %v101
    %1794 = vmatprep.subr.mxu0 0.0
    %1795 = vmatpush1.msra.mxu0 0.0
    %1796 = vmatprep.subr.mxu0 0.0
    %1797 = vmatpush1.msra.mxu0 0.0
    %1798 = vmatprep.subr.mxu0 0.0
    %1799 = vmatpush1.msra.mxu0 0.0
    %1800 = vmatprep.subr.mxu0 0.0
    %1801 = vmatpush1.msra.mxu0 0.0
    %1802 = vmatprep.subr.mxu0 0.0
    %1803 = vmatpush1.msra.mxu0 0.0
    %1804 = vmatprep.subr.mxu0 0.0
    %1805 = vmatpush1.msra.mxu0 0.0
    %1806 = vmatprep.subr.mxu0 0.0
    %1807 = vmatpush1.msra.mxu0 0.0
    %1808 = vmatprep.subr.mxu0 0.0
    %1809 = vmatpush1.msra.mxu0 0.0
    %1810 = vmatprep.subr.mxu0 0.0
    %1811 = vmatpush1.msra.mxu0 0.0
    %1812 = vmatprep.subr.mxu0 0.0
    %1813 = vmatpush1.msra.mxu0 0.0
    %1814 = vmatprep.subr.mxu0 0.0
    %1815 = vmatpush1.msra.mxu0 0.0
    %1816 = vmatprep.subr.mxu0 0.0
    %1817 = vmatpush1.msra.mxu0 0.0
    %1818 = vmatprep.subr.mxu0 0.0
    %1819 = vmatpush1.msra.mxu0 0.0
    %1820 = vmatprep.subr.mxu0 0.0
    %1821 = vmatpush1.msra.mxu0 0.0
    %1822 = vmatprep.subr.mxu0 0.0
    %1823 = vmatpush1.msra.mxu0 0.0
    %1824 = vmatprep.subr.mxu0 0.0
    %1825 = vmatpush1.msra.mxu0 0.0
    %1826 = vmatprep.subr.mxu0 0.0
    %1827 = vmatpush1.msra.mxu0 0.0
    %1828 = vmatprep.subr.mxu0 0.0
    %1829 = vmatpush1.msra.mxu0 0.0
    %1830 = vmatprep.subr.mxu0 0.0
    %1831 = vmatpush1.msra.mxu0 0.0
    %1832 = vmatprep.subr.mxu0 0.0
    %1833 = vmatpush1.msra.mxu0 0.0
    %1834 = vmatprep.subr.mxu0 0.0
    %1835 = vmatpush1.msra.mxu0 0.0
    %1836 = vmatprep.subr.mxu0 0.0
    %1837 = vmatpush1.msra.mxu0 0.0
    %1838 = vmatprep.subr.mxu0 0.0
    %1839 = vmatpush1.msra.mxu0 0.0
    %1840 = vmatprep.subr.mxu0 0.0
    %1841 = vmatpush1.msra.mxu0 0.0
    %1842 = vmatprep.subr.mxu0 0.0
    %1843 = vmatpush1.msra.mxu0 0.0
    %1844 = vmatprep.subr.mxu0 0.0
    %1845 = vmatpush1.msra.mxu0 0.0
    %1846 = vmatprep.subr.mxu0 0.0
    %1847 = vmatpush1.msra.mxu0 0.0
    %1848 = vmatprep.subr.mxu0 0.0
    %1849 = vmatpush1.msra.mxu0 0.0
    %1850 = vmatprep.mubr.f32.mxu0 0.0
    %1851 = vmatmul.mubr.f32.gmra.mrb[0].mxu0 %v1781
    %v1852 = vpop.f32.mrb[0].mxu0
    %v1853 = vadd.f32 0.0, %v1852
    %v1854 = vpop.f32.mrb[0].mxu0
    %1855 = vmatprep.mubr.f32.mxu0 0.0
    %1856 = vmatmul.mubr.f32.gmra.mrb[0].mxu0 %v1784
    %v1857 = vpop.f32.mrb[0].mxu0
    %v1858 = vadd.f32 0.0, %v1857
    %v1859 = vpop.f32.mrb[0].mxu0
    %1860 = vdwg.mxu0
    %v1862 = vsel %vm143, %v1580, 0
    %v1865 = vsel %vm143, %v1581, 0
    %1867 = vmatprep.subr.mxu0 0.0
    %1868 = vmatpush1.msra.mxu0 %v94
    %1869 = vmatprep.subr.mxu0 0.0
    %1870 = vmatpush1.msra.mxu0 %v95
    %1871 = vmatprep.subr.mxu0 0.0
    %1872 = vmatpush1.msra.mxu0 %v96
    %1873 = vmatprep.subr.mxu0 0.0
    %1874 = vmatpush1.msra.mxu0 %v97
    %1875 = vmatprep.subr.mxu0 0.0
    %1876 = vmatpush1.msra.mxu0 0.0
    %1877 = vmatprep.subr.mxu0 0.0
    %1878 = vmatpush1.msra.mxu0 0.0
    %1879 = vmatprep.subr.mxu0 0.0
    %1880 = vmatpush1.msra.mxu0 0.0
    %1881 = vmatprep.subr.mxu0 0.0
    %1882 = vmatpush1.msra.mxu0 0.0
    %1883 = vmatprep.subr.mxu0 0.0
    %1884 = vmatpush1.msra.mxu0 0.0
    %1885 = vmatprep.subr.mxu0 0.0
    %1886 = vmatpush1.msra.mxu0 0.0
    %1887 = vmatprep.subr.mxu0 0.0
    %1888 = vmatpush1.msra.mxu0 0.0
    %1889 = vmatprep.subr.mxu0 0.0
    %1890 = vmatpush1.msra.mxu0 0.0
    %1891 = vmatprep.subr.mxu0 0.0
    %1892 = vmatpush1.msra.mxu0 0.0
    %1893 = vmatprep.subr.mxu0 0.0
    %1894 = vmatpush1.msra.mxu0 0.0
    %1895 = vmatprep.subr.mxu0 0.0
    %1896 = vmatpush1.msra.mxu0 0.0
    %1897 = vmatprep.subr.mxu0 0.0
    %1898 = vmatpush1.msra.mxu0 0.0
    %1899 = vmatprep.subr.mxu0 0.0
    %1900 = vmatpush1.msra.mxu0 0.0
    %1901 = vmatprep.subr.mxu0 0.0
    %1902 = vmatpush1.msra.mxu0 0.0
    %1903 = vmatprep.subr.mxu0 0.0
    %1904 = vmatpush1.msra.mxu0 0.0
    %1905 = vmatprep.subr.mxu0 0.0
    %1906 = vmatpush1.msra.mxu0 0.0
    %1907 = vmatprep.subr.mxu0 0.0
    %1908 = vmatpush1.msra.mxu0 0.0
    %1909 = vmatprep.subr.mxu0 0.0
    %1910 = vmatpush1.msra.mxu0 0.0
    %1911 = vmatprep.subr.mxu0 0.0
    %1912 = vmatpush1.msra.mxu0 0.0
    %1913 = vmatprep.subr.mxu0 0.0
    %1914 = vmatpush1.msra.mxu0 0.0
    %1915 = vmatprep.subr.mxu0 0.0
    %1916 = vmatpush1.msra.mxu0 0.0
    %1917 = vmatprep.subr.mxu0 0.0
    %1918 = vmatpush1.msra.mxu0 0.0
    %1919 = vmatprep.subr.mxu0 0.0
    %1920 = vmatpush1.msra.mxu0 0.0
    %1921 = vmatprep.subr.mxu0 0.0
    %1922 = vmatpush1.msra.mxu0 0.0
    %1923 = vmatprep.subr.mxu0 0.0
    %1924 = vmatpush1.msra.mxu0 0.0
    %1925 = vmatprep.subr.mxu0 0.0
    %1926 = vmatpush1.msra.mxu0 0.0
    %1927 = vmatprep.subr.mxu0 0.0
    %1928 = vmatpush1.msra.mxu0 0.0
    %1929 = vmatprep.subr.mxu0 0.0
    %1930 = vmatpush1.msra.mxu0 0.0
    %1931 = vmatprep.mubr.f32.mxu0 0.0
    %1932 = vmatmul.mubr.f32.gmra.mrb[0].mxu0 %v1862
    %v1933 = vpop.f32.mrb[0].mxu0
    %v1934 = vadd.f32 %v1853, %v1933
    %v1935 = vpop.f32.mrb[0].mxu0
    %1936 = vmatprep.mubr.f32.mxu0 0.0
    %1937 = vmatmul.mubr.f32.gmra.mrb[0].mxu0 %v1865
    %v1938 = vpop.f32.mrb[0].mxu0
    %v1939 = vadd.f32 %v1858, %v1938
    %v1940 = vpop.f32.mrb[0].mxu0
    %1941 = vdwg.mxu0
    %v1942 = vlaneseq
    %v1943 = vshrl.u32 %v1942, 7
    %v1944 = vsub.s32 0, %v1943
    %v1945 = vrot.slane %v102, %v1944
    %v1946 = vadd.f32 %v1934, %v1945
    %v1947 = vadd.f32 %v1939, %v1945
    %v1948 = vxor.u32 %v1946, 2147483648
    %v1949 = vxor.u32 %v1947, 2147483648
    %v1950 = vmul.f32 %v1948, 1.442695
    %v1951 = vpow.pop %v1950
    %v1952 = vmul.f32 %v1949, 1.442695
    %v1953 = vpow.pop %v1952
    %v1954 = vadd.f32 %v1951, 1.0
    %v1955 = vadd.f32 %v1953, 1.0
    %v1956 = vrcp.pop %v1954
    %v1957 = vmul.f32 1.0, %v1956
    %v1958 = vrcp.pop %v1955
    %v1959 = vmul.f32 1.0, %v1958
    %v1960 = vmul.f32 %v1946, %v1957
    %v1961 = vmul.f32 %v1947, %v1959
    %v1962 = vlaneseq
    %v1963 = vshrl.u32 %v1962, 7
    %v1964 = vsub.s32 0, %v1963
    %v1965 = vrot.slane %v138, %v1964
    %v1967 = vsel %vm143, %v1960, 0
    %v1970 = vsel %vm143, %v1961, 0
    %1972 = vmatprep.subr.mxu0 0.0
    %1973 = vmatpush1.msra.mxu0 %v134
    %1974 = vmatprep.subr.mxu0 0.0
    %1975 = vmatpush1.msra.mxu0 %v135
    %1976 = vmatprep.subr.mxu0 0.0
    %1977 = vmatpush1.msra.mxu0 %v136
    %1978 = vmatprep.subr.mxu0 0.0
    %1979 = vmatpush1.msra.mxu0 %v137
    %1980 = vmatprep.subr.mxu0 0.0
    %1981 = vmatpush1.msra.mxu0 0.0
    %1982 = vmatprep.subr.mxu0 0.0
    %1983 = vmatpush1.msra.mxu0 0.0
    %1984 = vmatprep.subr.mxu0 0.0
    %1985 = vmatpush1.msra.mxu0 0.0
    %1986 = vmatprep.subr.mxu0 0.0
    %1987 = vmatpush1.msra.mxu0 0.0
    %1988 = vmatprep.subr.mxu0 0.0
    %1989 = vmatpush1.msra.mxu0 0.0
    %1990 = vmatprep.subr.mxu0 0.0
    %1991 = vmatpush1.msra.mxu0 0.0
    %1992 = vmatprep.subr.mxu0 0.0
    %1993 = vmatpush1.msra.mxu0 0.0
    %1994 = vmatprep.subr.mxu0 0.0
    %1995 = vmatpush1.msra.mxu0 0.0
    %1996 = vmatprep.subr.mxu0 0.0
    %1997 = vmatpush1.msra.mxu0 0.0
    %1998 = vmatprep.subr.mxu0 0.0
    %1999 = vmatpush1.msra.mxu0 0.0
    %2000 = vmatprep.subr.mxu0 0.0
    %2001 = vmatpush1.msra.mxu0 0.0
    %2002 = vmatprep.subr.mxu0 0.0
    %2003 = vmatpush1.msra.mxu0 0.0
    %2004 = vmatprep.subr.mxu0 0.0
    %2005 = vmatpush1.msra.mxu0 0.0
    %2006 = vmatprep.subr.mxu0 0.0
    %2007 = vmatpush1.msra.mxu0 0.0
    %2008 = vmatprep.subr.mxu0 0.0
    %2009 = vmatpush1.msra.mxu0 0.0
    %2010 = vmatprep.subr.mxu0 0.0
    %2011 = vmatpush1.msra.mxu0 0.0
    %2012 = vmatprep.subr.mxu0 0.0
    %2013 = vmatpush1.msra.mxu0 0.0
    %2014 = vmatprep.subr.mxu0 0.0
    %2015 = vmatpush1.msra.mxu0 0.0
    %2016 = vmatprep.subr.mxu0 0.0
    %2017 = vmatpush1.msra.mxu0 0.0
    %2018 = vmatprep.subr.mxu0 0.0
    %2019 = vmatpush1.msra.mxu0 0.0
    %2020 = vmatprep.subr.mxu0 0.0
    %2021 = vmatpush1.msra.mxu0 0.0
    %2022 = vmatprep.subr.mxu0 0.0
    %2023 = vmatpush1.msra.mxu0 0.0
    %2024 = vmatprep.subr.mxu0 0.0
    %2025 = vmatpush1.msra.mxu0 0.0
    %2026 = vmatprep.subr.mxu0 0.0
    %2027 = vmatpush1.msra.mxu0 0.0
    %2028 = vmatprep.subr.mxu0 0.0
    %2029 = vmatpush1.msra.mxu0 0.0
    %2030 = vmatprep.subr.mxu0 0.0
    %2031 = vmatpush1.msra.mxu0 0.0
    %2032 = vmatprep.subr.mxu0 0.0
    %2033 = vmatpush1.msra.mxu0 0.0
    %2034 = vmatprep.subr.mxu0 0.0
    %2035 = vmatpush1.msra.mxu0 0.0
    %2036 = vmatprep.mubr.f32.mxu0 0.0
    %2037 = vmatmul.mubr.f32.gmra.mrb[0].mxu0 %v1967
    %v2038 = vpop.f32.mrb[0].mxu0
    %v2039 = vadd.f32 %v1965, %v2038
    %v2040 = vpop.f32.mrb[0].mxu0
    %2041 = vmatprep.mubr.f32.mxu0 0.0
    %2042 = vmatmul.mubr.f32.gmra.mrb[0].mxu0 %v1970
    %v2043 = vpop.f32.mrb[0].mxu0
    %v2044 = vadd.f32 %v1965, %v2043
    %v2045 = vpop.f32.mrb[0].mxu0
    %2046 = vdwg.mxu0
    %v2047 = vmul.f32 %v1661, %v1736
    %v2048 = vmul.f32 %v1666, %v1741
    %2051 = vrot.lane.b32.xlu0 %v2047, 96
    %v2052 = vpop.permute.xlu0 %2051
    %2053 = vrot.lane.b32.xlu0 %v2048, 96
    %v2054 = vpop.permute.xlu0 %2053
    %v2057 = vadd.f32 %v2047, %v2052
    %v2058 = vadd.f32 %v2048, %v2054
    %2059 = vrot.lane.b32.xlu0 %v2047, 64
    %v2060 = vpop.permute.xlu0 %2059
    %2061 = vrot.lane.b32.xlu0 %v2048, 64
    %v2062 = vpop.permute.xlu0 %2061
    %v2065 = vadd.f32 %v2057, %v2060
    %v2066 = vadd.f32 %v2058, %v2062
    %2069 = vrot.lane.b32.xlu0 %v2039, 96
    %v2070 = vpop.permute.xlu0 %2069
    %2071 = vrot.lane.b32.xlu0 %v2044, 96
    %v2072 = vpop.permute.xlu0 %2071
    %v2075 = vmul.f32 %v2065, %v2070
    %v2076 = vmul.f32 %v2066, %v2072
    %v2077 = vadd.f32 %v1580, %v2075
    %v2078 = vadd.f32 %v1581, %v2076
    %2079 = vrot.lane.b32.xlu0 %v2039, 64
    %v2080 = vpop.permute.xlu0 %2079
    %2081 = vrot.lane.b32.xlu0 %v2044, 64
    %v2082 = vpop.permute.xlu0 %2081
    %v2085 = vadd.f32 %v2077, %v2080
    %v2086 = vadd.f32 %v2078, %v2082
    %v2087 = vmul.f32 %v1661, %v2039
    %v2088 = vmul.f32 %v1666, %v2044
    %2089 = vrot.lane.b32.xlu0 %v2039, 32
    %v2090 = vpop.permute.xlu0 %2089
    %2091 = vrot.lane.b32.xlu0 %v2044, 32
    %v2092 = vpop.permute.xlu0 %2091
    %v2095 = vmul.f32 %v1661, %v2090
    %v2096 = vmul.f32 %v1666, %v2092
    %v2097 = vmul.f32 %v1661, %v2080
    %v2098 = vmul.f32 %v1666, %v2082
    %v2099 = vsel %vm143, %v2087, %v2095
    %v2100 = vsel %vm143, %v2088, %v2096
    %v2101 = vsel %vm1493, %v2099, %v2097
    %v2102 = vsel %vm1493, %v2100, %v2098
    %2105 = vrot.lane.b32.xlu0 %v2101, 32
    %v2106 = vpop.permute.xlu0 %2105
    %2107 = vrot.lane.b32.xlu0 %v2102, 32
    %v2108 = vpop.permute.xlu0 %2107
    %v2111 = vadd.f32 %v1582, %v2106
    %v2112 = vadd.f32 %v1583, %v2108
    %s2113 = scalar_lea.vmem %s4, 112
    %v2114 = vld [vmem:[%s2113] sm:$0xff]
    %v2115 = vld [vmem:[%s2113 + $0x8] sm:$0xff]
    %v2116 = vld [vmem:[%s2113 + $0x10] sm:$0xff]
    %v2117 = vld [vmem:[%s2113 + $0x18] sm:$0xff]
    %v2118 = vld [vmem:[%s2113 + $0x20] sm:$0x1]
    %v2119 = vld [vmem:[%s2113 + $0x28] sm:$0xff]
    %v2120 = vld [vmem:[%s2113 + $0x30] sm:$0xff]
    %v2121 = vld [vmem:[%s2113 + $0x38] sm:$0xff]
    %v2122 = vld [vmem:[%s2113 + $0x40] sm:$0xff]
    %v2123 = vld [vmem:[%s2113 + $0x48] sm:$0xff]
    %v2124 = vld [vmem:[%s2113 + $0x50] sm:$0xff]
    %v2125 = vld [vmem:[%s2113 + $0x58] sm:$0xff]
    %v2126 = vld [vmem:[%s2113 + $0x60] sm:$0xff]
    %v2127 = vld [vmem:[%s2113 + $0x68] sm:$0x1]
    %s2128 = scalar_lea.vmem [#allocation2], 288
    %v2129 = vld [vmem:[%s2128] sm:$0xff]
    %v2130 = vld [vmem:[%s2128 + $0x8] sm:$0xff]
    %v2131 = vld [vmem:[%s2128 + $0x10] sm:$0xff]
    %v2132 = vld [vmem:[%s2128 + $0x18] sm:$0xff]
    %v2133 = vld [vmem:[%s2128 + $0x20] sm:$0x1]
    %v2134 = vld [vmem:[%s2128 + $0x28] sm:$0xff]
    %v2135 = vld [vmem:[%s2128 + $0x30] sm:$0xff]
    %v2136 = vld [vmem:[%s2128 + $0x38] sm:$0xff]
    %v2137 = vld [vmem:[%s2128 + $0x40] sm:$0xff]
    %v2138 = vld [vmem:[%s2128 + $0x48] sm:$0xff]
    %v2139 = vld [vmem:[%s2128 + $0x50] sm:$0xff]
    %v2140 = vld [vmem:[%s2128 + $0x58] sm:$0xff]
    %v2141 = vld [vmem:[%s2128 + $0x60] sm:$0xff]
    %v2142 = vld [vmem:[%s2128 + $0x68] sm:$0xff]
    %v2143 = vld [vmem:[%s2128 + $0x70] sm:$0xff]
    %v2144 = vld [vmem:[%s2128 + $0x78] sm:$0xff]
    %v2145 = vld [vmem:[%s2128 + $0x80] sm:$0xff]
    %v2146 = vld [vmem:[%s2128 + $0x88] sm:$0xff]
    %v2147 = vld [vmem:[%s2128 + $0x90] sm:$0xff]
    %v2148 = vld [vmem:[%s2128 + $0x98] sm:$0xff]
    %v2149 = vld [vmem:[%s2128 + $0xa0] sm:$0xff]
    %v2150 = vld [vmem:[%s2128 + $0xa8] sm:$0xff]
    %v2151 = vld [vmem:[%s2128 + $0xb0] sm:$0xff]
    %v2152 = vld [vmem:[%s2128 + $0xb8] sm:$0xff]
    %v2153 = vld [vmem:[%s2128 + $0xc0] sm:$0xff]
    %v2154 = vld [vmem:[%s2128 + $0xc8] sm:$0xff]
    %v2155 = vld [vmem:[%s2128 + $0xd0] sm:$0xff]
    %v2156 = vld [vmem:[%s2128 + $0xd8] sm:$0xff]
    %v2157 = vld [vmem:[%s2128 + $0xe0] sm:$0xff]
    %v2158 = vld [vmem:[%s2128 + $0xe8] sm:$0xff]
    %v2159 = vld [vmem:[%s2128 + $0xf0] sm:$0xff]
    %v2160 = vld [vmem:[%s2128 + $0xf8] sm:$0xff]
    %v2161 = vld [vmem:[%s2128 + $0x100] sm:$0xff]
    %v2162 = vld [vmem:[%s2128 + $0x108] sm:$0xff]
    %v2163 = vld [vmem:[%s2128 + $0x110] sm:$0xff]
    %v2164 = vld [vmem:[%s2128 + $0x118] sm:$0x1]
    %v2165 = vlaneseq
    %v2166 = vshrl.u32 %v2165, 7
    %v2167 = vsub.s32 0, %v2166
    %v2168 = vrot.slane %v2118, %v2167
    %v2170 = vsel %vm143, %v2085, 0
    %v2173 = vsel %vm143, %v2086, 0
    %2175 = vmatprep.subr.mxu0 0.0
    %2176 = vmatpush1.msra.mxu0 %v2114
    %2177 = vmatprep.subr.mxu0 0.0
    %2178 = vmatpush1.msra.mxu0 %v2115
    %2179 = vmatprep.subr.mxu0 0.0
    %2180 = vmatpush1.msra.mxu0 %v2116
    %2181 = vmatprep.subr.mxu0 0.0
    %2182 = vmatpush1.msra.mxu0 %v2117
    %2183 = vmatprep.subr.mxu0 0.0
    %2184 = vmatpush1.msra.mxu0 0.0
    %2185 = vmatprep.subr.mxu0 0.0
    %2186 = vmatpush1.msra.mxu0 0.0
    %2187 = vmatprep.subr.mxu0 0.0
    %2188 = vmatpush1.msra.mxu0 0.0
    %2189 = vmatprep.subr.mxu0 0.0
    %2190 = vmatpush1.msra.mxu0 0.0
    %2191 = vmatprep.subr.mxu0 0.0
    %2192 = vmatpush1.msra.mxu0 0.0
    %2193 = vmatprep.subr.mxu0 0.0
    %2194 = vmatpush1.msra.mxu0 0.0
    %2195 = vmatprep.subr.mxu0 0.0
    %2196 = vmatpush1.msra.mxu0 0.0
    %2197 = vmatprep.subr.mxu0 0.0
    %2198 = vmatpush1.msra.mxu0 0.0
    %2199 = vmatprep.subr.mxu0 0.0
    %2200 = vmatpush1.msra.mxu0 0.0
    %2201 = vmatprep.subr.mxu0 0.0
    %2202 = vmatpush1.msra.mxu0 0.0
    %2203 = vmatprep.subr.mxu0 0.0
    %2204 = vmatpush1.msra.mxu0 0.0
    %2205 = vmatprep.subr.mxu0 0.0
    %2206 = vmatpush1.msra.mxu0 0.0
    %2207 = vmatprep.subr.mxu0 0.0
    %2208 = vmatpush1.msra.mxu0 0.0
    %2209 = vmatprep.subr.mxu0 0.0
    %2210 = vmatpush1.msra.mxu0 0.0
    %2211 = vmatprep.subr.mxu0 0.0
    %2212 = vmatpush1.msra.mxu0 0.0
    %2213 = vmatprep.subr.mxu0 0.0
    %2214 = vmatpush1.msra.mxu0 0.0
    %2215 = vmatprep.subr.mxu0 0.0
    %2216 = vmatpush1.msra.mxu0 0.0
    %2217 = vmatprep.subr.mxu0 0.0
    %2218 = vmatpush1.msra.mxu0 0.0
    %2219 = vmatprep.subr.mxu0 0.0
    %2220 = vmatpush1.msra.mxu0 0.0
    %2221 = vmatprep.subr.mxu0 0.0
    %2222 = vmatpush1.msra.mxu0 0.0
    %2223 = vmatprep.subr.mxu0 0.0
    %2224 = vmatpush1.msra.mxu0 0.0
    %2225 = vmatprep.subr.mxu0 0.0
    %2226 = vmatpush1.msra.mxu0 0.0
    %2227 = vmatprep.subr.mxu0 0.0
    %2228 = vmatpush1.msra.mxu0 0.0
    %2229 = vmatprep.subr.mxu0 0.0
    %2230 = vmatpush1.msra.mxu0 0.0
    %2231 = vmatprep.subr.mxu0 0.0
    %2232 = vmatpush1.msra.mxu0 0.0
    %2233 = vmatprep.subr.mxu0 0.0
    %2234 = vmatpush1.msra.mxu0 0.0
    %2235 = vmatprep.subr.mxu0 0.0
    %2236 = vmatpush1.msra.mxu0 0.0
    %2237 = vmatprep.subr.mxu0 0.0
    %2238 = vmatpush1.msra.mxu0 0.0
    %2239 = vmatprep.mubr.f32.mxu0 0.0
    %2240 = vmatmul.mubr.f32.gmra.mrb[0].mxu0 %v2170
    %v2241 = vpop.f32.mrb[0].mxu0
    %v2242 = vadd.f32 %v2168, %v2241
    %v2243 = vpop.f32.mrb[0].mxu0
    %2244 = vmatprep.mubr.f32.mxu0 0.0
    %2245 = vmatmul.mubr.f32.gmra.mrb[0].mxu0 %v2173
    %v2246 = vpop.f32.mrb[0].mxu0
    %v2247 = vadd.f32 %v2168, %v2246
    %v2248 = vpop.f32.mrb[0].mxu0
    %2249 = vdwg.mxu0
    %v2250 = vxor.u32 %v2242, 2147483648
    %v2251 = vxor.u32 %v2247, 2147483648
    %v2252 = vmul.f32 %v2250, 1.442695
    %v2253 = vpow.pop %v2252
    %v2254 = vmul.f32 %v2251, 1.442695
    %v2255 = vpow.pop %v2254
    %v2256 = vadd.f32 %v2253, 1.0
    %v2257 = vadd.f32 %v2255, 1.0
    %v2258 = vrcp.pop %v2256
    %v2259 = vmul.f32 1.0, %v2258
    %v2260 = vrcp.pop %v2257
    %v2261 = vmul.f32 1.0, %v2260
    %v2262 = vmul.f32 %v2242, %v2259
    %v2263 = vmul.f32 %v2247, %v2261
    %v2264 = vlaneseq
    %v2265 = vshrl.u32 %v2264, 7
    %v2266 = vsub.s32 0, %v2265
    %v2267 = vrot.slane %v2133, %v2266
    %v2269 = vsel %vm143, %v2262, 0
    %v2272 = vsel %vm143, %v2263, 0
    %2274 = vmatprep.subr.mxu0 0.0
    %2275 = vmatpush1.msra.mxu0 %v2129
    %2276 = vmatprep.subr.mxu0 0.0
    %2277 = vmatpush1.msra.mxu0 %v2130
    %2278 = vmatprep.subr.mxu0 0.0
    %2279 = vmatpush1.msra.mxu0 %v2131
    %2280 = vmatprep.subr.mxu0 0.0
    %2281 = vmatpush1.msra.mxu0 %v2132
    %2282 = vmatprep.subr.mxu0 0.0
    %2283 = vmatpush1.msra.mxu0 0.0
    %2284 = vmatprep.subr.mxu0 0.0
    %2285 = vmatpush1.msra.mxu0 0.0
    %2286 = vmatprep.subr.mxu0 0.0
    %2287 = vmatpush1.msra.mxu0 0.0
    %2288 = vmatprep.subr.mxu0 0.0
    %2289 = vmatpush1.msra.mxu0 0.0
    %2290 = vmatprep.subr.mxu0 0.0
    %2291 = vmatpush1.msra.mxu0 0.0
    %2292 = vmatprep.subr.mxu0 0.0
    %2293 = vmatpush1.msra.mxu0 0.0
    %2294 = vmatprep.subr.mxu0 0.0
    %2295 = vmatpush1.msra.mxu0 0.0
    %2296 = vmatprep.subr.mxu0 0.0
    %2297 = vmatpush1.msra.mxu0 0.0
    %2298 = vmatprep.subr.mxu0 0.0
    %2299 = vmatpush1.msra.mxu0 0.0
    %2300 = vmatprep.subr.mxu0 0.0
    %2301 = vmatpush1.msra.mxu0 0.0
    %2302 = vmatprep.subr.mxu0 0.0
    %2303 = vmatpush1.msra.mxu0 0.0
    %2304 = vmatprep.subr.mxu0 0.0
    %2305 = vmatpush1.msra.mxu0 0.0
    %2306 = vmatprep.subr.mxu0 0.0
    %2307 = vmatpush1.msra.mxu0 0.0
    %2308 = vmatprep.subr.mxu0 0.0
    %2309 = vmatpush1.msra.mxu0 0.0
    %2310 = vmatprep.subr.mxu0 0.0
    %2311 = vmatpush1.msra.mxu0 0.0
    %2312 = vmatprep.subr.mxu0 0.0
    %2313 = vmatpush1.msra.mxu0 0.0
    %2314 = vmatprep.subr.mxu0 0.0
    %2315 = vmatpush1.msra.mxu0 0.0
    %2316 = vmatprep.subr.mxu0 0.0
    %2317 = vmatpush1.msra.mxu0 0.0
    %2318 = vmatprep.subr.mxu0 0.0
    %2319 = vmatpush1.msra.mxu0 0.0
    %2320 = vmatprep.subr.mxu0 0.0
    %2321 = vmatpush1.msra.mxu0 0.0
    %2322 = vmatprep.subr.mxu0 0.0
    %2323 = vmatpush1.msra.mxu0 0.0
    %2324 = vmatprep.subr.mxu0 0.0
    %2325 = vmatpush1.msra.mxu0 0.0
    %2326 = vmatprep.subr.mxu0 0.0
    %2327 = vmatpush1.msra.mxu0 0.0
    %2328 = vmatprep.subr.mxu0 0.0
    %2329 = vmatpush1.msra.mxu0 0.0
    %2330 = vmatprep.subr.mxu0 0.0
    %2331 = vmatpush1.msra.mxu0 0.0
    %2332 = vmatprep.subr.mxu0 0.0
    %2333 = vmatpush1.msra.mxu0 0.0
    %2334 = vmatprep.subr.mxu0 0.0
    %2335 = vmatpush1.msra.mxu0 0.0
    %2336 = vmatprep.subr.mxu0 0.0
    %2337 = vmatpush1.msra.mxu0 0.0
    %2338 = vmatprep.mubr.f32.mxu0 0.0
    %2339 = vmatmul.mubr.f32.gmra.mrb[0].mxu0 %v2269
    %v2340 = vpop.f32.mrb[0].mxu0
    %v2341 = vadd.f32 %v2267, %v2340
    %v2342 = vpop.f32.mrb[0].mxu0
    %2343 = vmatprep.mubr.f32.mxu0 0.0
    %2344 = vmatmul.mubr.f32.gmra.mrb[0].mxu0 %v2272
    %v2345 = vpop.f32.mrb[0].mxu0
    %v2346 = vadd.f32 %v2267, %v2345
    %v2347 = vpop.f32.mrb[0].mxu0
    %2348 = vdwg.mxu0
    %v2349 = vpack.c.bf16 %v2346, %v2341
    %2350 = vmatprep.subr.bf16.mxu0 0
    %2351 = vmatpush1.bf16.msra.mxu0 %v2349
    %2352 = vmatprep.subr.bf16.mxu0 0
    %2353 = vmatpush1.bf16.msra.mxu0 0
    %2354 = vmatprep.subr.bf16.mxu0 0
    %2355 = vmatpush1.bf16.msra.mxu0 0
    %2356 = vmatprep.subr.bf16.mxu0 0
    %2357 = vmatpush1.bf16.msra.mxu0 0
    %2358 = vmatprep.subr.bf16.mxu0 0
    %2359 = vmatpush1.bf16.msra.mxu0 0
    %2360 = vmatprep.subr.bf16.mxu0 0
    %2361 = vmatpush1.bf16.msra.mxu0 0
    %2362 = vmatprep.subr.bf16.mxu0 0
    %2363 = vmatpush1.bf16.msra.mxu0 0
    %2364 = vmatprep.subr.bf16.mxu0 0
    %2365 = vmatpush1.bf16.msra.mxu0 0
    %2366 = vmatprep.subr.bf16.mxu0 0
    %2367 = vmatpush1.bf16.msra.mxu0 0
    %2368 = vmatprep.subr.bf16.mxu0 0
    %2369 = vmatpush1.bf16.msra.mxu0 0
    %2370 = vmatprep.subr.bf16.mxu0 0
    %2371 = vmatpush1.bf16.msra.mxu0 0
    %2372 = vmatprep.subr.bf16.mxu0 0
    %2373 = vmatpush1.bf16.msra.mxu0 0
    %2374 = vmatprep.subr.bf16.mxu0 0
    %2375 = vmatpush1.bf16.msra.mxu0 0
    %2376 = vmatprep.subr.bf16.mxu0 0
    %2377 = vmatpush1.bf16.msra.mxu0 0
    %2378 = vmatprep.subr.bf16.mxu0 0
    %2379 = vmatpush1.bf16.msra.mxu0 0
    %2380 = vmatprep.subr.bf16.mxu0 0
    %2381 = vmatpush1.bf16.msra.mxu0 0
    %2382 = vmatprep.mubr.bf16.mxu0 0
    %2383 = vmatmul.mubr.bf16.gmra.mrb[0].mxu0 %v362
    %v2384 = vpop.f32.mrb[0].mxu0
    %v2385 = vadd.f32 0.0, %v2384
    %v2386 = vpop.f32.mrb[0].mxu0
    %v2387 = vpop.f32.mrb[0].mxu0
    %v2388 = vadd.f32 0.0, %v2387
    %v2389 = vpop.f32.mrb[0].mxu0
    %2390 = vmatprep.mubr.bf16.mxu0 0
    %2391 = vmatmul.mubr.bf16.gmra.mrb[0].mxu0 %v365
    %v2392 = vpop.f32.mrb[0].mxu0
    %v2393 = vadd.f32 0.0, %v2392
    %v2394 = vpop.f32.mrb[0].mxu0
    %v2395 = vpop.f32.mrb[0].mxu0
    %v2396 = vadd.f32 0.0, %v2395
    %v2397 = vpop.f32.mrb[0].mxu0
    %2398 = vmatprep.mubr.bf16.mxu0 0
    %2399 = vmatmul.mubr.bf16.gmra.mrb[0].mxu0 %v368
    %v2400 = vpop.f32.mrb[0].mxu0
    %v2401 = vadd.f32 0.0, %v2400
    %v2402 = vpop.f32.mrb[0].mxu0
    %v2403 = vpop.f32.mrb[0].mxu0
    %v2404 = vadd.f32 0.0, %v2403
    %v2405 = vpop.f32.mrb[0].mxu0
    %2406 = vmatprep.mubr.bf16.mxu0 0
    %2407 = vmatmul.mubr.bf16.gmra.mrb[0].mxu0 %v371
    %v2408 = vpop.f32.mrb[0].mxu0
    %v2409 = vadd.f32 0.0, %v2408
    %v2410 = vpop.f32.mrb[0].mxu0
    %v2411 = vpop.f32.mrb[0].mxu0
    %v2412 = vadd.f32 0.0, %v2411
    %v2413 = vpop.f32.mrb[0].mxu0
    %2414 = vmatprep.mubr.bf16.mxu0 0
    %2415 = vmatmul.mubr.bf16.gmra.mrb[0].mxu0 %v374
    %v2416 = vpop.f32.mrb[0].mxu0
    %v2417 = vadd.f32 0.0, %v2416
    %v2418 = vpop.f32.mrb[0].mxu0
    %v2419 = vpop.f32.mrb[0].mxu0
    %v2420 = vadd.f32 0.0, %v2419
    %v2421 = vpop.f32.mrb[0].mxu0
    %2422 = vmatprep.mubr.bf16.mxu0 0
    %2423 = vmatmul.mubr.bf16.gmra.mrb[0].mxu0 %v377
    %v2424 = vpop.f32.mrb[0].mxu0
    %v2425 = vadd.f32 0.0, %v2424
    %v2426 = vpop.f32.mrb[0].mxu0
    %v2427 = vpop.f32.mrb[0].mxu0
    %v2428 = vadd.f32 0.0, %v2427
    %v2429 = vpop.f32.mrb[0].mxu0
    %2430 = vmatprep.mubr.bf16.mxu0 0
    %2431 = vmatmul.mubr.bf16.gmra.mrb[0].mxu0 %v380
    %v2432 = vpop.f32.mrb[0].mxu0
    %v2433 = vadd.f32 0.0, %v2432
    %v2434 = vpop.f32.mrb[0].mxu0
    %v2435 = vpop.f32.mrb[0].mxu0
    %v2436 = vadd.f32 0.0, %v2435
    %v2437 = vpop.f32.mrb[0].mxu0
    %2438 = vdwg.mxu0
    %v2439 = vpack.c.bf16 %v2112, %v2111
    %2441 = vrot.lane.b32.xlu0 %v2439, 96
    %v2442 = vpop.permute.xlu0 %2441
    %2444 = vmatprep.subr.bf16.mxu0 0
    %2445 = vmatpush1.bf16.msra.mxu0 %v2442
    %2446 = vmatprep.subr.bf16.mxu0 0
    %2447 = vmatpush1.bf16.msra.mxu0 0
    %2448 = vmatprep.subr.bf16.mxu0 0
    %2449 = vmatpush1.bf16.msra.mxu0 0
    %2450 = vmatprep.subr.bf16.mxu0 0
    %2451 = vmatpush1.bf16.msra.mxu0 0
    %2452 = vmatprep.subr.bf16.mxu0 0
    %2453 = vmatpush1.bf16.msra.mxu0 0
    %2454 = vmatprep.subr.bf16.mxu0 0
    %2455 = vmatpush1.bf16.msra.mxu0 0
    %2456 = vmatprep.subr.bf16.mxu0 0
    %2457 = vmatpush1.bf16.msra.mxu0 0
    %2458 = vmatprep.subr.bf16.mxu0 0
    %2459 = vmatpush1.bf16.msra.mxu0 0
    %2460 = vmatprep.subr.bf16.mxu0 0
    %2461 = vmatpush1.bf16.msra.mxu0 0
    %2462 = vmatprep.subr.bf16.mxu0 0
    %2463 = vmatpush1.bf16.msra.mxu0 0
    %2464 = vmatprep.subr.bf16.mxu0 0
    %2465 = vmatpush1.bf16.msra.mxu0 0
    %2466 = vmatprep.subr.bf16.mxu0 0
    %2467 = vmatpush1.bf16.msra.mxu0 0
    %2468 = vmatprep.subr.bf16.mxu0 0
    %2469 = vmatpush1.bf16.msra.mxu0 0
    %2470 = vmatprep.subr.bf16.mxu0 0
    %2471 = vmatpush1.bf16.msra.mxu0 0
    %2472 = vmatprep.subr.bf16.mxu0 0
    %2473 = vmatpush1.bf16.msra.mxu0 0
    %2474 = vmatprep.subr.bf16.mxu0 0
    %2475 = vmatpush1.bf16.msra.mxu0 0
    %2476 = vmatprep.mubr.bf16.mxu0 0
    %2477 = vmatmul.mubr.bf16.gmra.mrb[0].mxu0 %v362
    %v2478 = vpop.f32.mrb[0].mxu0
    %v2479 = vadd.f32 0.0, %v2478
    %v2480 = vpop.f32.mrb[0].mxu0
    %v2481 = vpop.f32.mrb[0].mxu0
    %v2482 = vadd.f32 0.0, %v2481
    %v2483 = vpop.f32.mrb[0].mxu0
    %2484 = vmatprep.mubr.bf16.mxu0 0
    %2485 = vmatmul.mubr.bf16.gmra.mrb[0].mxu0 %v365
    %v2486 = vpop.f32.mrb[0].mxu0
    %v2487 = vadd.f32 0.0, %v2486
    %v2488 = vpop.f32.mrb[0].mxu0
    %v2489 = vpop.f32.mrb[0].mxu0
    %v2490 = vadd.f32 0.0, %v2489
    %v2491 = vpop.f32.mrb[0].mxu0
    %2492 = vmatprep.mubr.bf16.mxu0 0
    %2493 = vmatmul.mubr.bf16.gmra.mrb[0].mxu0 %v368
    %v2494 = vpop.f32.mrb[0].mxu0
    %v2495 = vadd.f32 0.0, %v2494
    %v2496 = vpop.f32.mrb[0].mxu0
    %v2497 = vpop.f32.mrb[0].mxu0
    %v2498 = vadd.f32 0.0, %v2497
    %v2499 = vpop.f32.mrb[0].mxu0
    %2500 = vmatprep.mubr.bf16.mxu0 0
    %2501 = vmatmul.mubr.bf16.gmra.mrb[0].mxu0 %v371
    %v2502 = vpop.f32.mrb[0].mxu0
    %v2503 = vadd.f32 0.0, %v2502
    %v2504 = vpop.f32.mrb[0].mxu0
    %v2505 = vpop.f32.mrb[0].mxu0
    %v2506 = vadd.f32 0.0, %v2505
    %v2507 = vpop.f32.mrb[0].mxu0
    %2508 = vmatprep.mubr.bf16.mxu0 0
    %2509 = vmatmul.mubr.bf16.gmra.mrb[0].mxu0 %v374
    %v2510 = vpop.f32.mrb[0].mxu0
    %v2511 = vadd.f32 0.0, %v2510
    %v2512 = vpop.f32.mrb[0].mxu0
    %v2513 = vpop.f32.mrb[0].mxu0
    %v2514 = vadd.f32 0.0, %v2513
    %v2515 = vpop.f32.mrb[0].mxu0
    %2516 = vmatprep.mubr.bf16.mxu0 0
    %2517 = vmatmul.mubr.bf16.gmra.mrb[0].mxu0 %v377
    %v2518 = vpop.f32.mrb[0].mxu0
    %v2519 = vadd.f32 0.0, %v2518
    %v2520 = vpop.f32.mrb[0].mxu0
    %v2521 = vpop.f32.mrb[0].mxu0
    %v2522 = vadd.f32 0.0, %v2521
    %v2523 = vpop.f32.mrb[0].mxu0
    %2524 = vmatprep.mubr.bf16.mxu0 0
    %2525 = vmatmul.mubr.bf16.gmra.mrb[0].mxu0 %v380
    %v2526 = vpop.f32.mrb[0].mxu0
    %v2527 = vadd.f32 0.0, %v2526
    %v2528 = vpop.f32.mrb[0].mxu0
    %v2529 = vpop.f32.mrb[0].mxu0
    %v2530 = vadd.f32 0.0, %v2529
    %v2531 = vpop.f32.mrb[0].mxu0
    %2532 = vdwg.mxu0
    %2533 = vmatprep.subr.mxu0 0.0
    %2534 = vmatpush1.msra.mxu0 %v2134
    %2535 = vmatprep.subr.mxu0 0.0
    %2536 = vmatpush1.msra.mxu0 %v2135
    %2537 = vmatprep.subr.mxu0 0.0
    %2538 = vmatpush1.msra.mxu0 0.0
    %2539 = vmatprep.subr.mxu0 0.0
    %2540 = vmatpush1.msra.mxu0 0.0
    %2541 = vmatprep.subr.mxu0 0.0
    %2542 = vmatpush1.msra.mxu0 0.0
    %2543 = vmatprep.subr.mxu0 0.0
    %2544 = vmatpush1.msra.mxu0 0.0
    %2545 = vmatprep.subr.mxu0 0.0
    %2546 = vmatpush1.msra.mxu0 0.0
    %2547 = vmatprep.subr.mxu0 0.0
    %2548 = vmatpush1.msra.mxu0 0.0
    %2549 = vmatprep.subr.mxu0 0.0
    %2550 = vmatpush1.msra.mxu0 0.0
    %2551 = vmatprep.subr.mxu0 0.0
    %2552 = vmatpush1.msra.mxu0 0.0
    %2553 = vmatprep.subr.mxu0 0.0
    %2554 = vmatpush1.msra.mxu0 0.0
    %2555 = vmatprep.subr.mxu0 0.0
    %2556 = vmatpush1.msra.mxu0 0.0
    %2557 = vmatprep.subr.mxu0 0.0
    %2558 = vmatpush1.msra.mxu0 0.0
    %2559 = vmatprep.subr.mxu0 0.0
    %2560 = vmatpush1.msra.mxu0 0.0
    %2561 = vmatprep.subr.mxu0 0.0
    %2562 = vmatpush1.msra.mxu0 0.0
    %2563 = vmatprep.subr.mxu0 0.0
    %2564 = vmatpush1.msra.mxu0 0.0
    %2565 = vmatprep.subr.mxu0 0.0
    %2566 = vmatpush1.msra.mxu0 0.0
    %2567 = vmatprep.subr.mxu0 0.0
    %2568 = vmatpush1.msra.mxu0 0.0
    %2569 = vmatprep.subr.mxu0 0.0
    %2570 = vmatpush1.msra.mxu0 0.0
    %2571 = vmatprep.subr.mxu0 0.0
    %2572 = vmatpush1.msra.mxu0 0.0
    %2573 = vmatprep.subr.mxu0 0.0
    %2574 = vmatpush1.msra.mxu0 0.0
    %2575 = vmatprep.subr.mxu0 0.0
    %2576 = vmatpush1.msra.mxu0 0.0
    %2577 = vmatprep.subr.mxu0 0.0
    %2578 = vmatpush1.msra.mxu0 0.0
    %2579 = vmatprep.subr.mxu0 0.0
    %2580 = vmatpush1.msra.mxu0 0.0
    %2581 = vmatprep.subr.mxu0 0.0
    %2582 = vmatpush1.msra.mxu0 0.0
    %2583 = vmatprep.subr.mxu0 0.0
    %2584 = vmatpush1.msra.mxu0 0.0
    %2585 = vmatprep.subr.mxu0 0.0
    %2586 = vmatpush1.msra.mxu0 0.0
    %2587 = vmatprep.subr.mxu0 0.0
    %2588 = vmatpush1.msra.mxu0 0.0
    %2589 = vmatprep.subr.mxu0 0.0
    %2590 = vmatpush1.msra.mxu0 0.0
    %2591 = vmatprep.subr.mxu0 0.0
    %2592 = vmatpush1.msra.mxu0 0.0
    %2593 = vmatprep.subr.mxu0 0.0
    %2594 = vmatpush1.msra.mxu0 0.0
    %2595 = vmatprep.subr.mxu0 0.0
    %2596 = vmatpush1.msra.mxu0 0.0
    %2597 = vmatprep.mubr.f32.mxu0 0.0
    %2598 = vmatmul.mubr.f32.gmra.mrb[0].mxu0 %v561
    %v2599 = vpop.f32.mrb[0].mxu0
    %v2600 = vadd.f32 0.0, %v2599
    %v2601 = vpop.f32.mrb[0].mxu0
    %2602 = vmatprep.mubr.f32.mxu0 0.0
    %2603 = vmatmul.mubr.f32.gmra.mrb[0].mxu0 %v564
    %v2604 = vpop.f32.mrb[0].mxu0
    %v2605 = vadd.f32 0.0, %v2604
    %v2606 = vpop.f32.mrb[0].mxu0
    %2607 = vmatprep.mubr.f32.mxu0 0.0
    %2608 = vmatmul.mubr.f32.gmra.mrb[0].mxu0 %v567
    %v2609 = vpop.f32.mrb[0].mxu0
    %v2610 = vadd.f32 0.0, %v2609
    %v2611 = vpop.f32.mrb[0].mxu0
    %2612 = vmatprep.mubr.f32.mxu0 0.0
    %2613 = vmatmul.mubr.f32.gmra.mrb[0].mxu0 %v570
    %v2614 = vpop.f32.mrb[0].mxu0
    %v2615 = vadd.f32 0.0, %v2614
    %v2616 = vpop.f32.mrb[0].mxu0
    %2617 = vmatprep.mubr.f32.mxu0 0.0
    %2618 = vmatmul.mubr.f32.gmra.mrb[0].mxu0 %v573
    %v2619 = vpop.f32.mrb[0].mxu0
    %v2620 = vadd.f32 0.0, %v2619
    %v2621 = vpop.f32.mrb[0].mxu0
    %2622 = vmatprep.mubr.f32.mxu0 0.0
    %2623 = vmatmul.mubr.f32.gmra.mrb[0].mxu0 %v576
    %v2624 = vpop.f32.mrb[0].mxu0
    %v2625 = vadd.f32 0.0, %v2624
    %v2626 = vpop.f32.mrb[0].mxu0
    %2627 = vmatprep.mubr.f32.mxu0 0.0
    %2628 = vmatmul.mubr.f32.gmra.mrb[0].mxu0 %v579
    %v2629 = vpop.f32.mrb[0].mxu0
    %v2630 = vadd.f32 0.0, %v2629
    %v2631 = vpop.f32.mrb[0].mxu0
    %2632 = vmatprep.mubr.f32.mxu0 0.0
    %2633 = vmatmul.mubr.f32.gmra.mrb[0].mxu0 %v582
    %v2634 = vpop.f32.mrb[0].mxu0
    %v2635 = vadd.f32 0.0, %v2634
    %v2636 = vpop.f32.mrb[0].mxu0
    %2637 = vmatprep.mubr.f32.mxu0 0.0
    %2638 = vmatmul.mubr.f32.gmra.mrb[0].mxu0 %v585
    %v2639 = vpop.f32.mrb[0].mxu0
    %v2640 = vadd.f32 0.0, %v2639
    %v2641 = vpop.f32.mrb[0].mxu0
    %2642 = vmatprep.mubr.f32.mxu0 0.0
    %2643 = vmatmul.mubr.f32.gmra.mrb[0].mxu0 %v588
    %v2644 = vpop.f32.mrb[0].mxu0
    %v2645 = vadd.f32 0.0, %v2644
    %v2646 = vpop.f32.mrb[0].mxu0
    %2647 = vmatprep.mubr.f32.mxu0 0.0
    %2648 = vmatmul.mubr.f32.gmra.mrb[0].mxu0 %v591
    %v2649 = vpop.f32.mrb[0].mxu0
    %v2650 = vadd.f32 0.0, %v2649
    %v2651 = vpop.f32.mrb[0].mxu0
    %2652 = vmatprep.mubr.f32.mxu0 0.0
    %2653 = vmatmul.mubr.f32.gmra.mrb[0].mxu0 %v594
    %v2654 = vpop.f32.mrb[0].mxu0
    %v2655 = vadd.f32 0.0, %v2654
    %v2656 = vpop.f32.mrb[0].mxu0
    %2657 = vmatprep.mubr.f32.mxu0 0.0
    %2658 = vmatmul.mubr.f32.gmra.mrb[0].mxu0 %v597
    %v2659 = vpop.f32.mrb[0].mxu0
    %v2660 = vadd.f32 0.0, %v2659
    %v2661 = vpop.f32.mrb[0].mxu0
    %2662 = vmatprep.mubr.f32.mxu0 0.0
    %2663 = vmatmul.mubr.f32.gmra.mrb[0].mxu0 %v600
    %v2664 = vpop.f32.mrb[0].mxu0
    %v2665 = vadd.f32 0.0, %v2664
    %v2666 = vpop.f32.mrb[0].mxu0
    %2667 = vdwg.mxu0
    %v2668 = vmul.f32 %v2385, %v2600
    %v2669 = vmul.f32 %v2388, %v2605
    %v2670 = vmul.f32 %v2393, %v2610
    %v2671 = vmul.f32 %v2396, %v2615
    %v2672 = vmul.f32 %v2401, %v2620
    %v2673 = vmul.f32 %v2404, %v2625
    %v2674 = vmul.f32 %v2409, %v2630
    %v2675 = vmul.f32 %v2412, %v2635
    %v2676 = vmul.f32 %v2417, %v2640
    %v2677 = vmul.f32 %v2420, %v2645
    %v2678 = vmul.f32 %v2425, %v2650
    %v2679 = vmul.f32 %v2428, %v2655
    %v2680 = vmul.f32 %v2433, %v2660
    %v2681 = vmul.f32 %v2436, %v2665
    %v2682 = vmul.f32 %v2668, %v753
    %v2683 = vmul.f32 %v2669, %v757
    %v2684 = vmul.f32 %v2670, %v761
    %v2685 = vmul.f32 %v2671, %v765
    %v2686 = vmul.f32 %v2672, %v769
    %v2687 = vmul.f32 %v2673, %v773
    %v2688 = vmul.f32 %v2674, %v777
    %v2689 = vmul.f32 %v2675, %v781
    %v2690 = vmul.f32 %v2676, %v785
    %v2691 = vmul.f32 %v2677, %v789
    %v2692 = vmul.f32 %v2678, %v793
    %v2693 = vmul.f32 %v2679, %v797
    %v2694 = vmul.f32 %v2680, %v801
    %v2695 = vmul.f32 %v2681, %v805
    %v2696 = vmul.f32 %v2668, %v2479
    %v2697 = vmul.f32 %v2669, %v2482
    %v2698 = vmul.f32 %v2670, %v2487
    %v2699 = vmul.f32 %v2671, %v2490
    %v2700 = vmul.f32 %v2672, %v2495
    %v2701 = vmul.f32 %v2673, %v2498
    %v2702 = vmul.f32 %v2674, %v2503
    %v2703 = vmul.f32 %v2675, %v2506
    %v2704 = vmul.f32 %v2676, %v2511
    %v2705 = vmul.f32 %v2677, %v2514
    %v2706 = vmul.f32 %v2678, %v2519
    %v2707 = vmul.f32 %v2679, %v2522
    %v2708 = vmul.f32 %v2680, %v2527
    %v2709 = vmul.f32 %v2681, %v2530
    %2724 = vrot.lane.b32.xlu0 %v2696, 64
    %v2725 = vpop.permute.xlu0 %2724
    %2726 = vrot.lane.b32.xlu0 %v2697, 64
    %v2727 = vpop.permute.xlu0 %2726
    %2728 = vrot.lane.b32.xlu0 %v2698, 64
    %v2729 = vpop.permute.xlu0 %2728
    %2730 = vrot.lane.b32.xlu0 %v2699, 64
    %v2731 = vpop.permute.xlu0 %2730
    %2732 = vrot.lane.b32.xlu0 %v2700, 64
    %v2733 = vpop.permute.xlu0 %2732
    %2734 = vrot.lane.b32.xlu0 %v2701, 64
    %v2735 = vpop.permute.xlu0 %2734
    %2736 = vrot.lane.b32.xlu0 %v2702, 64
    %v2737 = vpop.permute.xlu0 %2736
    %2738 = vrot.lane.b32.xlu0 %v2703, 64
    %v2739 = vpop.permute.xlu0 %2738
    %2740 = vrot.lane.b32.xlu0 %v2704, 64
    %v2741 = vpop.permute.xlu0 %2740
    %2742 = vrot.lane.b32.xlu0 %v2705, 64
    %v2743 = vpop.permute.xlu0 %2742
    %2744 = vrot.lane.b32.xlu0 %v2706, 64
    %v2745 = vpop.permute.xlu0 %2744
    %2746 = vrot.lane.b32.xlu0 %v2707, 64
    %v2747 = vpop.permute.xlu0 %2746
    %2748 = vrot.lane.b32.xlu0 %v2708, 64
    %v2749 = vpop.permute.xlu0 %2748
    %2750 = vrot.lane.b32.xlu0 %v2709, 64
    %v2751 = vpop.permute.xlu0 %2750
    %v2766 = vadd.f32 %v2682, %v2725
    %v2767 = vadd.f32 %v2683, %v2727
    %v2768 = vadd.f32 %v2684, %v2729
    %v2769 = vadd.f32 %v2685, %v2731
    %v2770 = vadd.f32 %v2686, %v2733
    %v2771 = vadd.f32 %v2687, %v2735
    %v2772 = vadd.f32 %v2688, %v2737
    %v2773 = vadd.f32 %v2689, %v2739
    %v2774 = vadd.f32 %v2690, %v2741
    %v2775 = vadd.f32 %v2691, %v2743
    %v2776 = vadd.f32 %v2692, %v2745
    %v2777 = vadd.f32 %v2693, %v2747
    %v2778 = vadd.f32 %v2694, %v2749
    %v2779 = vadd.f32 %v2695, %v2751
    %v2780 = vmul.f32 %v2668, %v907
    %v2781 = vmul.f32 %v2669, %v911
    %v2782 = vmul.f32 %v2670, %v915
    %v2783 = vmul.f32 %v2671, %v919
    %v2784 = vmul.f32 %v2672, %v923
    %v2785 = vmul.f32 %v2673, %v927
    %v2786 = vmul.f32 %v2674, %v931
    %v2787 = vmul.f32 %v2675, %v935
    %v2788 = vmul.f32 %v2676, %v939
    %v2789 = vmul.f32 %v2677, %v943
    %v2790 = vmul.f32 %v2678, %v947
    %v2791 = vmul.f32 %v2679, %v951
    %v2792 = vmul.f32 %v2680, %v955
    %v2793 = vmul.f32 %v2681, %v959
    %2808 = vrot.lane.b32.xlu0 %v2479, 96
    %v2809 = vpop.permute.xlu0 %2808
    %2810 = vrot.lane.b32.xlu0 %v2482, 96
    %v2811 = vpop.permute.xlu0 %2810
    %2812 = vrot.lane.b32.xlu0 %v2487, 96
    %v2813 = vpop.permute.xlu0 %2812
    %2814 = vrot.lane.b32.xlu0 %v2490, 96
    %v2815 = vpop.permute.xlu0 %2814
    %2816 = vrot.lane.b32.xlu0 %v2495, 96
    %v2817 = vpop.permute.xlu0 %2816
    %2818 = vrot.lane.b32.xlu0 %v2498, 96
    %v2819 = vpop.permute.xlu0 %2818
    %2820 = vrot.lane.b32.xlu0 %v2503, 96
    %v2821 = vpop.permute.xlu0 %2820
    %2822 = vrot.lane.b32.xlu0 %v2506, 96
    %v2823 = vpop.permute.xlu0 %2822
    %2824 = vrot.lane.b32.xlu0 %v2511, 96
    %v2825 = vpop.permute.xlu0 %2824
    %2826 = vrot.lane.b32.xlu0 %v2514, 96
    %v2827 = vpop.permute.xlu0 %2826
    %2828 = vrot.lane.b32.xlu0 %v2519, 96
    %v2829 = vpop.permute.xlu0 %2828
    %2830 = vrot.lane.b32.xlu0 %v2522, 96
    %v2831 = vpop.permute.xlu0 %2830
    %2832 = vrot.lane.b32.xlu0 %v2527, 96
    %v2833 = vpop.permute.xlu0 %2832
    %2834 = vrot.lane.b32.xlu0 %v2530, 96
    %v2835 = vpop.permute.xlu0 %2834
    %v2850 = vmul.f32 %v2668, %v2809
    %v2851 = vmul.f32 %v2669, %v2811
    %v2852 = vmul.f32 %v2670, %v2813
    %v2853 = vmul.f32 %v2671, %v2815
    %v2854 = vmul.f32 %v2672, %v2817
    %v2855 = vmul.f32 %v2673, %v2819
    %v2856 = vmul.f32 %v2674, %v2821
    %v2857 = vmul.f32 %v2675, %v2823
    %v2858 = vmul.f32 %v2676, %v2825
    %v2859 = vmul.f32 %v2677, %v2827
    %v2860 = vmul.f32 %v2678, %v2829
    %v2861 = vmul.f32 %v2679, %v2831
    %v2862 = vmul.f32 %v2680, %v2833
    %v2863 = vmul.f32 %v2681, %v2835
    %2878 = vrot.lane.b32.xlu0 %v2850, 64
    %v2879 = vpop.permute.xlu0 %2878
    %2880 = vrot.lane.b32.xlu0 %v2851, 64
    %v2881 = vpop.permute.xlu0 %2880
    %2882 = vrot.lane.b32.xlu0 %v2852, 64
    %v2883 = vpop.permute.xlu0 %2882
    %2884 = vrot.lane.b32.xlu0 %v2853, 64
    %v2885 = vpop.permute.xlu0 %2884
    %2886 = vrot.lane.b32.xlu0 %v2854, 64
    %v2887 = vpop.permute.xlu0 %2886
    %2888 = vrot.lane.b32.xlu0 %v2855, 64
    %v2889 = vpop.permute.xlu0 %2888
    %2890 = vrot.lane.b32.xlu0 %v2856, 64
    %v2891 = vpop.permute.xlu0 %2890
    %2892 = vrot.lane.b32.xlu0 %v2857, 64
    %v2893 = vpop.permute.xlu0 %2892
    %2894 = vrot.lane.b32.xlu0 %v2858, 64
    %v2895 = vpop.permute.xlu0 %2894
    %2896 = vrot.lane.b32.xlu0 %v2859, 64
    %v2897 = vpop.permute.xlu0 %2896
    %2898 = vrot.lane.b32.xlu0 %v2860, 64
    %v2899 = vpop.permute.xlu0 %2898
    %2900 = vrot.lane.b32.xlu0 %v2861, 64
    %v2901 = vpop.permute.xlu0 %2900
    %2902 = vrot.lane.b32.xlu0 %v2862, 64
    %v2903 = vpop.permute.xlu0 %2902
    %2904 = vrot.lane.b32.xlu0 %v2863, 64
    %v2905 = vpop.permute.xlu0 %2904
    %v2920 = vadd.f32 %v2780, %v2879
    %v2921 = vadd.f32 %v2781, %v2881
    %v2922 = vadd.f32 %v2782, %v2883
    %v2923 = vadd.f32 %v2783, %v2885
    %v2924 = vadd.f32 %v2784, %v2887
    %v2925 = vadd.f32 %v2785, %v2889
    %v2926 = vadd.f32 %v2786, %v2891
    %v2927 = vadd.f32 %v2787, %v2893
    %v2928 = vadd.f32 %v2788, %v2895
    %v2929 = vadd.f32 %v2789, %v2897
    %v2930 = vadd.f32 %v2790, %v2899
    %v2931 = vadd.f32 %v2791, %v2901
    %v2932 = vadd.f32 %v2792, %v2903
    %v2933 = vadd.f32 %v2793, %v2905
    %v2934 = vmul.f32 %v2668, %v1117
    %v2935 = vmul.f32 %v2669, %v1121
    %v2936 = vmul.f32 %v2670, %v1125
    %v2937 = vmul.f32 %v2671, %v1129
    %v2938 = vmul.f32 %v2672, %v1133
    %v2939 = vmul.f32 %v2673, %v1137
    %v2940 = vmul.f32 %v2674, %v1141
    %v2941 = vmul.f32 %v2675, %v1145
    %v2942 = vmul.f32 %v2676, %v1149
    %v2943 = vmul.f32 %v2677, %v1153
    %v2944 = vmul.f32 %v2678, %v1157
    %v2945 = vmul.f32 %v2679, %v1161
    %v2946 = vmul.f32 %v2680, %v1165
    %v2947 = vmul.f32 %v2681, %v1169
    %2948 = vrot.lane.b32.xlu0 %v2479, 64
    %v2949 = vpop.permute.xlu0 %2948
    %2950 = vrot.lane.b32.xlu0 %v2482, 64
    %v2951 = vpop.permute.xlu0 %2950
    %2952 = vrot.lane.b32.xlu0 %v2487, 64
    %v2953 = vpop.permute.xlu0 %2952
    %2954 = vrot.lane.b32.xlu0 %v2490, 64
    %v2955 = vpop.permute.xlu0 %2954
    %2956 = vrot.lane.b32.xlu0 %v2495, 64
    %v2957 = vpop.permute.xlu0 %2956
    %2958 = vrot.lane.b32.xlu0 %v2498, 64
    %v2959 = vpop.permute.xlu0 %2958
    %2960 = vrot.lane.b32.xlu0 %v2503, 64
    %v2961 = vpop.permute.xlu0 %2960
    %2962 = vrot.lane.b32.xlu0 %v2506, 64
    %v2963 = vpop.permute.xlu0 %2962
    %2964 = vrot.lane.b32.xlu0 %v2511, 64
    %v2965 = vpop.permute.xlu0 %2964
    %2966 = vrot.lane.b32.xlu0 %v2514, 64
    %v2967 = vpop.permute.xlu0 %2966
    %2968 = vrot.lane.b32.xlu0 %v2519, 64
    %v2969 = vpop.permute.xlu0 %2968
    %2970 = vrot.lane.b32.xlu0 %v2522, 64
    %v2971 = vpop.permute.xlu0 %2970
    %2972 = vrot.lane.b32.xlu0 %v2527, 64
    %v2973 = vpop.permute.xlu0 %2972
    %2974 = vrot.lane.b32.xlu0 %v2530, 64
    %v2975 = vpop.permute.xlu0 %2974
    %v2990 = vmul.f32 %v2668, %v2949
    %v2991 = vmul.f32 %v2669, %v2951
    %v2992 = vmul.f32 %v2670, %v2953
    %v2993 = vmul.f32 %v2671, %v2955
    %v2994 = vmul.f32 %v2672, %v2957
    %v2995 = vmul.f32 %v2673, %v2959
    %v2996 = vmul.f32 %v2674, %v2961
    %v2997 = vmul.f32 %v2675, %v2963
    %v2998 = vmul.f32 %v2676, %v2965
    %v2999 = vmul.f32 %v2677, %v2967
    %v3000 = vmul.f32 %v2678, %v2969
    %v3001 = vmul.f32 %v2679, %v2971
    %v3002 = vmul.f32 %v2680, %v2973
    %v3003 = vmul.f32 %v2681, %v2975
    %3018 = vrot.lane.b32.xlu0 %v2990, 64
    %v3019 = vpop.permute.xlu0 %3018
    %3020 = vrot.lane.b32.xlu0 %v2991, 64
    %v3021 = vpop.permute.xlu0 %3020
    %3022 = vrot.lane.b32.xlu0 %v2992, 64
    %v3023 = vpop.permute.xlu0 %3022
    %3024 = vrot.lane.b32.xlu0 %v2993, 64
    %v3025 = vpop.permute.xlu0 %3024
    %3026 = vrot.lane.b32.xlu0 %v2994, 64
    %v3027 = vpop.permute.xlu0 %3026
    %3028 = vrot.lane.b32.xlu0 %v2995, 64
    %v3029 = vpop.permute.xlu0 %3028
    %3030 = vrot.lane.b32.xlu0 %v2996, 64
    %v3031 = vpop.permute.xlu0 %3030
    %3032 = vrot.lane.b32.xlu0 %v2997, 64
    %v3033 = vpop.permute.xlu0 %3032
    %3034 = vrot.lane.b32.xlu0 %v2998, 64
    %v3035 = vpop.permute.xlu0 %3034
    %3036 = vrot.lane.b32.xlu0 %v2999, 64
    %v3037 = vpop.permute.xlu0 %3036
    %3038 = vrot.lane.b32.xlu0 %v3000, 64
    %v3039 = vpop.permute.xlu0 %3038
    %3040 = vrot.lane.b32.xlu0 %v3001, 64
    %v3041 = vpop.permute.xlu0 %3040
    %3042 = vrot.lane.b32.xlu0 %v3002, 64
    %v3043 = vpop.permute.xlu0 %3042
    %3044 = vrot.lane.b32.xlu0 %v3003, 64
    %v3045 = vpop.permute.xlu0 %3044
    %v3060 = vadd.f32 %v2934, %v3019
    %v3061 = vadd.f32 %v2935, %v3021
    %v3062 = vadd.f32 %v2936, %v3023
    %v3063 = vadd.f32 %v2937, %v3025
    %v3064 = vadd.f32 %v2938, %v3027
    %v3065 = vadd.f32 %v2939, %v3029
    %v3066 = vadd.f32 %v2940, %v3031
    %v3067 = vadd.f32 %v2941, %v3033
    %v3068 = vadd.f32 %v2942, %v3035
    %v3069 = vadd.f32 %v2943, %v3037
    %v3070 = vadd.f32 %v2944, %v3039
    %v3071 = vadd.f32 %v2945, %v3041
    %v3072 = vadd.f32 %v2946, %v3043
    %v3073 = vadd.f32 %v2947, %v3045
    %3088 = vrot.lane.b32.xlu0 %v2668, 96
    %v3089 = vpop.permute.xlu0 %3088
    %3090 = vrot.lane.b32.xlu0 %v2669, 96
    %v3091 = vpop.permute.xlu0 %3090
    %3092 = vrot.lane.b32.xlu0 %v2670, 96
    %v3093 = vpop.permute.xlu0 %3092
    %3094 = vrot.lane.b32.xlu0 %v2671, 96
    %v3095 = vpop.permute.xlu0 %3094
    %3096 = vrot.lane.b32.xlu0 %v2672, 96
    %v3097 = vpop.permute.xlu0 %3096
    %3098 = vrot.lane.b32.xlu0 %v2673, 96
    %v3099 = vpop.permute.xlu0 %3098
    %3100 = vrot.lane.b32.xlu0 %v2674, 96
    %v3101 = vpop.permute.xlu0 %3100
    %3102 = vrot.lane.b32.xlu0 %v2675, 96
    %v3103 = vpop.permute.xlu0 %3102
    %3104 = vrot.lane.b32.xlu0 %v2676, 96
    %v3105 = vpop.permute.xlu0 %3104
    %3106 = vrot.lane.b32.xlu0 %v2677, 96
    %v3107 = vpop.permute.xlu0 %3106
    %3108 = vrot.lane.b32.xlu0 %v2678, 96
    %v3109 = vpop.permute.xlu0 %3108
    %3110 = vrot.lane.b32.xlu0 %v2679, 96
    %v3111 = vpop.permute.xlu0 %3110
    %3112 = vrot.lane.b32.xlu0 %v2680, 96
    %v3113 = vpop.permute.xlu0 %3112
    %3114 = vrot.lane.b32.xlu0 %v2681, 96
    %v3115 = vpop.permute.xlu0 %3114
    %3144 = vrot.lane.b32.xlu0 %v2766, 96
    %v3145 = vpop.permute.xlu0 %3144
    %3146 = vrot.lane.b32.xlu0 %v2767, 96
    %v3147 = vpop.permute.xlu0 %3146
    %3148 = vrot.lane.b32.xlu0 %v2768, 96
    %v3149 = vpop.permute.xlu0 %3148
    %3150 = vrot.lane.b32.xlu0 %v2769, 96
    %v3151 = vpop.permute.xlu0 %3150
    %3152 = vrot.lane.b32.xlu0 %v2770, 96
    %v3153 = vpop.permute.xlu0 %3152
    %3154 = vrot.lane.b32.xlu0 %v2771, 96
    %v3155 = vpop.permute.xlu0 %3154
    %3156 = vrot.lane.b32.xlu0 %v2772, 96
    %v3157 = vpop.permute.xlu0 %3156
    %3158 = vrot.lane.b32.xlu0 %v2773, 96
    %v3159 = vpop.permute.xlu0 %3158
    %3160 = vrot.lane.b32.xlu0 %v2774, 96
    %v3161 = vpop.permute.xlu0 %3160
    %3162 = vrot.lane.b32.xlu0 %v2775, 96
    %v3163 = vpop.permute.xlu0 %3162
    %3164 = vrot.lane.b32.xlu0 %v2776, 96
    %v3165 = vpop.permute.xlu0 %3164
    %3166 = vrot.lane.b32.xlu0 %v2777, 96
    %v3167 = vpop.permute.xlu0 %3166
    %3168 = vrot.lane.b32.xlu0 %v2778, 96
    %v3169 = vpop.permute.xlu0 %3168
    %3170 = vrot.lane.b32.xlu0 %v2779, 96
    %v3171 = vpop.permute.xlu0 %3170
    %3200 = vrot.lane.b32.xlu0 %v3060, 32
    %v3201 = vpop.permute.xlu0 %3200
    %3202 = vrot.lane.b32.xlu0 %v3061, 32
    %v3203 = vpop.permute.xlu0 %3202
    %3204 = vrot.lane.b32.xlu0 %v3062, 32
    %v3205 = vpop.permute.xlu0 %3204
    %3206 = vrot.lane.b32.xlu0 %v3063, 32
    %v3207 = vpop.permute.xlu0 %3206
    %3208 = vrot.lane.b32.xlu0 %v3064, 32
    %v3209 = vpop.permute.xlu0 %3208
    %3210 = vrot.lane.b32.xlu0 %v3065, 32
    %v3211 = vpop.permute.xlu0 %3210
    %3212 = vrot.lane.b32.xlu0 %v3066, 32
    %v3213 = vpop.permute.xlu0 %3212
    %3214 = vrot.lane.b32.xlu0 %v3067, 32
    %v3215 = vpop.permute.xlu0 %3214
    %3216 = vrot.lane.b32.xlu0 %v3068, 32
    %v3217 = vpop.permute.xlu0 %3216
    %3218 = vrot.lane.b32.xlu0 %v3069, 32
    %v3219 = vpop.permute.xlu0 %3218
    %3220 = vrot.lane.b32.xlu0 %v3070, 32
    %v3221 = vpop.permute.xlu0 %3220
    %3222 = vrot.lane.b32.xlu0 %v3071, 32
    %v3223 = vpop.permute.xlu0 %3222
    %3224 = vrot.lane.b32.xlu0 %v3072, 32
    %v3225 = vpop.permute.xlu0 %3224
    %3226 = vrot.lane.b32.xlu0 %v3073, 32
    %v3227 = vpop.permute.xlu0 %3226
    %v3242 = vsel %vm143, %v3089, %v3145
    %v3243 = vsel %vm143, %v3091, %v3147
    %v3244 = vsel %vm143, %v3093, %v3149
    %v3245 = vsel %vm143, %v3095, %v3151
    %v3246 = vsel %vm143, %v3097, %v3153
    %v3247 = vsel %vm143, %v3099, %v3155
    %v3248 = vsel %vm143, %v3101, %v3157
    %v3249 = vsel %vm143, %v3103, %v3159
    %v3250 = vsel %vm143, %v3105, %v3161
    %v3251 = vsel %vm143, %v3107, %v3163
    %v3252 = vsel %vm143, %v3109, %v3165
    %v3253 = vsel %vm143, %v3111, %v3167
    %v3254 = vsel %vm143, %v3113, %v3169
    %v3255 = vsel %vm143, %v3115, %v3171
    %v3256 = vsel %vm1493, %v3242, %v2920
    %v3257 = vsel %vm1493, %v3243, %v2921
    %v3258 = vsel %vm1493, %v3244, %v2922
    %v3259 = vsel %vm1493, %v3245, %v2923
    %v3260 = vsel %vm1493, %v3246, %v2924
    %v3261 = vsel %vm1493, %v3247, %v2925
    %v3262 = vsel %vm1493, %v3248, %v2926
    %v3263 = vsel %vm1493, %v3249, %v2927
    %v3264 = vsel %vm1493, %v3250, %v2928
    %v3265 = vsel %vm1493, %v3251, %v2929
    %v3266 = vsel %vm1493, %v3252, %v2930
    %v3267 = vsel %vm1493, %v3253, %v2931
    %v3268 = vsel %vm1493, %v3254, %v2932
    %v3269 = vsel %vm1493, %v3255, %v2933
    %v3270 = vsel %vm1508, %v3256, %v3201
    %v3271 = vsel %vm1508, %v3257, %v3203
    %v3272 = vsel %vm1508, %v3258, %v3205
    %v3273 = vsel %vm1508, %v3259, %v3207
    %v3274 = vsel %vm1508, %v3260, %v3209
    %v3275 = vsel %vm1508, %v3261, %v3211
    %v3276 = vsel %vm1508, %v3262, %v3213
    %v3277 = vsel %vm1508, %v3263, %v3215
    %v3278 = vsel %vm1508, %v3264, %v3217
    %v3279 = vsel %vm1508, %v3265, %v3219
    %v3280 = vsel %vm1508, %v3266, %v3221
    %v3281 = vsel %vm1508, %v3267, %v3223
    %v3282 = vsel %vm1508, %v3268, %v3225
    %v3283 = vsel %vm1508, %v3269, %v3227
    %v3284 = vpack.c.bf16 %v3271, %v3270
    %v3285 = vpack.c.bf16 %v3273, %v3272
    %v3286 = vpack.c.bf16 %v3275, %v3274
    %v3287 = vpack.c.bf16 %v3277, %v3276
    %v3288 = vpack.c.bf16 %v3279, %v3278
    %v3289 = vpack.c.bf16 %v3281, %v3280
    %v3290 = vpack.c.bf16 %v3283, %v3282
    %3291 = vmatprep.subr.bf16.mxu0 0
    %3292 = vmatpush1.bf16.msra.mxu0 %v3284
    %3293 = vmatprep.subr.bf16.mxu0 0
    %3294 = vmatpush1.bf16.msra.mxu0 %v3285
    %3295 = vmatprep.subr.bf16.mxu0 0
    %3296 = vmatpush1.bf16.msra.mxu0 %v3286
    %3297 = vmatprep.subr.bf16.mxu0 0
    %3298 = vmatpush1.bf16.msra.mxu0 %v3287
    %3299 = vmatprep.subr.bf16.mxu0 0
    %3300 = vmatpush1.bf16.msra.mxu0 %v3288
    %3301 = vmatprep.subr.bf16.mxu0 0
    %3302 = vmatpush1.bf16.msra.mxu0 %v3289
    %3303 = vmatprep.subr.bf16.mxu0 0
    %3304 = vmatpush1.bf16.msra.mxu0 %v3290
    %3305 = vmatprep.subr.bf16.mxu0 0
    %3306 = vmatpush1.bf16.msra.mxu0 0
    %3307 = vmatprep.subr.bf16.mxu0 0
    %3308 = vmatpush1.bf16.msra.mxu0 0
    %3309 = vmatprep.subr.bf16.mxu0 0
    %3310 = vmatpush1.bf16.msra.mxu0 0
    %3311 = vmatprep.subr.bf16.mxu0 0
    %3312 = vmatpush1.bf16.msra.mxu0 0
    %3313 = vmatprep.subr.bf16.mxu0 0
    %3314 = vmatpush1.bf16.msra.mxu0 0
    %3315 = vmatprep.subr.bf16.mxu0 0
    %3316 = vmatpush1.bf16.msra.mxu0 0
    %3317 = vmatprep.subr.bf16.mxu0 0
    %3318 = vmatpush1.bf16.msra.mxu0 0
    %3319 = vmatprep.subr.bf16.mxu0 0
    %3320 = vmatpush1.bf16.msra.mxu0 0
    %3321 = vmatprep.subr.bf16.mxu0 0
    %3322 = vmatpush1.bf16.msra.mxu0 0
    %3323 = vmatprep.mubr.bf16.mxu0 0
    %3324 = vmatmul.mubr.bf16.gmra.mrb[0].mxu0 %v1537
    %v3325 = vpop.f32.mrb[0].mxu0
    %v3326 = vadd.f32 0.0, %v3325
    %v3327 = vpop.f32.mrb[0].mxu0
    %v3328 = vpop.f32.mrb[0].mxu0
    %v3329 = vadd.f32 0.0, %v3328
    %v3330 = vpop.f32.mrb[0].mxu0
    %3331 = vdwg.mxu0
    %v3332 = vadd.f32 %v2085, %v3326
    %v3333 = vadd.f32 %v2086, %v3329
    %v3334 = vadd.f32 %v2111, %v3326
    %v3335 = vadd.f32 %v2112, %v3329
    %3338 = vrot.lane.b32.xlu0 %v3334, 96
    %v3339 = vpop.permute.xlu0 %3338
    %3340 = vrot.lane.b32.xlu0 %v3335, 96
    %v3341 = vpop.permute.xlu0 %3340
    %v3342 = vsel %vm1508, %v3339, 0
    %v3344 = vsel %vm1508, %v3341, 0
    %3346 = vmatprep.subr.mxu0 0.0
    %3347 = vmatpush1.msra.mxu0 %v2136
    %3348 = vmatprep.subr.mxu0 0.0
    %3349 = vmatpush1.msra.mxu0 %v2137
    %3350 = vmatprep.subr.mxu0 0.0
    %3351 = vmatpush1.msra.mxu0 %v2138
    %3352 = vmatprep.subr.mxu0 0.0
    %3353 = vmatpush1.msra.mxu0 %v2139
    %3354 = vmatprep.subr.mxu0 0.0
    %3355 = vmatpush1.msra.mxu0 %v2140
    %3356 = vmatprep.subr.mxu0 0.0
    %3357 = vmatpush1.msra.mxu0 %v2141
    %3358 = vmatprep.subr.mxu0 0.0
    %3359 = vmatpush1.msra.mxu0 %v2142
    %3360 = vmatprep.subr.mxu0 0.0
    %3361 = vmatpush1.msra.mxu0 %v2143
    %3362 = vmatprep.subr.mxu0 0.0
    %3363 = vmatpush1.msra.mxu0 %v2144
    %3364 = vmatprep.subr.mxu0 0.0
    %3365 = vmatpush1.msra.mxu0 %v2145
    %3366 = vmatprep.subr.mxu0 0.0
    %3367 = vmatpush1.msra.mxu0 %v2146
    %3368 = vmatprep.subr.mxu0 0.0
    %3369 = vmatpush1.msra.mxu0 %v2147
    %3370 = vmatprep.subr.mxu0 0.0
    %3371 = vmatpush1.msra.mxu0 0.0
    %3372 = vmatprep.subr.mxu0 0.0
    %3373 = vmatpush1.msra.mxu0 0.0
    %3374 = vmatprep.subr.mxu0 0.0
    %3375 = vmatpush1.msra.mxu0 0.0
    %3376 = vmatprep.subr.mxu0 0.0
    %3377 = vmatpush1.msra.mxu0 0.0
    %3378 = vmatprep.subr.mxu0 0.0
    %3379 = vmatpush1.msra.mxu0 0.0
    %3380 = vmatprep.subr.mxu0 0.0
    %3381 = vmatpush1.msra.mxu0 0.0
    %3382 = vmatprep.subr.mxu0 0.0
    %3383 = vmatpush1.msra.mxu0 0.0
    %3384 = vmatprep.subr.mxu0 0.0
    %3385 = vmatpush1.msra.mxu0 0.0
    %3386 = vmatprep.subr.mxu0 0.0
    %3387 = vmatpush1.msra.mxu0 0.0
    %3388 = vmatprep.subr.mxu0 0.0
    %3389 = vmatpush1.msra.mxu0 0.0
    %3390 = vmatprep.subr.mxu0 0.0
    %3391 = vmatpush1.msra.mxu0 0.0
    %3392 = vmatprep.subr.mxu0 0.0
    %3393 = vmatpush1.msra.mxu0 0.0
    %3394 = vmatprep.subr.mxu0 0.0
    %3395 = vmatpush1.msra.mxu0 0.0
    %3396 = vmatprep.subr.mxu0 0.0
    %3397 = vmatpush1.msra.mxu0 0.0
    %3398 = vmatprep.subr.mxu0 0.0
    %3399 = vmatpush1.msra.mxu0 0.0
    %3400 = vmatprep.subr.mxu0 0.0
    %3401 = vmatpush1.msra.mxu0 0.0
    %3402 = vmatprep.subr.mxu0 0.0
    %3403 = vmatpush1.msra.mxu0 0.0
    %3404 = vmatprep.subr.mxu0 0.0
    %3405 = vmatpush1.msra.mxu0 0.0
    %3406 = vmatprep.subr.mxu0 0.0
    %3407 = vmatpush1.msra.mxu0 0.0
    %3408 = vmatprep.subr.mxu0 0.0
    %3409 = vmatpush1.msra.mxu0 0.0
    %3410 = vmatprep.mubr.f32.mxu0 0.0
    %3411 = vmatmul.mubr.f32.gmra.mrb[0].mxu0 %v3342
    %v3412 = vpop.f32.mrb[0].mxu0
    %v3413 = vadd.f32 0.0, %v3412
    %v3414 = vpop.f32.mrb[0].mxu0
    %3415 = vmatprep.mubr.f32.mxu0 0.0
    %3416 = vmatmul.mubr.f32.gmra.mrb[0].mxu0 %v3344
    %v3417 = vpop.f32.mrb[0].mxu0
    %v3418 = vadd.f32 0.0, %v3417
    %v3419 = vpop.f32.mrb[0].mxu0
    %3420 = vdwg.mxu0
    %3421 = vmatprep.subr.mxu0 0.0
    %3422 = vmatpush1.msra.mxu0 %v2148
    %3423 = vmatprep.subr.mxu0 0.0
    %3424 = vmatpush1.msra.mxu0 %v2149
    %3425 = vmatprep.subr.mxu0 0.0
    %3426 = vmatpush1.msra.mxu0 %v2150
    %3427 = vmatprep.subr.mxu0 0.0
    %3428 = vmatpush1.msra.mxu0 %v2151
    %3429 = vmatprep.subr.mxu0 0.0
    %3430 = vmatpush1.msra.mxu0 %v2152
    %3431 = vmatprep.subr.mxu0 0.0
    %3432 = vmatpush1.msra.mxu0 %v2153
    %3433 = vmatprep.subr.mxu0 0.0
    %3434 = vmatpush1.msra.mxu0 %v2154
    %3435 = vmatprep.subr.mxu0 0.0
    %3436 = vmatpush1.msra.mxu0 %v2155
    %3437 = vmatprep.subr.mxu0 0.0
    %3438 = vmatpush1.msra.mxu0 %v2156
    %3439 = vmatprep.subr.mxu0 0.0
    %3440 = vmatpush1.msra.mxu0 %v2157
    %3441 = vmatprep.subr.mxu0 0.0
    %3442 = vmatpush1.msra.mxu0 %v2158
    %3443 = vmatprep.subr.mxu0 0.0
    %3444 = vmatpush1.msra.mxu0 %v2159
    %3445 = vmatprep.subr.mxu0 0.0
    %3446 = vmatpush1.msra.mxu0 0.0
    %3447 = vmatprep.subr.mxu0 0.0
    %3448 = vmatpush1.msra.mxu0 0.0
    %3449 = vmatprep.subr.mxu0 0.0
    %3450 = vmatpush1.msra.mxu0 0.0
    %3451 = vmatprep.subr.mxu0 0.0
    %3452 = vmatpush1.msra.mxu0 0.0
    %3453 = vmatprep.subr.mxu0 0.0
    %3454 = vmatpush1.msra.mxu0 0.0
    %3455 = vmatprep.subr.mxu0 0.0
    %3456 = vmatpush1.msra.mxu0 0.0
    %3457 = vmatprep.subr.mxu0 0.0
    %3458 = vmatpush1.msra.mxu0 0.0
    %3459 = vmatprep.subr.mxu0 0.0
    %3460 = vmatpush1.msra.mxu0 0.0
    %3461 = vmatprep.subr.mxu0 0.0
    %3462 = vmatpush1.msra.mxu0 0.0
    %3463 = vmatprep.subr.mxu0 0.0
    %3464 = vmatpush1.msra.mxu0 0.0
    %3465 = vmatprep.subr.mxu0 0.0
    %3466 = vmatpush1.msra.mxu0 0.0
    %3467 = vmatprep.subr.mxu0 0.0
    %3468 = vmatpush1.msra.mxu0 0.0
    %3469 = vmatprep.subr.mxu0 0.0
    %3470 = vmatpush1.msra.mxu0 0.0
    %3471 = vmatprep.subr.mxu0 0.0
    %3472 = vmatpush1.msra.mxu0 0.0
    %3473 = vmatprep.subr.mxu0 0.0
    %3474 = vmatpush1.msra.mxu0 0.0
    %3475 = vmatprep.subr.mxu0 0.0
    %3476 = vmatpush1.msra.mxu0 0.0
    %3477 = vmatprep.subr.mxu0 0.0
    %3478 = vmatpush1.msra.mxu0 0.0
    %3479 = vmatprep.subr.mxu0 0.0
    %3480 = vmatpush1.msra.mxu0 0.0
    %3481 = vmatprep.subr.mxu0 0.0
    %3482 = vmatpush1.msra.mxu0 0.0
    %3483 = vmatprep.subr.mxu0 0.0
    %3484 = vmatpush1.msra.mxu0 0.0
    %3485 = vmatprep.mubr.f32.mxu0 0.0
    %3486 = vmatmul.mubr.f32.gmra.mrb[0].mxu0 %v3342
    %v3487 = vpop.f32.mrb[0].mxu0
    %v3488 = vadd.f32 0.0, %v3487
    %v3489 = vpop.f32.mrb[0].mxu0
    %3490 = vmatprep.mubr.f32.mxu0 0.0
    %3491 = vmatmul.mubr.f32.gmra.mrb[0].mxu0 %v3344
    %v3492 = vpop.f32.mrb[0].mxu0
    %v3493 = vadd.f32 0.0, %v3492
    %v3494 = vpop.f32.mrb[0].mxu0
    %3495 = vdwg.mxu0
    %v3496 = vmul.f32 %v3488, %v3488
    %v3497 = vmul.f32 %v3493, %v3493
    %3500 = vrot.lane.b32.xlu0 %v3496, 96
    %v3501 = vpop.permute.xlu0 %3500
    %3502 = vrot.lane.b32.xlu0 %v3497, 96
    %v3503 = vpop.permute.xlu0 %3502
    %v3506 = vadd.f32 %v3496, %v3501
    %v3507 = vadd.f32 %v3497, %v3503
    %3508 = vrot.lane.b32.xlu0 %v3496, 64
    %v3509 = vpop.permute.xlu0 %3508
    %3510 = vrot.lane.b32.xlu0 %v3497, 64
    %v3511 = vpop.permute.xlu0 %3510
    %v3514 = vadd.f32 %v3506, %v3509
    %v3515 = vadd.f32 %v3507, %v3511
    %v3516 = vadd.f32 %v3514, 3e-15
    %v3517 = vadd.f32 %v3515, 3e-15
    %v3518 = vrsqrt.pop %v3516
    %v3519 = vmul.f32 %v3516, %v3518
    %vm3520 = vcmp.eq.f32.partialorder %v3516, inf
    %v3521 = vsel %vm3520, %v3516, %v3519
    %vm3522 = vcmp.eq.f32.partialorder %v3516, 0.0
    %v3523 = vand.u32 %v3516, 2147483648
    %v3524 = vsel %vm3522, %v3523, %v3521
    %v3525 = vrsqrt.pop %v3517
    %v3526 = vmul.f32 %v3517, %v3525
    %vm3527 = vcmp.eq.f32.partialorder %v3517, inf
    %v3528 = vsel %vm3527, %v3517, %v3526
    %vm3529 = vcmp.eq.f32.partialorder %v3517, 0.0
    %v3530 = vand.u32 %v3517, 2147483648
    %v3531 = vsel %vm3529, %v3530, %v3528
    %v3533 = vsel %vm143, %v3524, 0
    %v3536 = vsel %vm143, %v3531, 0
    %3538 = vmatprep.subr.mxu0 0.0
    %3539 = vmatpush1.msra.mxu0 %v2123
    %3540 = vmatprep.subr.mxu0 0.0
    %3541 = vmatpush1.msra.mxu0 %v2124
    %3542 = vmatprep.subr.mxu0 0.0
    %3543 = vmatpush1.msra.mxu0 %v2125
    %3544 = vmatprep.subr.mxu0 0.0
    %3545 = vmatpush1.msra.mxu0 %v2126
    %3546 = vmatprep.subr.mxu0 0.0
    %3547 = vmatpush1.msra.mxu0 0.0
    %3548 = vmatprep.subr.mxu0 0.0
    %3549 = vmatpush1.msra.mxu0 0.0
    %3550 = vmatprep.subr.mxu0 0.0
    %3551 = vmatpush1.msra.mxu0 0.0
    %3552 = vmatprep.subr.mxu0 0.0
    %3553 = vmatpush1.msra.mxu0 0.0
    %3554 = vmatprep.subr.mxu0 0.0
    %3555 = vmatpush1.msra.mxu0 0.0
    %3556 = vmatprep.subr.mxu0 0.0
    %3557 = vmatpush1.msra.mxu0 0.0
    %3558 = vmatprep.subr.mxu0 0.0
    %3559 = vmatpush1.msra.mxu0 0.0
    %3560 = vmatprep.subr.mxu0 0.0
    %3561 = vmatpush1.msra.mxu0 0.0
    %3562 = vmatprep.subr.mxu0 0.0
    %3563 = vmatpush1.msra.mxu0 0.0
    %3564 = vmatprep.subr.mxu0 0.0
    %3565 = vmatpush1.msra.mxu0 0.0
    %3566 = vmatprep.subr.mxu0 0.0
    %3567 = vmatpush1.msra.mxu0 0.0
    %3568 = vmatprep.subr.mxu0 0.0
    %3569 = vmatpush1.msra.mxu0 0.0
    %3570 = vmatprep.subr.mxu0 0.0
    %3571 = vmatpush1.msra.mxu0 0.0
    %3572 = vmatprep.subr.mxu0 0.0
    %3573 = vmatpush1.msra.mxu0 0.0
    %3574 = vmatprep.subr.mxu0 0.0
    %3575 = vmatpush1.msra.mxu0 0.0
    %3576 = vmatprep.subr.mxu0 0.0
    %3577 = vmatpush1.msra.mxu0 0.0
    %3578 = vmatprep.subr.mxu0 0.0
    %3579 = vmatpush1.msra.mxu0 0.0
    %3580 = vmatprep.subr.mxu0 0.0
    %3581 = vmatpush1.msra.mxu0 0.0
    %3582 = vmatprep.subr.mxu0 0.0
    %3583 = vmatpush1.msra.mxu0 0.0
    %3584 = vmatprep.subr.mxu0 0.0
    %3585 = vmatpush1.msra.mxu0 0.0
    %3586 = vmatprep.subr.mxu0 0.0
    %3587 = vmatpush1.msra.mxu0 0.0
    %3588 = vmatprep.subr.mxu0 0.0
    %3589 = vmatpush1.msra.mxu0 0.0
    %3590 = vmatprep.subr.mxu0 0.0
    %3591 = vmatpush1.msra.mxu0 0.0
    %3592 = vmatprep.subr.mxu0 0.0
    %3593 = vmatpush1.msra.mxu0 0.0
    %3594 = vmatprep.subr.mxu0 0.0
    %3595 = vmatpush1.msra.mxu0 0.0
    %3596 = vmatprep.subr.mxu0 0.0
    %3597 = vmatpush1.msra.mxu0 0.0
    %3598 = vmatprep.subr.mxu0 0.0
    %3599 = vmatpush1.msra.mxu0 0.0
    %3600 = vmatprep.subr.mxu0 0.0
    %3601 = vmatpush1.msra.mxu0 0.0
    %3602 = vmatprep.mubr.f32.mxu0 0.0
    %3603 = vmatmul.mubr.f32.gmra.mrb[0].mxu0 %v3533
    %v3604 = vpop.f32.mrb[0].mxu0
    %v3605 = vadd.f32 0.0, %v3604
    %v3606 = vpop.f32.mrb[0].mxu0
    %3607 = vmatprep.mubr.f32.mxu0 0.0
    %3608 = vmatmul.mubr.f32.gmra.mrb[0].mxu0 %v3536
    %v3609 = vpop.f32.mrb[0].mxu0
    %v3610 = vadd.f32 0.0, %v3609
    %v3611 = vpop.f32.mrb[0].mxu0
    %3612 = vdwg.mxu0
    %v3614 = vsel %vm143, %v3332, 0
    %v3617 = vsel %vm143, %v3333, 0
    %3619 = vmatprep.subr.mxu0 0.0
    %3620 = vmatpush1.msra.mxu0 %v2119
    %3621 = vmatprep.subr.mxu0 0.0
    %3622 = vmatpush1.msra.mxu0 %v2120
    %3623 = vmatprep.subr.mxu0 0.0
    %3624 = vmatpush1.msra.mxu0 %v2121
    %3625 = vmatprep.subr.mxu0 0.0
    %3626 = vmatpush1.msra.mxu0 %v2122
    %3627 = vmatprep.subr.mxu0 0.0
    %3628 = vmatpush1.msra.mxu0 0.0
    %3629 = vmatprep.subr.mxu0 0.0
    %3630 = vmatpush1.msra.mxu0 0.0
    %3631 = vmatprep.subr.mxu0 0.0
    %3632 = vmatpush1.msra.mxu0 0.0
    %3633 = vmatprep.subr.mxu0 0.0
    %3634 = vmatpush1.msra.mxu0 0.0
    %3635 = vmatprep.subr.mxu0 0.0
    %3636 = vmatpush1.msra.mxu0 0.0
    %3637 = vmatprep.subr.mxu0 0.0
    %3638 = vmatpush1.msra.mxu0 0.0
    %3639 = vmatprep.subr.mxu0 0.0
    %3640 = vmatpush1.msra.mxu0 0.0
    %3641 = vmatprep.subr.mxu0 0.0
    %3642 = vmatpush1.msra.mxu0 0.0
    %3643 = vmatprep.subr.mxu0 0.0
    %3644 = vmatpush1.msra.mxu0 0.0
    %3645 = vmatprep.subr.mxu0 0.0
    %3646 = vmatpush1.msra.mxu0 0.0
    %3647 = vmatprep.subr.mxu0 0.0
    %3648 = vmatpush1.msra.mxu0 0.0
    %3649 = vmatprep.subr.mxu0 0.0
    %3650 = vmatpush1.msra.mxu0 0.0
    %3651 = vmatprep.subr.mxu0 0.0
    %3652 = vmatpush1.msra.mxu0 0.0
    %3653 = vmatprep.subr.mxu0 0.0
    %3654 = vmatpush1.msra.mxu0 0.0
    %3655 = vmatprep.subr.mxu0 0.0
    %3656 = vmatpush1.msra.mxu0 0.0
    %3657 = vmatprep.subr.mxu0 0.0
    %3658 = vmatpush1.msra.mxu0 0.0
    %3659 = vmatprep.subr.mxu0 0.0
    %3660 = vmatpush1.msra.mxu0 0.0
    %3661 = vmatprep.subr.mxu0 0.0
    %3662 = vmatpush1.msra.mxu0 0.0
    %3663 = vmatprep.subr.mxu0 0.0
    %3664 = vmatpush1.msra.mxu0 0.0
    %3665 = vmatprep.subr.mxu0 0.0
    %3666 = vmatpush1.msra.mxu0 0.0
    %3667 = vmatprep.subr.mxu0 0.0
    %3668 = vmatpush1.msra.mxu0 0.0
    %3669 = vmatprep.subr.mxu0 0.0
    %3670 = vmatpush1.msra.mxu0 0.0
    %3671 = vmatprep.subr.mxu0 0.0
    %3672 = vmatpush1.msra.mxu0 0.0
    %3673 = vmatprep.subr.mxu0 0.0
    %3674 = vmatpush1.msra.mxu0 0.0
    %3675 = vmatprep.subr.mxu0 0.0
    %3676 = vmatpush1.msra.mxu0 0.0
    %3677 = vmatprep.subr.mxu0 0.0
    %3678 = vmatpush1.msra.mxu0 0.0
    %3679 = vmatprep.subr.mxu0 0.0
    %3680 = vmatpush1.msra.mxu0 0.0
    %3681 = vmatprep.subr.mxu0 0.0
    %3682 = vmatpush1.msra.mxu0 0.0
    %3683 = vmatprep.mubr.f32.mxu0 0.0
    %3684 = vmatmul.mubr.f32.gmra.mrb[0].mxu0 %v3614
    %v3685 = vpop.f32.mrb[0].mxu0
    %v3686 = vadd.f32 %v3605, %v3685
    %v3687 = vpop.f32.mrb[0].mxu0
    %3688 = vmatprep.mubr.f32.mxu0 0.0
    %3689 = vmatmul.mubr.f32.gmra.mrb[0].mxu0 %v3617
    %v3690 = vpop.f32.mrb[0].mxu0
    %v3691 = vadd.f32 %v3610, %v3690
    %v3692 = vpop.f32.mrb[0].mxu0
    %3693 = vdwg.mxu0
    %v3694 = vlaneseq
    %v3695 = vshrl.u32 %v3694, 7
    %v3696 = vsub.s32 0, %v3695
    %v3697 = vrot.slane %v2127, %v3696
    %v3698 = vadd.f32 %v3686, %v3697
    %v3699 = vadd.f32 %v3691, %v3697
    %v3700 = vxor.u32 %v3698, 2147483648
    %v3701 = vxor.u32 %v3699, 2147483648
    %v3702 = vmul.f32 %v3700, 1.442695
    %v3703 = vpow.pop %v3702
    %v3704 = vmul.f32 %v3701, 1.442695
    %v3705 = vpow.pop %v3704
    %v3706 = vadd.f32 %v3703, 1.0
    %v3707 = vadd.f32 %v3705, 1.0
    %v3708 = vrcp.pop %v3706
    %v3709 = vmul.f32 1.0, %v3708
    %v3710 = vrcp.pop %v3707
    %v3711 = vmul.f32 1.0, %v3710
    %v3712 = vmul.f32 %v3698, %v3709
    %v3713 = vmul.f32 %v3699, %v3711
    %v3714 = vlaneseq
    %v3715 = vshrl.u32 %v3714, 7
    %v3716 = vsub.s32 0, %v3715
    %v3717 = vrot.slane %v2164, %v3716
    %v3719 = vsel %vm143, %v3712, 0
    %v3722 = vsel %vm143, %v3713, 0
    %3724 = vmatprep.subr.mxu0 0.0
    %3725 = vmatpush1.msra.mxu0 %v2160
    %3726 = vmatprep.subr.mxu0 0.0
    %3727 = vmatpush1.msra.mxu0 %v2161
    %3728 = vmatprep.subr.mxu0 0.0
    %3729 = vmatpush1.msra.mxu0 %v2162
    %3730 = vmatprep.subr.mxu0 0.0
    %3731 = vmatpush1.msra.mxu0 %v2163
    %3732 = vmatprep.subr.mxu0 0.0
    %3733 = vmatpush1.msra.mxu0 0.0
    %3734 = vmatprep.subr.mxu0 0.0
    %3735 = vmatpush1.msra.mxu0 0.0
    %3736 = vmatprep.subr.mxu0 0.0
    %3737 = vmatpush1.msra.mxu0 0.0
    %3738 = vmatprep.subr.mxu0 0.0
    %3739 = vmatpush1.msra.mxu0 0.0
    %3740 = vmatprep.subr.mxu0 0.0
    %3741 = vmatpush1.msra.mxu0 0.0
    %3742 = vmatprep.subr.mxu0 0.0
    %3743 = vmatpush1.msra.mxu0 0.0
    %3744 = vmatprep.subr.mxu0 0.0
    %3745 = vmatpush1.msra.mxu0 0.0
    %3746 = vmatprep.subr.mxu0 0.0
    %3747 = vmatpush1.msra.mxu0 0.0
    %3748 = vmatprep.subr.mxu0 0.0
    %3749 = vmatpush1.msra.mxu0 0.0
    %3750 = vmatprep.subr.mxu0 0.0
    %3751 = vmatpush1.msra.mxu0 0.0
    %3752 = vmatprep.subr.mxu0 0.0
    %3753 = vmatpush1.msra.mxu0 0.0
    %3754 = vmatprep.subr.mxu0 0.0
    %3755 = vmatpush1.msra.mxu0 0.0
    %3756 = vmatprep.subr.mxu0 0.0
    %3757 = vmatpush1.msra.mxu0 0.0
    %3758 = vmatprep.subr.mxu0 0.0
    %3759 = vmatpush1.msra.mxu0 0.0
    %3760 = vmatprep.subr.mxu0 0.0
    %3761 = vmatpush1.msra.mxu0 0.0
    %3762 = vmatprep.subr.mxu0 0.0
    %3763 = vmatpush1.msra.mxu0 0.0
    %3764 = vmatprep.subr.mxu0 0.0
    %3765 = vmatpush1.msra.mxu0 0.0
    %3766 = vmatprep.subr.mxu0 0.0
    %3767 = vmatpush1.msra.mxu0 0.0
    %3768 = vmatprep.subr.mxu0 0.0
    %3769 = vmatpush1.msra.mxu0 0.0
    %3770 = vmatprep.subr.mxu0 0.0
    %3771 = vmatpush1.msra.mxu0 0.0
    %3772 = vmatprep.subr.mxu0 0.0
    %3773 = vmatpush1.msra.mxu0 0.0
    %3774 = vmatprep.subr.mxu0 0.0
    %3775 = vmatpush1.msra.mxu0 0.0
    %3776 = vmatprep.subr.mxu0 0.0
    %3777 = vmatpush1.msra.mxu0 0.0
    %3778 = vmatprep.subr.mxu0 0.0
    %3779 = vmatpush1.msra.mxu0 0.0
    %3780 = vmatprep.subr.mxu0 0.0
    %3781 = vmatpush1.msra.mxu0 0.0
    %3782 = vmatprep.subr.mxu0 0.0
    %3783 = vmatpush1.msra.mxu0 0.0
    %3784 = vmatprep.subr.mxu0 0.0
    %3785 = vmatpush1.msra.mxu0 0.0
    %3786 = vmatprep.subr.mxu0 0.0
    %3787 = vmatpush1.msra.mxu0 0.0
    %3788 = vmatprep.mubr.f32.mxu0 0.0
    %3789 = vmatmul.mubr.f32.gmra.mrb[0].mxu0 %v3719
    %v3790 = vpop.f32.mrb[0].mxu0
    %v3791 = vadd.f32 %v3717, %v3790
    %v3792 = vpop.f32.mrb[0].mxu0
    %3793 = vmatprep.mubr.f32.mxu0 0.0
    %3794 = vmatmul.mubr.f32.gmra.mrb[0].mxu0 %v3722
    %v3795 = vpop.f32.mrb[0].mxu0
    %v3796 = vadd.f32 %v3717, %v3795
    %v3797 = vpop.f32.mrb[0].mxu0
    %3798 = vdwg.mxu0
    %v3799 = vmul.f32 %v3413, %v3488
    %v3800 = vmul.f32 %v3418, %v3493
    %3803 = vrot.lane.b32.xlu0 %v3799, 96
    %v3804 = vpop.permute.xlu0 %3803
    %3805 = vrot.lane.b32.xlu0 %v3800, 96
    %v3806 = vpop.permute.xlu0 %3805
    %v3809 = vadd.f32 %v3799, %v3804
    %v3810 = vadd.f32 %v3800, %v3806
    %3811 = vrot.lane.b32.xlu0 %v3799, 64
    %v3812 = vpop.permute.xlu0 %3811
    %3813 = vrot.lane.b32.xlu0 %v3800, 64
    %v3814 = vpop.permute.xlu0 %3813
    %v3817 = vadd.f32 %v3809, %v3812
    %v3818 = vadd.f32 %v3810, %v3814
    %3821 = vrot.lane.b32.xlu0 %v3791, 96
    %v3822 = vpop.permute.xlu0 %3821
    %3823 = vrot.lane.b32.xlu0 %v3796, 96
    %v3824 = vpop.permute.xlu0 %3823
    %v3827 = vmul.f32 %v3817, %v3822
    %v3828 = vmul.f32 %v3818, %v3824
    %v3829 = vadd.f32 %v3332, %v3827
    %v3830 = vadd.f32 %v3333, %v3828
    %3831 = vrot.lane.b32.xlu0 %v3791, 64
    %v3832 = vpop.permute.xlu0 %3831
    %3833 = vrot.lane.b32.xlu0 %v3796, 64
    %v3834 = vpop.permute.xlu0 %3833
    %v3837 = vadd.f32 %v3829, %v3832
    %v3838 = vadd.f32 %v3830, %v3834
    %3839 = vst.msk [vmem:[#allocation5] sm:$0xff] %vm143, %v3837
    %3840 = vst.msk [vmem:[#allocation5 + $0x8] sm:$0xff] %vm143, %v3838
    %v3841 = vld [vmem:[%s6] sm:$0xff]
    %v3842 = vld [vmem:[%s6 + $0x8] sm:$0xff]
    %v3843 = vld [vmem:[%s6 + $0x10] sm:$0xff]
    %v3844 = vld [vmem:[%s6 + $0x18] sm:$0xff]
    %v3845 = vld [vmem:[%s7] sm:$0x1]
    %v3847 = vlaneseq
    %v3848 = vshrl.u32 %v3847, 7
    %v3849 = vsub.s32 0, %v3848
    %v3850 = vrot.slane %v3845, %v3849
    %v3853 = vsel %vm143, %v3837, 0
    %v3856 = vsel %vm143, %v3838, 0
    %3858 = vmatprep.subr.mxu0 0.0
    %3859 = vmatpush1.msra.mxu0 %v3841
    %3860 = vmatprep.subr.mxu0 0.0
    %3861 = vmatpush1.msra.mxu0 %v3842
    %3862 = vmatprep.subr.mxu0 0.0
    %3863 = vmatpush1.msra.mxu0 %v3843
    %3864 = vmatprep.subr.mxu0 0.0
    %3865 = vmatpush1.msra.mxu0 %v3844
    %3866 = vmatprep.subr.mxu0 0.0
    %3867 = vmatpush1.msra.mxu0 0.0
    %3868 = vmatprep.subr.mxu0 0.0
    %3869 = vmatpush1.msra.mxu0 0.0
    %3870 = vmatprep.subr.mxu0 0.0
    %3871 = vmatpush1.msra.mxu0 0.0
    %3872 = vmatprep.subr.mxu0 0.0
    %3873 = vmatpush1.msra.mxu0 0.0
    %3874 = vmatprep.subr.mxu0 0.0
    %3875 = vmatpush1.msra.mxu0 0.0
    %3876 = vmatprep.subr.mxu0 0.0
    %3877 = vmatpush1.msra.mxu0 0.0
    %3878 = vmatprep.subr.mxu0 0.0
    %3879 = vmatpush1.msra.mxu0 0.0
    %3880 = vmatprep.subr.mxu0 0.0
    %3881 = vmatpush1.msra.mxu0 0.0
    %3882 = vmatprep.subr.mxu0 0.0
    %3883 = vmatpush1.msra.mxu0 0.0
    %3884 = vmatprep.subr.mxu0 0.0
    %3885 = vmatpush1.msra.mxu0 0.0
    %3886 = vmatprep.subr.mxu0 0.0
    %3887 = vmatpush1.msra.mxu0 0.0
    %3888 = vmatprep.subr.mxu0 0.0
    %3889 = vmatpush1.msra.mxu0 0.0
    %3890 = vmatprep.subr.mxu0 0.0
    %3891 = vmatpush1.msra.mxu0 0.0
    %3892 = vmatprep.subr.mxu0 0.0
    %3893 = vmatpush1.msra.mxu0 0.0
    %3894 = vmatprep.subr.mxu0 0.0
    %3895 = vmatpush1.msra.mxu0 0.0
    %3896 = vmatprep.subr.mxu0 0.0
    %3897 = vmatpush1.msra.mxu0 0.0
    %3898 = vmatprep.subr.mxu0 0.0
    %3899 = vmatpush1.msra.mxu0 0.0
    %3900 = vmatprep.subr.mxu0 0.0
    %3901 = vmatpush1.msra.mxu0 0.0
    %3902 = vmatprep.subr.mxu0 0.0
    %3903 = vmatpush1.msra.mxu0 0.0
    %3904 = vmatprep.subr.mxu0 0.0
    %3905 = vmatpush1.msra.mxu0 0.0
    %3906 = vmatprep.subr.mxu0 0.0
    %3907 = vmatpush1.msra.mxu0 0.0
    %3908 = vmatprep.subr.mxu0 0.0
    %3909 = vmatpush1.msra.mxu0 0.0
    %3910 = vmatprep.subr.mxu0 0.0
    %3911 = vmatpush1.msra.mxu0 0.0
    %3912 = vmatprep.subr.mxu0 0.0
    %3913 = vmatpush1.msra.mxu0 0.0
    %3914 = vmatprep.subr.mxu0 0.0
    %3915 = vmatpush1.msra.mxu0 0.0
    %3916 = vmatprep.subr.mxu0 0.0
    %3917 = vmatpush1.msra.mxu0 0.0
    %3918 = vmatprep.subr.mxu0 0.0
    %3919 = vmatpush1.msra.mxu0 0.0
    %3920 = vmatprep.subr.mxu0 0.0
    %3921 = vmatpush1.msra.mxu0 0.0
    %3922 = vmatprep.mubr.f32.mxu0 0.0
    %3923 = vmatmul.mubr.f32.gmra.mrb[0].mxu0 %v3853
    %v3924 = vpop.f32.mrb[0].mxu0
    %v3925 = vadd.f32 %v3850, %v3924
    %v3926 = vpop.f32.mrb[0].mxu0
    %3927 = vmatprep.mubr.f32.mxu0 0.0
    %3928 = vmatmul.mubr.f32.gmra.mrb[0].mxu0 %v3856
    %v3929 = vpop.f32.mrb[0].mxu0
    %v3930 = vadd.f32 %v3850, %v3929
    %v3931 = vpop.f32.mrb[0].mxu0
    %3932 = vdwg.mxu0
    %v3933 = vxor.u32 %v3925, 2147483648
    %v3934 = vxor.u32 %v3930, 2147483648
    %v3935 = vmul.f32 %v3933, 1.442695
    %v3936 = vpow.pop %v3935
    %v3937 = vmul.f32 %v3934, 1.442695
    %v3938 = vpow.pop %v3937
    %v3939 = vadd.f32 %v3936, 1.0
    %v3940 = vadd.f32 %v3938, 1.0
    %v3941 = vrcp.pop %v3939
    %v3942 = vmul.f32 1.0, %v3941
    %v3943 = vrcp.pop %v3940
    %v3944 = vmul.f32 1.0, %v3943
    %v3945 = vmul.f32 %v3925, %v3942
    %v3946 = vmul.f32 %v3930, %v3944
    %v3947 = vld [vmem:[%s8] sm:$0xff]
    %v3948 = vld [vmem:[%s8 + $0x8] sm:$0xff]
    %v3949 = vld [vmem:[%s8 + $0x10] sm:$0xff]
    %v3950 = vld [vmem:[%s8 + $0x18] sm:$0xff]
    %v3951 = vld [vmem:[%s9] sm:$0x1]
    %v3953 = vlaneseq
    %v3954 = vshrl.u32 %v3953, 7
    %v3955 = vsub.s32 0, %v3954
    %v3956 = vrot.slane %v3951, %v3955
    %v3959 = vsel %vm143, %v3945, 0
    %v3962 = vsel %vm143, %v3946, 0
    %3964 = vmatprep.subr.mxu0 0.0
    %3965 = vmatpush1.msra.mxu0 %v3947
    %3966 = vmatprep.subr.mxu0 0.0
    %3967 = vmatpush1.msra.mxu0 %v3948
    %3968 = vmatprep.subr.mxu0 0.0
    %3969 = vmatpush1.msra.mxu0 %v3949
    %3970 = vmatprep.subr.mxu0 0.0
    %3971 = vmatpush1.msra.mxu0 %v3950
    %3972 = vmatprep.subr.mxu0 0.0
    %3973 = vmatpush1.msra.mxu0 0.0
    %3974 = vmatprep.subr.mxu0 0.0
    %3975 = vmatpush1.msra.mxu0 0.0
    %3976 = vmatprep.subr.mxu0 0.0
    %3977 = vmatpush1.msra.mxu0 0.0
    %3978 = vmatprep.subr.mxu0 0.0
    %3979 = vmatpush1.msra.mxu0 0.0
    %3980 = vmatprep.subr.mxu0 0.0
    %3981 = vmatpush1.msra.mxu0 0.0
    %3982 = vmatprep.subr.mxu0 0.0
    %3983 = vmatpush1.msra.mxu0 0.0
    %3984 = vmatprep.subr.mxu0 0.0
    %3985 = vmatpush1.msra.mxu0 0.0
    %3986 = vmatprep.subr.mxu0 0.0
    %3987 = vmatpush1.msra.mxu0 0.0
    %3988 = vmatprep.subr.mxu0 0.0
    %3989 = vmatpush1.msra.mxu0 0.0
    %3990 = vmatprep.subr.mxu0 0.0
    %3991 = vmatpush1.msra.mxu0 0.0
    %3992 = vmatprep.subr.mxu0 0.0
    %3993 = vmatpush1.msra.mxu0 0.0
    %3994 = vmatprep.subr.mxu0 0.0
    %3995 = vmatpush1.msra.mxu0 0.0
    %3996 = vmatprep.subr.mxu0 0.0
    %3997 = vmatpush1.msra.mxu0 0.0
    %3998 = vmatprep.subr.mxu0 0.0
    %3999 = vmatpush1.msra.mxu0 0.0
    %4000 = vmatprep.subr.mxu0 0.0
    %4001 = vmatpush1.msra.mxu0 0.0
    %4002 = vmatprep.subr.mxu0 0.0
    %4003 = vmatpush1.msra.mxu0 0.0
    %4004 = vmatprep.subr.mxu0 0.0
    %4005 = vmatpush1.msra.mxu0 0.0
    %4006 = vmatprep.subr.mxu0 0.0
    %4007 = vmatpush1.msra.mxu0 0.0
    %4008 = vmatprep.subr.mxu0 0.0
    %4009 = vmatpush1.msra.mxu0 0.0
    %4010 = vmatprep.subr.mxu0 0.0
    %4011 = vmatpush1.msra.mxu0 0.0
    %4012 = vmatprep.subr.mxu0 0.0
    %4013 = vmatpush1.msra.mxu0 0.0
    %4014 = vmatprep.subr.mxu0 0.0
    %4015 = vmatpush1.msra.mxu0 0.0
    %4016 = vmatprep.subr.mxu0 0.0
    %4017 = vmatpush1.msra.mxu0 0.0
    %4018 = vmatprep.subr.mxu0 0.0
    %4019 = vmatpush1.msra.mxu0 0.0
    %4020 = vmatprep.subr.mxu0 0.0
    %4021 = vmatpush1.msra.mxu0 0.0
    %4022 = vmatprep.subr.mxu0 0.0
    %4023 = vmatpush1.msra.mxu0 0.0
    %4024 = vmatprep.subr.mxu0 0.0
    %4025 = vmatpush1.msra.mxu0 0.0
    %4026 = vmatprep.subr.mxu0 0.0
    %4027 = vmatpush1.msra.mxu0 0.0
    %4028 = vmatprep.mubr.f32.mxu0 0.0
    %4029 = vmatmul.mubr.f32.gmra.mrb[0].mxu0 %v3959
    %v4030 = vpop.f32.mrb[0].mxu0
    %v4031 = vadd.f32 %v3956, %v4030
    %v4032 = vpop.f32.mrb[0].mxu0
    %4033 = vmatprep.mubr.f32.mxu0 0.0
    %4034 = vmatmul.mubr.f32.gmra.mrb[0].mxu0 %v3962
    %v4035 = vpop.f32.mrb[0].mxu0
    %v4036 = vadd.f32 %v3956, %v4035
    %v4037 = vpop.f32.mrb[0].mxu0
    %4038 = vdwg.mxu0
    %v4039 = vld [vmem:[%s10] sm:$0x3]
    %v4041 = vsel %vm360, %v4039, 0
    %4043 = vmatprep.subr.mxu0 0.0
    %4044 = vmatpush1.msra.mxu0 %v4031
    %4045 = vmatprep.subr.mxu0 0.0
    %4046 = vmatpush1.msra.mxu0 %v4036
    %4047 = vmatprep.subr.mxu0 0.0
    %4048 = vmatpush1.msra.mxu0 0.0
    %4049 = vmatprep.subr.mxu0 0.0
    %4050 = vmatpush1.msra.mxu0 0.0
    %4051 = vmatprep.subr.mxu0 0.0
    %4052 = vmatpush1.msra.mxu0 0.0
    %4053 = vmatprep.subr.mxu0 0.0
    %4054 = vmatpush1.msra.mxu0 0.0
    %4055 = vmatprep.subr.mxu0 0.0
    %4056 = vmatpush1.msra.mxu0 0.0
    %4057 = vmatprep.subr.mxu0 0.0
    %4058 = vmatpush1.msra.mxu0 0.0
    %4059 = vmatprep.subr.mxu0 0.0
    %4060 = vmatpush1.msra.mxu0 0.0
    %4061 = vmatprep.subr.mxu0 0.0
    %4062 = vmatpush1.msra.mxu0 0.0
    %4063 = vmatprep.subr.mxu0 0.0
    %4064 = vmatpush1.msra.mxu0 0.0
    %4065 = vmatprep.subr.mxu0 0.0
    %4066 = vmatpush1.msra.mxu0 0.0
    %4067 = vmatprep.subr.mxu0 0.0
    %4068 = vmatpush1.msra.mxu0 0.0
    %4069 = vmatprep.subr.mxu0 0.0
    %4070 = vmatpush1.msra.mxu0 0.0
    %4071 = vmatprep.subr.mxu0 0.0
    %4072 = vmatpush1.msra.mxu0 0.0
    %4073 = vmatprep.subr.mxu0 0.0
    %4074 = vmatpush1.msra.mxu0 0.0
    %4075 = vmatprep.subr.mxu0 0.0
    %4076 = vmatpush1.msra.mxu0 0.0
    %4077 = vmatprep.subr.mxu0 0.0
    %4078 = vmatpush1.msra.mxu0 0.0
    %4079 = vmatprep.subr.mxu0 0.0
    %4080 = vmatpush1.msra.mxu0 0.0
    %4081 = vmatprep.subr.mxu0 0.0
    %4082 = vmatpush1.msra.mxu0 0.0
    %4083 = vmatprep.subr.mxu0 0.0
    %4084 = vmatpush1.msra.mxu0 0.0
    %4085 = vmatprep.subr.mxu0 0.0
    %4086 = vmatpush1.msra.mxu0 0.0
    %4087 = vmatprep.subr.mxu0 0.0
    %4088 = vmatpush1.msra.mxu0 0.0
    %4089 = vmatprep.subr.mxu0 0.0
    %4090 = vmatpush1.msra.mxu0 0.0
    %4091 = vmatprep.subr.mxu0 0.0
    %4092 = vmatpush1.msra.mxu0 0.0
    %4093 = vmatprep.subr.mxu0 0.0
    %4094 = vmatpush1.msra.mxu0 0.0
    %4095 = vmatprep.subr.mxu0 0.0
    %4096 = vmatpush1.msra.mxu0 0.0
    %4097 = vmatprep.subr.mxu0 0.0
    %4098 = vmatpush1.msra.mxu0 0.0
    %4099 = vmatprep.subr.mxu0 0.0
    %4100 = vmatpush1.msra.mxu0 0.0
    %4101 = vmatprep.subr.mxu0 0.0
    %4102 = vmatpush1.msra.mxu0 0.0
    %4103 = vmatprep.subr.mxu0 0.0
    %4104 = vmatpush1.msra.mxu0 0.0
    %4105 = vmatprep.subr.mxu0 0.0
    %4106 = vmatpush1.msra.mxu0 0.0
    %4107 = vmatprep.mubr.f32.mxu0 0.0
    %4108 = vmatmul.mubr.f32.gmra.mrb[0].mxu0 %v4041
    %v4109 = vpop.f32.mrb[0].mxu0
    %v4110 = vadd.f32 0.0, %v4109
    %v4111 = vpop.f32.mrb[0].mxu0
    %4112 = vdwg.mxu0
    %4113 = vst [vmem:[#allocation6] sm:$0x3] %v4110
    // Predicated region
    $region50: #{tpu_custom_call.1} parent=1 // pred_check
      _
    $region51: #{tpu_custom_call.1} parent=1 // pred_check_branch
      %4115 = sbr.rel (0) target = $region53
    $region52: #{tpu_custom_call.1} parent=1 // pred_region
      %s4117 = ssub.s32 256, 256
      %4118 = vsyncadd [#allocation4], %s4117
      %s4119 = sshll.u32 [#allocation5], 4
      %s4120 = int_to_ptr.vmem [resolvable:$true] %s4119
      %4125 = dma.vmem_to_hbm [thread:$0]  %s4120, 256, %s11, [#allocation4], 128, 128, 8
    $region53: #{tpu_custom_call.1} parent=1 // pred_fallthru
      _
    // Predicated region
    $region54: #{tpu_custom_call.1} parent=1 // pred_check
      _
    $region55: #{tpu_custom_call.1} parent=1 // pred_check_branch
      %4127 = sbr.rel (0) target = $region57
    $region56: #{tpu_custom_call.1} parent=1 // pred_region
      %s4129 = ssub.s32 32, 32
      %4130 = vsyncadd [#allocation7], %s4129
      %s4132 = sshll.u32 [#allocation6], 4
      %s4133 = int_to_ptr.vmem [resolvable:$true] %s4132
      %4135 = dma.vmem_to_hbm [thread:$0]  %s4133, 32, %s12, [#allocation7]
    $region57: #{tpu_custom_call.1} parent=1 // pred_fallthru
      _
    // Predicated region
    $region58: #{tpu_custom_call.1} parent=1 // pred_check
      _
    $region59: #{tpu_custom_call.1} parent=1 // pred_check_branch
      %4137 = sbr.rel (0) target = $region61
    $region60: #{tpu_custom_call.1} parent=1 // pred_region
      %4138 = dma.done [#allocation4], 256
    $region61: #{tpu_custom_call.1} parent=1 // pred_fallthru
      _
    // Predicated region
    $region62: #{tpu_custom_call.1} parent=1 // pred_check
      _
    $region63: #{tpu_custom_call.1} parent=1 // pred_check_branch
      %4140 = sbr.rel (0) target = $region65
    $region64: #{tpu_custom_call.1} parent=1 // pred_region
      %4141 = dma.done [#allocation7], 32
    $region65: #{tpu_custom_call.1} parent=1 // pred_fallthru
      _
    %4142 = vsyncpa [#allocation3], 1
    %4143 = vsyncpa [#allocation4], 1
    %4144 = vsyncpa [#allocation7], 1

</llo_original>
